<compile_context>
chip_gen: v5e
topology: v5e:2x2
jax: 0.10.0
libtpu: 0.0.40
codegen_flags: <defaults>
</compile_context>

<pallas_src>
import math
import functools

import jax
import jax.numpy as jnp
import numpy as np
from jax.experimental import pallas as pl
from jax.experimental.pallas import tpu as pltpu


def _layer_norm(x, w, b, eps=1e-5):
    mu = jnp.mean(x, axis=-1, keepdims=True)
    var = jnp.mean((x - mu) ** 2, axis=-1, keepdims=True)  # biased var, like nn.LayerNorm
    return (x - mu) * jax.lax.rsqrt(var + eps) * w + b


def _gelu_exact(x):
    # PyTorch activation='gelu' -> exact erf-based GELU
    return 0.5 * x * (1.0 + jax.lax.erf(x * (1.0 / math.sqrt(2.0))))


def transformer_block_kernel(n_head, block_b, seq_len,
                             x_ref, mask_ref,
                             wq_ref, wk_ref, wv_ref,
                             bq_ref, bk_ref, bv_ref,
                             wo_ref, bo_ref,
                             ln1w_ref, ln1b_ref,
                             w1_ref, b1_ref,
                             w2_ref, b2_ref,
                             ln2w_ref, ln2b_ref,
                             o_ref):
    S = seq_len
    D = x_ref.shape[-1]
    hd = D // n_head
    bM = block_b * S
    scale = 1.0 / math.sqrt(hd)

    x = x_ref[...]                          # (bM, D) f32
    xb = x.astype(jnp.bfloat16)

    # ---- Q / K / V projections: full-width lane-dense GEMMs, bf16 in / f32 acc ----
    q = jnp.dot(xb, wq_ref[...], preferred_element_type=jnp.float32) + bq_ref[...]
    k = jnp.dot(xb, wk_ref[...], preferred_element_type=jnp.float32) + bk_ref[...]
    v = jnp.dot(xb, wv_ref[...], preferred_element_type=jnp.float32) + bv_ref[...]

    qb = (q * scale).astype(jnp.bfloat16)   # fold 1/sqrt(hd) into q once
    kb = k.astype(jnp.bfloat16)
    vb = v.astype(jnp.bfloat16)

    mask = mask_ref[...]                    # (S, S) additive f32 mask

    # ---- attention: loop over heads only; the whole (block_b) row slab is batched
    #      through one leading-batch dot_general + one softmax pass per head. Each
    #      head's output is folded into a lane-dense (bM, D) accumulator via that
    #      head's Wo slice, so there is no attention scratch and no masked stores. ----
    acc = jnp.zeros((bM, D), jnp.float32)
    for h in range(n_head):
        c0 = h * hd
        q_h = qb[:, c0:c0 + hd].reshape(block_b, S, hd)
        k_h = kb[:, c0:c0 + hd].reshape(block_b, S, hd)
        v_h = vb[:, c0:c0 + hd].reshape(block_b, S, hd)
        # scores = q @ k^T, batched over block_b, f32 accumulation
        s = jax.lax.dot_general(q_h, k_h, (((2,), (2,)), ((0,), (0,))),
                                preferred_element_type=jnp.float32)   # (block_b, S, S)
        s = s + mask
        s = s - jnp.max(s, axis=-1, keepdims=True)
        p = jnp.exp(s)
        p = p * pl.reciprocal(jnp.sum(p, axis=-1, keepdims=True), approx=True)
        head = jax.lax.dot_general(p.astype(jnp.bfloat16), v_h,
                                   (((2,), (1,)), ((0,), (0,))),
                                   preferred_element_type=jnp.float32)  # (block_b, S, hd)
        head = head.reshape(bM, hd).astype(jnp.bfloat16)
        # fold output projection per head: (bM, hd) @ (hd, D) -> lane-dense (bM, D)
        acc = acc + jnp.dot(head, wo_ref[h], preferred_element_type=jnp.float32)

    a = acc + bo_ref[...]

    # ---- residual + LayerNorm 1 (f32) ----
    h1 = _layer_norm(x + a, ln1w_ref[...], ln1b_ref[...])

    # ---- feed-forward (bf16 GEMMs, f32 accumulate, f32 exact GELU) ----
    ff = jnp.dot(h1.astype(jnp.bfloat16), w1_ref[...],
                 preferred_element_type=jnp.float32) + b1_ref[...]
    ff = _gelu_exact(ff)
    ff = jnp.dot(ff.astype(jnp.bfloat16), w2_ref[...],
                 preferred_element_type=jnp.float32) + b2_ref[...]

    # ---- residual + LayerNorm 2 ----
    out = _layer_norm(h1 + ff, ln2w_ref[...], ln2b_ref[...])
    o_ref[...] = out.astype(o_ref.dtype)


def _choose_block_b(B, S, max_rows=1024):
    """Largest divisor of B with block_b*S <= max_rows and block_b*S a multiple of 8
    (f32 sublane tiling). No forced >=2-grid-steps rule: for small problems the
    whole flattened batch runs in a single grid step. Falls back to the full batch
    (block == full array, so the (8,128) rule doesn't apply)."""
    best = None
    for cand in range(1, B + 1):
        if B % cand != 0:
            continue
        rows = cand * S
        if rows > max_rows or rows % 8 != 0:
            continue
        best = cand
    return best if best is not None else B


def transformer_block(x, mask, params, n_head, block_b=None):
    B, S, D = x.shape
    F = params["w1"].shape[1]
    assert D % n_head == 0
    hd = D // n_head
    if mask is None:
        mask = jnp.zeros((S, S), jnp.float32)
    if block_b is None:
        block_b = _choose_block_b(B, S)
    assert B % block_b == 0
    bM = block_b * S

    # Flatten batch into the GEMM M dimension outside the kernel (free reshape).
    xf = x.reshape(B * S, D).astype(jnp.float32)
    mask = mask.astype(jnp.float32)

    bf16 = jnp.bfloat16
    wq = params["wq"].astype(bf16)
    wk = params["wk"].astype(bf16)
    wv = params["wv"].astype(bf16)
    # Pre-split Wo per head: (D, D) -> (n_head, hd, D) so the kernel indexes the
    # leading dim (free) instead of lane-slicing the weight.
    wo = params["wo"].reshape(n_head, hd, D).astype(bf16)
    w1 = params["w1"].astype(bf16)
    w2 = params["w2"].astype(bf16)

    kernel = functools.partial(transformer_block_kernel, n_head, block_b, S)

    def const_spec(shape):
        ndim = len(shape)
        return pl.BlockSpec(shape, lambda i, _n=ndim: (0,) * _n)

    out_flat = pl.pallas_call(
        kernel,
        out_shape=jax.ShapeDtypeStruct((B * S, D), jnp.float32),
        grid=(B // block_b,),
        in_specs=[
            pl.BlockSpec((bM, D), lambda i: (i, 0)),            # x (flattened rows)
            const_spec((S, S)),                                 # additive attention mask
            const_spec((D, D)), const_spec((D, D)), const_spec((D, D)),  # Wq, Wk, Wv
            const_spec((1, D)), const_spec((1, D)), const_spec((1, D)),  # bq, bk, bv
            const_spec((n_head, hd, D)), const_spec((1, D)),    # Wo (per-head), bo
            const_spec((1, D)), const_spec((1, D)),             # ln1 w, b
            const_spec((D, F)), const_spec((1, F)),             # W1, b1
            const_spec((F, D)), const_spec((1, D)),             # W2, b2
            const_spec((1, D)), const_spec((1, D)),             # ln2 w, b
        ],
        out_specs=pl.BlockSpec((bM, D), lambda i: (i, 0)),      # lane-dense output slab
        compiler_params=pltpu.CompilerParams(
            dimension_semantics=("parallel",),
        ),
    )(xf, mask,
      wq, wk, wv,
      params["bq"], params["bk"], params["bv"],
      wo, params["bo"],
      params["ln1w"], params["ln1b"],
      w1, params["b1"],
      w2, params["b2"],
      params["ln2w"], params["ln2b"])
    return out_flat.reshape(B, S, D)


def reference(x, mask, params, n_head):
    """Pure-JAX f32 re-implementation of the PyTorch forward (eval mode)."""
    B, S, D = x.shape
    hd = D // n_head
    scale = 1.0 / math.sqrt(hd)

    def ln(v, w, b):
        mu = v.mean(-1, keepdims=True)
        var = ((v - mu) ** 2).mean(-1, keepdims=True)
        return (v - mu) / jnp.sqrt(var + 1e-5) * w + b

    q = x @ params["wq"] + params["bq"][0]
    k = x @ params["wk"] + params["bk"][0]
    v = x @ params["wv"] + params["bv"][0]
    q = q.reshape(B, S, n_head, hd).transpose(0, 2, 1, 3)
    k = k.reshape(B, S, n_head, hd).transpose(0, 2, 1, 3)
    v = v.reshape(B, S, n_head, hd).transpose(0, 2, 1, 3)
    s = jnp.einsum("bhqd,bhkd->bhqk", q, k) * scale + mask
    p = jax.nn.softmax(s, axis=-1)
    a = jnp.einsum("bhqk,bhkd->bhqd", p, v).transpose(0, 2, 1, 3).reshape(B, S, D)
    a = a @ params["wo"] + params["bo"][0]
    h1 = ln(x + a, params["ln1w"][0], params["ln1b"][0])
    ff = h1 @ params["w1"] + params["b1"][0]
    ff = 0.5 * ff * (1.0 + jax.lax.erf(ff / math.sqrt(2.0)))
    ff = ff @ params["w2"] + params["b2"][0]
    return ln(h1 + ff, params["ln2w"][0], params["ln2b"][0])


if __name__ == "__main__":
    B, S, D, H = 4, 16, 128, 4
    F = 4 * D

    key = jax.random.PRNGKey(0)
    ks = jax.random.split(key, 13)
    scale = 0.05
    params = {
        # linear weights stored as (in_features, out_features)
        "wq": scale * jax.random.normal(ks[0], (D, D), jnp.float32),
        "wk": scale * jax.random.normal(ks[1], (D, D), jnp.float32),
        "wv": scale * jax.random.normal(ks[2], (D, D), jnp.float32),
        "bq": scale * jax.random.normal(ks[3], (1, D), jnp.float32),
        "bk": scale * jax.random.normal(ks[4], (1, D), jnp.float32),
        "bv": scale * jax.random.normal(ks[5], (1, D), jnp.float32),
        "wo": scale * jax.random.normal(ks[6], (D, D), jnp.float32),
        "bo": scale * jax.random.normal(ks[7], (1, D), jnp.float32),
        "w1": scale * jax.random.normal(ks[8], (D, F), jnp.float32),
        "b1": scale * jax.random.normal(ks[9], (1, F), jnp.float32),
        "w2": scale * jax.random.normal(ks[10], (F, D), jnp.float32),
        "b2": scale * jax.random.normal(ks[11], (1, D), jnp.float32),
        "ln1w": jnp.ones((1, D), jnp.float32),
        "ln1b": jnp.zeros((1, D), jnp.float32),
        "ln2w": jnp.ones((1, D), jnp.float32),
        "ln2b": jnp.zeros((1, D), jnp.float32),
    }

    x = jax.random.normal(ks[12], (B, S, D), jnp.float32)
    # causal additive float mask, PyTorch src_mask convention (0 / -inf style)
    causal = jnp.tril(jnp.ones((S, S), jnp.bool_))
    mask = jnp.where(causal, 0.0, -1e9).astype(jnp.float32)

    out = transformer_block(x, mask, params, H)
    out = jax.block_until_ready(out)

    ref = reference(x, mask, params, H)
    # bf16 matmul inputs with f32 accumulation -> loosened tolerance vs f32 reference
    np.testing.assert_allclose(np.asarray(out), np.asarray(ref), atol=2e-2, rtol=2e-2)

    print("KERNEL_OK")
</pallas_src>

<mosaic_0001>
module attributes {stable_mosaic.version = 11 : i64} {
  func.func @transformer_block_kernel(%arg0: i32, %arg1: memref<64x128xf32, #tpu.memory_space<vmem>>, %arg2: memref<16x16xf32, #tpu.memory_space<vmem>>, %arg3: memref<128x128xbf16, #tpu.memory_space<vmem>>, %arg4: memref<128x128xbf16, #tpu.memory_space<vmem>>, %arg5: memref<128x128xbf16, #tpu.memory_space<vmem>>, %arg6: memref<1x128xf32, #tpu.memory_space<vmem>>, %arg7: memref<1x128xf32, #tpu.memory_space<vmem>>, %arg8: memref<1x128xf32, #tpu.memory_space<vmem>>, %arg9: memref<4x32x128xbf16, #tpu.memory_space<vmem>>, %arg10: memref<1x128xf32, #tpu.memory_space<vmem>>, %arg11: memref<1x128xf32, #tpu.memory_space<vmem>>, %arg12: memref<1x128xf32, #tpu.memory_space<vmem>>, %arg13: memref<128x512xbf16, #tpu.memory_space<vmem>>, %arg14: memref<1x512xf32, #tpu.memory_space<vmem>>, %arg15: memref<512x128xbf16, #tpu.memory_space<vmem>>, %arg16: memref<1x128xf32, #tpu.memory_space<vmem>>, %arg17: memref<1x128xf32, #tpu.memory_space<vmem>>, %arg18: memref<1x128xf32, #tpu.memory_space<vmem>>, %arg19: memref<64x128xf32, #tpu.memory_space<vmem>>) attributes {dimension_semantics = [#tpu.dimension_semantics<parallel>], iteration_bounds = array<i64: 1>, scalar_prefetch = 0 : i64, scratch_operands = 0 : i64, tpu.core_type = #tpu.core_type<tc>, window_params = [{transform_indices = @transform_0, window_bounds = array<i64: 64, 128>}, {pipeline_mode = #tpu.pipeline_mode<synchronous>, transform_indices = @transform_1, window_bounds = array<i64: 16, 16>}, {pipeline_mode = #tpu.pipeline_mode<synchronous>, transform_indices = @transform_2, window_bounds = array<i64: 128, 128>}, {pipeline_mode = #tpu.pipeline_mode<synchronous>, transform_indices = @transform_3, window_bounds = array<i64: 128, 128>}, {pipeline_mode = #tpu.pipeline_mode<synchronous>, transform_indices = @transform_4, window_bounds = array<i64: 128, 128>}, {pipeline_mode = #tpu.pipeline_mode<synchronous>, transform_indices = @transform_5, window_bounds = array<i64: 1, 128>}, {pipeline_mode = #tpu.pipeline_mode<synchronous>, transform_indices = @transform_6, window_bounds = array<i64: 1, 128>}, {pipeline_mode = #tpu.pipeline_mode<synchronous>, transform_indices = @transform_7, window_bounds = array<i64: 1, 128>}, {pipeline_mode = #tpu.pipeline_mode<synchronous>, transform_indices = @transform_8, window_bounds = array<i64: 4, 32, 128>}, {pipeline_mode = #tpu.pipeline_mode<synchronous>, transform_indices = @transform_9, window_bounds = array<i64: 1, 128>}, {pipeline_mode = #tpu.pipeline_mode<synchronous>, transform_indices = @transform_10, window_bounds = array<i64: 1, 128>}, {pipeline_mode = #tpu.pipeline_mode<synchronous>, transform_indices = @transform_11, window_bounds = array<i64: 1, 128>}, {pipeline_mode = #tpu.pipeline_mode<synchronous>, transform_indices = @transform_12, window_bounds = array<i64: 128, 512>}, {pipeline_mode = #tpu.pipeline_mode<synchronous>, transform_indices = @transform_13, window_bounds = array<i64: 1, 512>}, {pipeline_mode = #tpu.pipeline_mode<synchronous>, transform_indices = @transform_14, window_bounds = array<i64: 512, 128>}, {pipeline_mode = #tpu.pipeline_mode<synchronous>, transform_indices = @transform_15, window_bounds = array<i64: 1, 128>}, {pipeline_mode = #tpu.pipeline_mode<synchronous>, transform_indices = @transform_16, window_bounds = array<i64: 1, 128>}, {pipeline_mode = #tpu.pipeline_mode<synchronous>, transform_indices = @transform_17, window_bounds = array<i64: 1, 128>}, {transform_indices = @transform_18, window_bounds = array<i64: 64, 128>}]} {
    %c0 = arith.constant 0 : index
    %c0_0 = arith.constant 0 : index
    %0 = vector.load %arg1[%c0, %c0_0] : memref<64x128xf32, #tpu.memory_space<vmem>>, vector<64x128xf32>
    %1 = arith.truncf %0 : vector<64x128xf32> to vector<64x128xbf16>
    %c0_1 = arith.constant 0 : index
    %c0_2 = arith.constant 0 : index
    %2 = vector.load %arg3[%c0_1, %c0_2] : memref<128x128xbf16, #tpu.memory_space<vmem>>, vector<128x128xbf16>
    %cst = arith.constant dense<0.000000e+00> : vector<64x128xf32>
    %3 = tpu.matmul %1, %2, %cst {dimension_numbers = #tpu.dot_dimension_numbers<[1], [0], [0], [1], [0, 0, 1, 1], [], []>} : vector<64x128xbf16>, vector<128x128xbf16>, vector<64x128xf32> -> vector<64x128xf32>
    %c0_3 = arith.constant 0 : index
    %c0_4 = arith.constant 0 : index
    %4 = vector.load %arg6[%c0_3, %c0_4] : memref<1x128xf32, #tpu.memory_space<vmem>>, vector<1x128xf32>
    %5 = vector.broadcast %4 : vector<1x128xf32> to vector<64x128xf32>
    %6 = arith.addf %3, %5 : vector<64x128xf32>
    %c0_5 = arith.constant 0 : index
    %c0_6 = arith.constant 0 : index
    %7 = vector.load %arg4[%c0_5, %c0_6] : memref<128x128xbf16, #tpu.memory_space<vmem>>, vector<128x128xbf16>
    %cst_7 = arith.constant dense<0.000000e+00> : vector<64x128xf32>
    %8 = tpu.matmul %1, %7, %cst_7 {dimension_numbers = #tpu.dot_dimension_numbers<[1], [0], [0], [1], [0, 0, 1, 1], [], []>} : vector<64x128xbf16>, vector<128x128xbf16>, vector<64x128xf32> -> vector<64x128xf32>
    %c0_8 = arith.constant 0 : index
    %c0_9 = arith.constant 0 : index
    %9 = vector.load %arg7[%c0_8, %c0_9] : memref<1x128xf32, #tpu.memory_space<vmem>>, vector<1x128xf32>
    %10 = vector.broadcast %9 : vector<1x128xf32> to vector<64x128xf32>
    %11 = arith.addf %8, %10 : vector<64x128xf32>
    %c0_10 = arith.constant 0 : index
    %c0_11 = arith.constant 0 : index
    %12 = vector.load %arg5[%c0_10, %c0_11] : memref<128x128xbf16, #tpu.memory_space<vmem>>, vector<128x128xbf16>
    %cst_12 = arith.constant dense<0.000000e+00> : vector<64x128xf32>
    %13 = tpu.matmul %1, %12, %cst_12 {dimension_numbers = #tpu.dot_dimension_numbers<[1], [0], [0], [1], [0, 0, 1, 1], [], []>} : vector<64x128xbf16>, vector<128x128xbf16>, vector<64x128xf32> -> vector<64x128xf32>
    %c0_13 = arith.constant 0 : index
    %c0_14 = arith.constant 0 : index
    %14 = vector.load %arg8[%c0_13, %c0_14] : memref<1x128xf32, #tpu.memory_space<vmem>>, vector<1x128xf32>
    %15 = vector.broadcast %14 : vector<1x128xf32> to vector<64x128xf32>
    %16 = arith.addf %13, %15 : vector<64x128xf32>
    %cst_15 = arith.constant 0.176776692 : f32
    %17 = vector.broadcast %cst_15 : f32 to vector<64x128xf32>
    %18 = arith.mulf %6, %17 : vector<64x128xf32>
    %19 = arith.truncf %18 : vector<64x128xf32> to vector<64x128xbf16>
    %20 = arith.truncf %11 : vector<64x128xf32> to vector<64x128xbf16>
    %21 = arith.truncf %16 : vector<64x128xf32> to vector<64x128xbf16>
    %c0_16 = arith.constant 0 : index
    %c0_17 = arith.constant 0 : index
    %22 = vector.load %arg2[%c0_16, %c0_17] : memref<16x16xf32, #tpu.memory_space<vmem>>, vector<16x16xf32>
    %cst_18 = arith.constant 0.000000e+00 : f32
    %23 = vector.broadcast %cst_18 : f32 to vector<64x128xf32>
    %24 = vector.extract_strided_slice %19 {offsets = [0, 0], sizes = [64, 32], strides = [1, 1]} : vector<64x128xbf16> to vector<64x32xbf16>
    %25 = vector.shape_cast %24 : vector<64x32xbf16> to vector<4x16x32xbf16>
    %26 = vector.extract_strided_slice %20 {offsets = [0, 0], sizes = [64, 32], strides = [1, 1]} : vector<64x128xbf16> to vector<64x32xbf16>
    %27 = vector.shape_cast %26 : vector<64x32xbf16> to vector<4x16x32xbf16>
    %28 = vector.extract_strided_slice %21 {offsets = [0, 0], sizes = [64, 32], strides = [1, 1]} : vector<64x128xbf16> to vector<64x32xbf16>
    %29 = vector.shape_cast %28 : vector<64x32xbf16> to vector<4x16x32xbf16>
    %cst_19 = arith.constant dense<0.000000e+00> : vector<4x16x16xf32>
    %30 = tpu.matmul %25, %27, %cst_19 {dimension_numbers = #tpu.dot_dimension_numbers<[2], [2], [1], [1], [0, 0, 0, 1, 1, 1], [0], [0]>} : vector<4x16x32xbf16>, vector<4x16x32xbf16>, vector<4x16x16xf32> -> vector<4x16x16xf32>
    %31 = vector.shape_cast %22 : vector<16x16xf32> to vector<1x16x16xf32>
    %32 = vector.broadcast %31 : vector<1x16x16xf32> to vector<4x16x16xf32>
    %33 = arith.addf %30, %32 : vector<4x16x16xf32>
    %cst_20 = arith.constant dense<0xFF800000> : vector<4x16xf32>
    %34 = vector.multi_reduction <maximumf>, %33, %cst_20 [2] : vector<4x16x16xf32> to vector<4x16xf32>
    %35 = vector.shape_cast %34 : vector<4x16xf32> to vector<4x16x1xf32>
    %36 = vector.broadcast %35 : vector<4x16x1xf32> to vector<4x16x16xf32>
    %37 = arith.subf %33, %36 : vector<4x16x16xf32>
    %38 = math.exp %37 : vector<4x16x16xf32>
    %cst_21 = arith.constant dense<0.000000e+00> : vector<4x16xf32>
    %39 = vector.multi_reduction <add>, %38, %cst_21 [2] : vector<4x16x16xf32> to vector<4x16xf32>
    %40 = vector.shape_cast %39 : vector<4x16xf32> to vector<4x16x1xf32>
    %41 = tpu.reciprocal %40 {approx = true} : vector<4x16x1xf32> -> vector<4x16x1xf32>
    %42 = vector.broadcast %41 : vector<4x16x1xf32> to vector<4x16x16xf32>
    %43 = arith.mulf %38, %42 : vector<4x16x16xf32>
    %44 = arith.truncf %43 : vector<4x16x16xf32> to vector<4x16x16xbf16>
    %cst_22 = arith.constant dense<0.000000e+00> : vector<4x16x32xf32>
    %45 = tpu.matmul %44, %29, %cst_22 {dimension_numbers = #tpu.dot_dimension_numbers<[2], [1], [1], [2], [0, 0, 0, 1, 1, 2], [0], [0]>} : vector<4x16x16xbf16>, vector<4x16x32xbf16>, vector<4x16x32xf32> -> vector<4x16x32xf32>
    %46 = vector.shape_cast %45 : vector<4x16x32xf32> to vector<64x32xf32>
    %47 = arith.truncf %46 : vector<64x32xf32> to vector<64x32xbf16>
    %c0_23 = arith.constant 0 : index
    %c0_24 = arith.constant 0 : index
    %c0_25 = arith.constant 0 : index
    %48 = vector.load %arg9[%c0_23, %c0_24, %c0_25] : memref<4x32x128xbf16, #tpu.memory_space<vmem>>, vector<1x32x128xbf16>
    %49 = vector.shape_cast %48 : vector<1x32x128xbf16> to vector<32x128xbf16>
    %cst_26 = arith.constant dense<0.000000e+00> : vector<64x128xf32>
    %50 = tpu.matmul %47, %49, %cst_26 {dimension_numbers = #tpu.dot_dimension_numbers<[1], [0], [0], [1], [0, 0, 1, 1], [], []>} : vector<64x32xbf16>, vector<32x128xbf16>, vector<64x128xf32> -> vector<64x128xf32>
    %51 = arith.addf %23, %50 : vector<64x128xf32>
    %52 = vector.extract_strided_slice %19 {offsets = [0, 32], sizes = [64, 32], strides = [1, 1]} : vector<64x128xbf16> to vector<64x32xbf16>
    %53 = vector.shape_cast %52 : vector<64x32xbf16> to vector<4x16x32xbf16>
    %54 = vector.extract_strided_slice %20 {offsets = [0, 32], sizes = [64, 32], strides = [1, 1]} : vector<64x128xbf16> to vector<64x32xbf16>
    %55 = vector.shape_cast %54 : vector<64x32xbf16> to vector<4x16x32xbf16>
    %56 = vector.extract_strided_slice %21 {offsets = [0, 32], sizes = [64, 32], strides = [1, 1]} : vector<64x128xbf16> to vector<64x32xbf16>
    %57 = vector.shape_cast %56 : vector<64x32xbf16> to vector<4x16x32xbf16>
    %cst_27 = arith.constant dense<0.000000e+00> : vector<4x16x16xf32>
    %58 = tpu.matmul %53, %55, %cst_27 {dimension_numbers = #tpu.dot_dimension_numbers<[2], [2], [1], [1], [0, 0, 0, 1, 1, 1], [0], [0]>} : vector<4x16x32xbf16>, vector<4x16x32xbf16>, vector<4x16x16xf32> -> vector<4x16x16xf32>
    %59 = vector.shape_cast %22 : vector<16x16xf32> to vector<1x16x16xf32>
    %60 = vector.broadcast %59 : vector<1x16x16xf32> to vector<4x16x16xf32>
    %61 = arith.addf %58, %60 : vector<4x16x16xf32>
    %cst_28 = arith.constant dense<0xFF800000> : vector<4x16xf32>
    %62 = vector.multi_reduction <maximumf>, %61, %cst_28 [2] : vector<4x16x16xf32> to vector<4x16xf32>
    %63 = vector.shape_cast %62 : vector<4x16xf32> to vector<4x16x1xf32>
    %64 = vector.broadcast %63 : vector<4x16x1xf32> to vector<4x16x16xf32>
    %65 = arith.subf %61, %64 : vector<4x16x16xf32>
    %66 = math.exp %65 : vector<4x16x16xf32>
    %cst_29 = arith.constant dense<0.000000e+00> : vector<4x16xf32>
    %67 = vector.multi_reduction <add>, %66, %cst_29 [2] : vector<4x16x16xf32> to vector<4x16xf32>
    %68 = vector.shape_cast %67 : vector<4x16xf32> to vector<4x16x1xf32>
    %69 = tpu.reciprocal %68 {approx = true} : vector<4x16x1xf32> -> vector<4x16x1xf32>
    %70 = vector.broadcast %69 : vector<4x16x1xf32> to vector<4x16x16xf32>
    %71 = arith.mulf %66, %70 : vector<4x16x16xf32>
    %72 = arith.truncf %71 : vector<4x16x16xf32> to vector<4x16x16xbf16>
    %cst_30 = arith.constant dense<0.000000e+00> : vector<4x16x32xf32>
    %73 = tpu.matmul %72, %57, %cst_30 {dimension_numbers = #tpu.dot_dimension_numbers<[2], [1], [1], [2], [0, 0, 0, 1, 1, 2], [0], [0]>} : vector<4x16x16xbf16>, vector<4x16x32xbf16>, vector<4x16x32xf32> -> vector<4x16x32xf32>
    %74 = vector.shape_cast %73 : vector<4x16x32xf32> to vector<64x32xf32>
    %75 = arith.truncf %74 : vector<64x32xf32> to vector<64x32xbf16>
    %c1 = arith.constant 1 : index
    %c0_31 = arith.constant 0 : index
    %c0_32 = arith.constant 0 : index
    %76 = vector.load %arg9[%c1, %c0_31, %c0_32] : memref<4x32x128xbf16, #tpu.memory_space<vmem>>, vector<1x32x128xbf16>
    %77 = vector.shape_cast %76 : vector<1x32x128xbf16> to vector<32x128xbf16>
    %cst_33 = arith.constant dense<0.000000e+00> : vector<64x128xf32>
    %78 = tpu.matmul %75, %77, %cst_33 {dimension_numbers = #tpu.dot_dimension_numbers<[1], [0], [0], [1], [0, 0, 1, 1], [], []>} : vector<64x32xbf16>, vector<32x128xbf16>, vector<64x128xf32> -> vector<64x128xf32>
    %79 = arith.addf %51, %78 : vector<64x128xf32>
    %80 = vector.extract_strided_slice %19 {offsets = [0, 64], sizes = [64, 32], strides = [1, 1]} : vector<64x128xbf16> to vector<64x32xbf16>
    %81 = vector.shape_cast %80 : vector<64x32xbf16> to vector<4x16x32xbf16>
    %82 = vector.extract_strided_slice %20 {offsets = [0, 64], sizes = [64, 32], strides = [1, 1]} : vector<64x128xbf16> to vector<64x32xbf16>
    %83 = vector.shape_cast %82 : vector<64x32xbf16> to vector<4x16x32xbf16>
    %84 = vector.extract_strided_slice %21 {offsets = [0, 64], sizes = [64, 32], strides = [1, 1]} : vector<64x128xbf16> to vector<64x32xbf16>
    %85 = vector.shape_cast %84 : vector<64x32xbf16> to vector<4x16x32xbf16>
    %cst_34 = arith.constant dense<0.000000e+00> : vector<4x16x16xf32>
    %86 = tpu.matmul %81, %83, %cst_34 {dimension_numbers = #tpu.dot_dimension_numbers<[2], [2], [1], [1], [0, 0, 0, 1, 1, 1], [0], [0]>} : vector<4x16x32xbf16>, vector<4x16x32xbf16>, vector<4x16x16xf32> -> vector<4x16x16xf32>
    %87 = vector.shape_cast %22 : vector<16x16xf32> to vector<1x16x16xf32>
    %88 = vector.broadcast %87 : vector<1x16x16xf32> to vector<4x16x16xf32>
    %89 = arith.addf %86, %88 : vector<4x16x16xf32>
    %cst_35 = arith.constant dense<0xFF800000> : vector<4x16xf32>
    %90 = vector.multi_reduction <maximumf>, %89, %cst_35 [2] : vector<4x16x16xf32> to vector<4x16xf32>
    %91 = vector.shape_cast %90 : vector<4x16xf32> to vector<4x16x1xf32>
    %92 = vector.broadcast %91 : vector<4x16x1xf32> to vector<4x16x16xf32>
    %93 = arith.subf %89, %92 : vector<4x16x16xf32>
    %94 = math.exp %93 : vector<4x16x16xf32>
    %cst_36 = arith.constant dense<0.000000e+00> : vector<4x16xf32>
    %95 = vector.multi_reduction <add>, %94, %cst_36 [2] : vector<4x16x16xf32> to vector<4x16xf32>
    %96 = vector.shape_cast %95 : vector<4x16xf32> to vector<4x16x1xf32>
    %97 = tpu.reciprocal %96 {approx = true} : vector<4x16x1xf32> -> vector<4x16x1xf32>
    %98 = vector.broadcast %97 : vector<4x16x1xf32> to vector<4x16x16xf32>
    %99 = arith.mulf %94, %98 : vector<4x16x16xf32>
    %100 = arith.truncf %99 : vector<4x16x16xf32> to vector<4x16x16xbf16>
    %cst_37 = arith.constant dense<0.000000e+00> : vector<4x16x32xf32>
    %101 = tpu.matmul %100, %85, %cst_37 {dimension_numbers = #tpu.dot_dimension_numbers<[2], [1], [1], [2], [0, 0, 0, 1, 1, 2], [0], [0]>} : vector<4x16x16xbf16>, vector<4x16x32xbf16>, vector<4x16x32xf32> -> vector<4x16x32xf32>
    %102 = vector.shape_cast %101 : vector<4x16x32xf32> to vector<64x32xf32>
    %103 = arith.truncf %102 : vector<64x32xf32> to vector<64x32xbf16>
    %c2 = arith.constant 2 : index
    %c0_38 = arith.constant 0 : index
    %c0_39 = arith.constant 0 : index
    %104 = vector.load %arg9[%c2, %c0_38, %c0_39] : memref<4x32x128xbf16, #tpu.memory_space<vmem>>, vector<1x32x128xbf16>
    %105 = vector.shape_cast %104 : vector<1x32x128xbf16> to vector<32x128xbf16>
    %cst_40 = arith.constant dense<0.000000e+00> : vector<64x128xf32>
    %106 = tpu.matmul %103, %105, %cst_40 {dimension_numbers = #tpu.dot_dimension_numbers<[1], [0], [0], [1], [0, 0, 1, 1], [], []>} : vector<64x32xbf16>, vector<32x128xbf16>, vector<64x128xf32> -> vector<64x128xf32>
    %107 = arith.addf %79, %106 : vector<64x128xf32>
    %108 = vector.extract_strided_slice %19 {offsets = [0, 96], sizes = [64, 32], strides = [1, 1]} : vector<64x128xbf16> to vector<64x32xbf16>
    %109 = vector.shape_cast %108 : vector<64x32xbf16> to vector<4x16x32xbf16>
    %110 = vector.extract_strided_slice %20 {offsets = [0, 96], sizes = [64, 32], strides = [1, 1]} : vector<64x128xbf16> to vector<64x32xbf16>
    %111 = vector.shape_cast %110 : vector<64x32xbf16> to vector<4x16x32xbf16>
    %112 = vector.extract_strided_slice %21 {offsets = [0, 96], sizes = [64, 32], strides = [1, 1]} : vector<64x128xbf16> to vector<64x32xbf16>
    %113 = vector.shape_cast %112 : vector<64x32xbf16> to vector<4x16x32xbf16>
    %cst_41 = arith.constant dense<0.000000e+00> : vector<4x16x16xf32>
    %114 = tpu.matmul %109, %111, %cst_41 {dimension_numbers = #tpu.dot_dimension_numbers<[2], [2], [1], [1], [0, 0, 0, 1, 1, 1], [0], [0]>} : vector<4x16x32xbf16>, vector<4x16x32xbf16>, vector<4x16x16xf32> -> vector<4x16x16xf32>
    %115 = vector.shape_cast %22 : vector<16x16xf32> to vector<1x16x16xf32>
    %116 = vector.broadcast %115 : vector<1x16x16xf32> to vector<4x16x16xf32>
    %117 = arith.addf %114, %116 : vector<4x16x16xf32>
    %cst_42 = arith.constant dense<0xFF800000> : vector<4x16xf32>
    %118 = vector.multi_reduction <maximumf>, %117, %cst_42 [2] : vector<4x16x16xf32> to vector<4x16xf32>
    %119 = vector.shape_cast %118 : vector<4x16xf32> to vector<4x16x1xf32>
    %120 = vector.broadcast %119 : vector<4x16x1xf32> to vector<4x16x16xf32>
    %121 = arith.subf %117, %120 : vector<4x16x16xf32>
    %122 = math.exp %121 : vector<4x16x16xf32>
    %cst_43 = arith.constant dense<0.000000e+00> : vector<4x16xf32>
    %123 = vector.multi_reduction <add>, %122, %cst_43 [2] : vector<4x16x16xf32> to vector<4x16xf32>
    %124 = vector.shape_cast %123 : vector<4x16xf32> to vector<4x16x1xf32>
    %125 = tpu.reciprocal %124 {approx = true} : vector<4x16x1xf32> -> vector<4x16x1xf32>
    %126 = vector.broadcast %125 : vector<4x16x1xf32> to vector<4x16x16xf32>
    %127 = arith.mulf %122, %126 : vector<4x16x16xf32>
    %128 = arith.truncf %127 : vector<4x16x16xf32> to vector<4x16x16xbf16>
    %cst_44 = arith.constant dense<0.000000e+00> : vector<4x16x32xf32>
    %129 = tpu.matmul %128, %113, %cst_44 {dimension_numbers = #tpu.dot_dimension_numbers<[2], [1], [1], [2], [0, 0, 0, 1, 1, 2], [0], [0]>} : vector<4x16x16xbf16>, vector<4x16x32xbf16>, vector<4x16x32xf32> -> vector<4x16x32xf32>
    %130 = vector.shape_cast %129 : vector<4x16x32xf32> to vector<64x32xf32>
    %131 = arith.truncf %130 : vector<64x32xf32> to vector<64x32xbf16>
    %c3 = arith.constant 3 : index
    %c0_45 = arith.constant 0 : index
    %c0_46 = arith.constant 0 : index
    %132 = vector.load %arg9[%c3, %c0_45, %c0_46] : memref<4x32x128xbf16, #tpu.memory_space<vmem>>, vector<1x32x128xbf16>
    %133 = vector.shape_cast %132 : vector<1x32x128xbf16> to vector<32x128xbf16>
    %cst_47 = arith.constant dense<0.000000e+00> : vector<64x128xf32>
    %134 = tpu.matmul %131, %133, %cst_47 {dimension_numbers = #tpu.dot_dimension_numbers<[1], [0], [0], [1], [0, 0, 1, 1], [], []>} : vector<64x32xbf16>, vector<32x128xbf16>, vector<64x128xf32> -> vector<64x128xf32>
    %135 = arith.addf %107, %134 : vector<64x128xf32>
    %c0_48 = arith.constant 0 : index
    %c0_49 = arith.constant 0 : index
    %136 = vector.load %arg10[%c0_48, %c0_49] : memref<1x128xf32, #tpu.memory_space<vmem>>, vector<1x128xf32>
    %137 = vector.broadcast %136 : vector<1x128xf32> to vector<64x128xf32>
    %138 = arith.addf %135, %137 : vector<64x128xf32>
    %139 = arith.addf %0, %138 : vector<64x128xf32>
    %c0_50 = arith.constant 0 : index
    %c0_51 = arith.constant 0 : index
    %140 = vector.load %arg11[%c0_50, %c0_51] : memref<1x128xf32, #tpu.memory_space<vmem>>, vector<1x128xf32>
    %c0_52 = arith.constant 0 : index
    %c0_53 = arith.constant 0 : index
    %141 = vector.load %arg12[%c0_52, %c0_53] : memref<1x128xf32, #tpu.memory_space<vmem>>, vector<1x128xf32>
    %cst_54 = arith.constant dense<0.000000e+00> : vector<64xf32>
    %142 = vector.multi_reduction <add>, %139, %cst_54 [1] : vector<64x128xf32> to vector<64xf32>
    %143 = vector.shape_cast %142 : vector<64xf32> to vector<64x1xf32>
    %cst_55 = arith.constant 1.280000e+02 : f32
    %144 = vector.broadcast %cst_55 : f32 to vector<64x1xf32>
    %145 = arith.divf %143, %144 : vector<64x1xf32>
    %146 = vector.broadcast %145 : vector<64x1xf32> to vector<64x128xf32>
    %147 = arith.subf %139, %146 : vector<64x128xf32>
    %148 = arith.mulf %147, %147 : vector<64x128xf32>
    %cst_56 = arith.constant dense<0.000000e+00> : vector<64xf32>
    %149 = vector.multi_reduction <add>, %148, %cst_56 [1] : vector<64x128xf32> to vector<64xf32>
    %150 = vector.shape_cast %149 : vector<64xf32> to vector<64x1xf32>
    %cst_57 = arith.constant 1.280000e+02 : f32
    %151 = vector.broadcast %cst_57 : f32 to vector<64x1xf32>
    %152 = arith.divf %150, %151 : vector<64x1xf32>
    %153 = vector.broadcast %145 : vector<64x1xf32> to vector<64x128xf32>
    %154 = arith.subf %139, %153 : vector<64x128xf32>
    %cst_58 = arith.constant 9.99999974E-6 : f32
    %155 = vector.broadcast %cst_58 : f32 to vector<64x1xf32>
    %156 = arith.addf %152, %155 : vector<64x1xf32>
    %157 = math.rsqrt %156 : vector<64x1xf32>
    %158 = vector.broadcast %157 : vector<64x1xf32> to vector<64x128xf32>
    %159 = arith.mulf %154, %158 : vector<64x128xf32>
    %160 = vector.broadcast %140 : vector<1x128xf32> to vector<64x128xf32>
    %161 = arith.mulf %159, %160 : vector<64x128xf32>
    %162 = vector.broadcast %141 : vector<1x128xf32> to vector<64x128xf32>
    %163 = arith.addf %161, %162 : vector<64x128xf32>
    %164 = arith.truncf %163 : vector<64x128xf32> to vector<64x128xbf16>
    %c0_59 = arith.constant 0 : index
    %c0_60 = arith.constant 0 : index
    %165 = vector.load %arg13[%c0_59, %c0_60] : memref<128x512xbf16, #tpu.memory_space<vmem>>, vector<128x512xbf16>
    %cst_61 = arith.constant dense<0.000000e+00> : vector<64x512xf32>
    %166 = tpu.matmul %164, %165, %cst_61 {dimension_numbers = #tpu.dot_dimension_numbers<[1], [0], [0], [1], [0, 0, 1, 1], [], []>} : vector<64x128xbf16>, vector<128x512xbf16>, vector<64x512xf32> -> vector<64x512xf32>
    %c0_62 = arith.constant 0 : index
    %c0_63 = arith.constant 0 : index
    %167 = vector.load %arg14[%c0_62, %c0_63] : memref<1x512xf32, #tpu.memory_space<vmem>>, vector<1x512xf32>
    %168 = vector.broadcast %167 : vector<1x512xf32> to vector<64x512xf32>
    %169 = arith.addf %166, %168 : vector<64x512xf32>
    %cst_64 = arith.constant 5.000000e-01 : f32
    %170 = vector.broadcast %cst_64 : f32 to vector<64x512xf32>
    %171 = arith.mulf %170, %169 : vector<64x512xf32>
    %cst_65 = arith.constant 0.707106769 : f32
    %172 = vector.broadcast %cst_65 : f32 to vector<64x512xf32>
    %173 = arith.mulf %169, %172 : vector<64x512xf32>
    %174 = math.erf %173 : vector<64x512xf32>
    %cst_66 = arith.constant 1.000000e+00 : f32
    %175 = vector.broadcast %cst_66 : f32 to vector<64x512xf32>
    %176 = arith.addf %175, %174 : vector<64x512xf32>
    %177 = arith.mulf %171, %176 : vector<64x512xf32>
    %178 = arith.truncf %177 : vector<64x512xf32> to vector<64x512xbf16>
    %c0_67 = arith.constant 0 : index
    %c0_68 = arith.constant 0 : index
    %179 = vector.load %arg15[%c0_67, %c0_68] : memref<512x128xbf16, #tpu.memory_space<vmem>>, vector<512x128xbf16>
    %cst_69 = arith.constant dense<0.000000e+00> : vector<64x128xf32>
    %180 = tpu.matmul %178, %179, %cst_69 {dimension_numbers = #tpu.dot_dimension_numbers<[1], [0], [0], [1], [0, 0, 1, 1], [], []>} : vector<64x512xbf16>, vector<512x128xbf16>, vector<64x128xf32> -> vector<64x128xf32>
    %c0_70 = arith.constant 0 : index
    %c0_71 = arith.constant 0 : index
    %181 = vector.load %arg16[%c0_70, %c0_71] : memref<1x128xf32, #tpu.memory_space<vmem>>, vector<1x128xf32>
    %182 = vector.broadcast %181 : vector<1x128xf32> to vector<64x128xf32>
    %183 = arith.addf %180, %182 : vector<64x128xf32>
    %184 = arith.addf %163, %183 : vector<64x128xf32>
    %c0_72 = arith.constant 0 : index
    %c0_73 = arith.constant 0 : index
    %185 = vector.load %arg17[%c0_72, %c0_73] : memref<1x128xf32, #tpu.memory_space<vmem>>, vector<1x128xf32>
    %c0_74 = arith.constant 0 : index
    %c0_75 = arith.constant 0 : index
    %186 = vector.load %arg18[%c0_74, %c0_75] : memref<1x128xf32, #tpu.memory_space<vmem>>, vector<1x128xf32>
    %cst_76 = arith.constant dense<0.000000e+00> : vector<64xf32>
    %187 = vector.multi_reduction <add>, %184, %cst_76 [1] : vector<64x128xf32> to vector<64xf32>
    %188 = vector.shape_cast %187 : vector<64xf32> to vector<64x1xf32>
    %cst_77 = arith.constant 1.280000e+02 : f32
    %189 = vector.broadcast %cst_77 : f32 to vector<64x1xf32>
    %190 = arith.divf %188, %189 : vector<64x1xf32>
    %191 = vector.broadcast %190 : vector<64x1xf32> to vector<64x128xf32>
    %192 = arith.subf %184, %191 : vector<64x128xf32>
    %193 = arith.mulf %192, %192 : vector<64x128xf32>
    %cst_78 = arith.constant dense<0.000000e+00> : vector<64xf32>
    %194 = vector.multi_reduction <add>, %193, %cst_78 [1] : vector<64x128xf32> to vector<64xf32>
    %195 = vector.shape_cast %194 : vector<64xf32> to vector<64x1xf32>
    %cst_79 = arith.constant 1.280000e+02 : f32
    %196 = vector.broadcast %cst_79 : f32 to vector<64x1xf32>
    %197 = arith.divf %195, %196 : vector<64x1xf32>
    %198 = vector.broadcast %190 : vector<64x1xf32> to vector<64x128xf32>
    %199 = arith.subf %184, %198 : vector<64x128xf32>
    %cst_80 = arith.constant 9.99999974E-6 : f32
    %200 = vector.broadcast %cst_80 : f32 to vector<64x1xf32>
    %201 = arith.addf %197, %200 : vector<64x1xf32>
    %202 = math.rsqrt %201 : vector<64x1xf32>
    %203 = vector.broadcast %202 : vector<64x1xf32> to vector<64x128xf32>
    %204 = arith.mulf %199, %203 : vector<64x128xf32>
    %205 = vector.broadcast %185 : vector<1x128xf32> to vector<64x128xf32>
    %206 = arith.mulf %204, %205 : vector<64x128xf32>
    %207 = vector.broadcast %186 : vector<1x128xf32> to vector<64x128xf32>
    %208 = arith.addf %206, %207 : vector<64x128xf32>
    %c0_81 = arith.constant 0 : index
    %c0_82 = arith.constant 0 : index
    %209 = vector.load %arg19[%c0_81, %c0_82] : memref<64x128xf32, #tpu.memory_space<vmem>>, vector<64x128xf32>
    tpu.vector_store %arg19[%c0_81, %c0_82], %208 {strides = array<i32>} : memref<64x128xf32, #tpu.memory_space<vmem>>, vector<64x128xf32>,
    return
  }
  func.func @transform_0(%arg0: i32) -> (i32, i32) {
    %c0_i32 = arith.constant 0 : i32
    %c0_i32_0 = arith.constant 0 : i32
    return %arg0, %c0_i32 : i32, i32
  }
  func.func @transform_1(%arg0: i32) -> (i32, i32) {
    %c0_i32 = arith.constant 0 : i32
    %c0_i32_0 = arith.constant 0 : i32
    %c0_i32_1 = arith.constant 0 : i32
    return %c0_i32, %c0_i32_0 : i32, i32
  }
  func.func @transform_2(%arg0: i32) -> (i32, i32) {
    %c0_i32 = arith.constant 0 : i32
    %c0_i32_0 = arith.constant 0 : i32
    %c0_i32_1 = arith.constant 0 : i32
    return %c0_i32, %c0_i32_0 : i32, i32
  }
  func.func @transform_3(%arg0: i32) -> (i32, i32) {
    %c0_i32 = arith.constant 0 : i32
    %c0_i32_0 = arith.constant 0 : i32
    %c0_i32_1 = arith.constant 0 : i32
    return %c0_i32, %c0_i32_0 : i32, i32
  }
  func.func @transform_4(%arg0: i32) -> (i32, i32) {
    %c0_i32 = arith.constant 0 : i32
    %c0_i32_0 = arith.constant 0 : i32
    %c0_i32_1 = arith.constant 0 : i32
    return %c0_i32, %c0_i32_0 : i32, i32
  }
  func.func @transform_5(%arg0: i32) -> (i32, i32) {
    %c0_i32 = arith.constant 0 : i32
    %c0_i32_0 = arith.constant 0 : i32
    %c0_i32_1 = arith.constant 0 : i32
    return %c0_i32, %c0_i32_0 : i32, i32
  }
  func.func @transform_6(%arg0: i32) -> (i32, i32) {
    %c0_i32 = arith.constant 0 : i32
    %c0_i32_0 = arith.constant 0 : i32
    %c0_i32_1 = arith.constant 0 : i32
    return %c0_i32, %c0_i32_0 : i32, i32
  }
  func.func @transform_7(%arg0: i32) -> (i32, i32) {
    %c0_i32 = arith.constant 0 : i32
    %c0_i32_0 = arith.constant 0 : i32
    %c0_i32_1 = arith.constant 0 : i32
    return %c0_i32, %c0_i32_0 : i32, i32
  }
  func.func @transform_8(%arg0: i32) -> (i32, i32, i32) {
    %c0_i32 = arith.constant 0 : i32
    %c0_i32_0 = arith.constant 0 : i32
    %c0_i32_1 = arith.constant 0 : i32
    %c0_i32_2 = arith.constant 0 : i32
    return %c0_i32, %c0_i32_0, %c0_i32_1 : i32, i32, i32
  }
  func.func @transform_9(%arg0: i32) -> (i32, i32) {
    %c0_i32 = arith.constant 0 : i32
    %c0_i32_0 = arith.constant 0 : i32
    %c0_i32_1 = arith.constant 0 : i32
    return %c0_i32, %c0_i32_0 : i32, i32
  }
  func.func @transform_10(%arg0: i32) -> (i32, i32) {
    %c0_i32 = arith.constant 0 : i32
    %c0_i32_0 = arith.constant 0 : i32
    %c0_i32_1 = arith.constant 0 : i32
    return %c0_i32, %c0_i32_0 : i32, i32
  }
  func.func @transform_11(%arg0: i32) -> (i32, i32) {
    %c0_i32 = arith.constant 0 : i32
    %c0_i32_0 = arith.constant 0 : i32
    %c0_i32_1 = arith.constant 0 : i32
    return %c0_i32, %c0_i32_0 : i32, i32
  }
  func.func @transform_12(%arg0: i32) -> (i32, i32) {
    %c0_i32 = arith.constant 0 : i32
    %c0_i32_0 = arith.constant 0 : i32
    %c0_i32_1 = arith.constant 0 : i32
    return %c0_i32, %c0_i32_0 : i32, i32
  }
  func.func @transform_13(%arg0: i32) -> (i32, i32) {
    %c0_i32 = arith.constant 0 : i32
    %c0_i32_0 = arith.constant 0 : i32
    %c0_i32_1 = arith.constant 0 : i32
    return %c0_i32, %c0_i32_0 : i32, i32
  }
  func.func @transform_14(%arg0: i32) -> (i32, i32) {
    %c0_i32 = arith.constant 0 : i32
    %c0_i32_0 = arith.constant 0 : i32
    %c0_i32_1 = arith.constant 0 : i32
    return %c0_i32, %c0_i32_0 : i32, i32
  }
  func.func @transform_15(%arg0: i32) -> (i32, i32) {
    %c0_i32 = arith.constant 0 : i32
    %c0_i32_0 = arith.constant 0 : i32
    %c0_i32_1 = arith.constant 0 : i32
    return %c0_i32, %c0_i32_0 : i32, i32
  }
  func.func @transform_16(%arg0: i32) -> (i32, i32) {
    %c0_i32 = arith.constant 0 : i32
    %c0_i32_0 = arith.constant 0 : i32
    %c0_i32_1 = arith.constant 0 : i32
    return %c0_i32, %c0_i32_0 : i32, i32
  }
  func.func @transform_17(%arg0: i32) -> (i32, i32) {
    %c0_i32 = arith.constant 0 : i32
    %c0_i32_0 = arith.constant 0 : i32
    %c0_i32_1 = arith.constant 0 : i32
    return %c0_i32, %c0_i32_0 : i32, i32
  }
  func.func @transform_18(%arg0: i32) -> (i32, i32) {
    %c0_i32 = arith.constant 0 : i32
    %c0_i32_0 = arith.constant 0 : i32
    return %arg0, %c0_i32 : i32, i32
  }
}

</mosaic_0001>

<llo_original>
// kernel: tpu_custom_call.1
$region0: #{tpu_custom_call.1}
  #allocation0 [shape = 'u32[]', space=smem, size = 0x4, offset = 0x4, fixed_abs, tag = 'smem constant byte address 0x4 - core index']
  #allocation1 [shape = 'u32[72,128]{1,0:T(1,128)}', space=vmem, size = 0x9000, scoped, tag = 'internal scratch']
  %s0 = inlined_call_operand.hbm [shape: f32[64,128], index: 0, kind: input, shape index: {}]
  %s1 = inlined_call_operand.hbm [shape: f32[16,16], index: 1, kind: input, shape index: {}]
  %s2 = inlined_call_operand.hbm [shape: bf16[128,128], index: 2, kind: input, shape index: {}]
  %s3 = inlined_call_operand.hbm [shape: bf16[128,128], index: 3, kind: input, shape index: {}]
  %s4 = inlined_call_operand.hbm [shape: bf16[128,128], index: 4, kind: input, shape index: {}]
  %s5 = inlined_call_operand.vmem [shape: f32[1,128], index: 5, kind: input, shape index: {}]
  %s6 = inlined_call_operand.vmem [shape: f32[1,128], index: 6, kind: input, shape index: {}]
  %s7 = inlined_call_operand.vmem [shape: f32[1,128], index: 7, kind: input, shape index: {}]
  %s8 = inlined_call_operand.hbm [shape: bf16[4,32,128], index: 8, kind: input, shape index: {}]
  %s9 = inlined_call_operand.vmem [shape: f32[1,128], index: 9, kind: input, shape index: {}]
  %s10 = inlined_call_operand.vmem [shape: f32[1,128], index: 10, kind: input, shape index: {}]
  %s11 = inlined_call_operand.vmem [shape: f32[1,128], index: 11, kind: input, shape index: {}]
  %s12 = inlined_call_operand.hbm [shape: bf16[128,512], index: 12, kind: input, shape index: {}]
  %s13 = inlined_call_operand.vmem [shape: f32[1,512], index: 13, kind: input, shape index: {}]
  %s14 = inlined_call_operand.hbm [shape: bf16[512,128], index: 14, kind: input, shape index: {}]
  %s15 = inlined_call_operand.vmem [shape: f32[1,128], index: 15, kind: input, shape index: {}]
  %s16 = inlined_call_operand.vmem [shape: f32[1,128], index: 16, kind: input, shape index: {}]
  %s17 = inlined_call_operand.vmem [shape: f32[1,128], index: 17, kind: input, shape index: {}]
  %s18 = inlined_call_operand.hbm [shape: f32[64,128], index: 18, kind: output, shape index: {}]
  %s19 = sld [smem:[#allocation0]]
  $region114: #{tpu_custom_call.1} parent=0
    _
  %s21 = ssub.s32 1, %s19
  %s22 = scalar_select 0, %s21, %s19
  $region1: #{tpu_custom_call.1} parent=0
    #allocation2 [shape = 'u8[32768]{0}', space=vmem, size = 0x8000, scoped, tag = 'input window, operand 0, single buffered']
    #allocation3 [shape = 's32[1]{0}', space=sflag, size = 0x4, scoped, tag = 'scoped memory for tpu_custom_call.1']
    #allocation4 [shape = 's32[1]{0}', space=sflag, size = 0x4, scoped, tag = 'scoped memory for tpu_custom_call.1']
    #allocation5 [shape = 'u8[8192]{0}', space=vmem, size = 0x2000, scoped, tag = 'input window, operand 1, single buffered']
    #allocation6 [shape = 's32[1]{0}', space=sflag, size = 0x4, scoped, tag = 'scoped memory for tpu_custom_call.1']
    #allocation7 [shape = 'u8[32768]{0}', space=vmem, size = 0x8000, scoped, tag = 'input window, operand 2, single buffered']
    #allocation8 [shape = 'u8[32768]{0}', space=vmem, size = 0x8000, scoped, tag = 'input window, operand 3, single buffered']
    #allocation9 [shape = 's32[1]{0}', space=sflag, size = 0x4, scoped, tag = 'scoped memory for tpu_custom_call.1']
    #allocation10 [shape = 'u8[32768]{0}', space=vmem, size = 0x8000, scoped, tag = 'input window, operand 4, single buffered']
    #allocation11 [shape = 'u8[32768]{0}', space=vmem, size = 0x8000, scoped, tag = 'input window, operand 8, single buffered']
    #allocation12 [shape = 's32[1]{0}', space=sflag, size = 0x4, scoped, tag = 'scoped memory for tpu_custom_call.1']
    #allocation13 [shape = 'u8[131072]{0}', space=vmem, size = 0x20000, scoped, tag = 'input window, operand 12, single buffered']
    #allocation14 [shape = 'u8[131072]{0}', space=vmem, size = 0x20000, scoped, tag = 'input window, operand 14, single buffered']
    #allocation15 [shape = 's32[1]{0}', space=sflag, size = 0x4, scoped, tag = 'scoped memory for tpu_custom_call.1']
    #allocation16 [shape = 'u8[32768]{0}', space=vmem, size = 0x8000, scoped, tag = 'output window, operand 0, single buffered']
    %23 = vsyncpa [#allocation3], 0
    %24 = vsyncpa [#allocation6], 0
    %25 = vsyncpa [#allocation9], 0
    %26 = vsyncpa [#allocation12], 0
    %27 = vsyncpa [#allocation15], 0
    %28 = vsyncpa [#allocation4], 0
    // Predicated region
    $region2: #{tpu_custom_call.1} parent=1 // pred_check
      _
    $region3: #{tpu_custom_call.1} parent=1 // pred_check_branch
      %30 = sbr.rel (0) target = $region5
    $region4: #{tpu_custom_call.1} parent=1 // pred_region
      %32 = vsyncadd [#allocation3], 0
      %s33 = sshll.u32 %s0, 4
      %s34 = int_to_ptr.hbm [resolvable:$true] %s33
      %s35 = sshll.u32 [#allocation2], 4
      %s36 = int_to_ptr.vmem [resolvable:$true] %s35
      %41 = dma.hbm_to_vmem [thread:$0]  %s34, 1024, %s36, [#allocation3], 128, 128, 8
    $region5: #{tpu_custom_call.1} parent=1 // pred_fallthru
      _
    // Predicated region
    $region6: #{tpu_custom_call.1} parent=1 // pred_check
      _
    $region7: #{tpu_custom_call.1} parent=1 // pred_check_branch
      %43 = sbr.rel (0) target = $region9
    $region8: #{tpu_custom_call.1} parent=1 // pred_region
      %45 = vsyncadd [#allocation6], 0
      %s46 = sshll.u32 %s1, 4
      %s47 = int_to_ptr.hbm [resolvable:$true] %s46
      %s48 = sshll.u32 [#allocation5], 4
      %s49 = int_to_ptr.vmem [resolvable:$true] %s48
      %54 = dma.hbm_to_vmem [thread:$0]  %s47, 256, %s49, [#allocation6], 128, 128, 8
    $region9: #{tpu_custom_call.1} parent=1 // pred_fallthru
      _
    // Predicated region
    $region10: #{tpu_custom_call.1} parent=1 // pred_check
      _
    $region11: #{tpu_custom_call.1} parent=1 // pred_check_branch
      %56 = sbr.rel (0) target = $region13
    $region12: #{tpu_custom_call.1} parent=1 // pred_region
      %58 = vsyncadd [#allocation6], 0
      %s59 = sshll.u32 %s2, 4
      %s60 = int_to_ptr.hbm [resolvable:$true] %s59
      %s61 = sshll.u32 [#allocation7], 4
      %s62 = int_to_ptr.vmem [resolvable:$true] %s61
      %67 = dma.hbm_to_vmem [thread:$0]  %s60, 1024, %s62, [#allocation6], 64, 64, 4
    $region13: #{tpu_custom_call.1} parent=1 // pred_fallthru
      _
    // Predicated region
    $region14: #{tpu_custom_call.1} parent=1 // pred_check
      _
    $region15: #{tpu_custom_call.1} parent=1 // pred_check_branch
      %69 = sbr.rel (0) target = $region17
    $region16: #{tpu_custom_call.1} parent=1 // pred_region
      %71 = vsyncadd [#allocation9], 0
      %s72 = sshll.u32 %s3, 4
      %s73 = int_to_ptr.hbm [resolvable:$true] %s72
      %s74 = sshll.u32 [#allocation8], 4
      %s75 = int_to_ptr.vmem [resolvable:$true] %s74
      %80 = dma.hbm_to_vmem [thread:$0]  %s73, 1024, %s75, [#allocation9], 64, 64, 4
    $region17: #{tpu_custom_call.1} parent=1 // pred_fallthru
      _
    // Predicated region
    $region18: #{tpu_custom_call.1} parent=1 // pred_check
      _
    $region19: #{tpu_custom_call.1} parent=1 // pred_check_branch
      %82 = sbr.rel (0) target = $region21
    $region20: #{tpu_custom_call.1} parent=1 // pred_region
      %84 = vsyncadd [#allocation9], 0
      %s85 = sshll.u32 %s4, 4
      %s86 = int_to_ptr.hbm [resolvable:$true] %s85
      %s87 = sshll.u32 [#allocation10], 4
      %s88 = int_to_ptr.vmem [resolvable:$true] %s87
      %93 = dma.hbm_to_vmem [thread:$0]  %s86, 1024, %s88, [#allocation9], 64, 64, 4
    $region21: #{tpu_custom_call.1} parent=1 // pred_fallthru
      _
    // Predicated region
    $region22: #{tpu_custom_call.1} parent=1 // pred_check
      _
    $region23: #{tpu_custom_call.1} parent=1 // pred_check_branch
      %95 = sbr.rel (0) target = $region25
    $region24: #{tpu_custom_call.1} parent=1 // pred_region
      _
    $region25: #{tpu_custom_call.1} parent=1 // pred_fallthru
      _
    // Predicated region
    $region26: #{tpu_custom_call.1} parent=1 // pred_check
      _
    $region27: #{tpu_custom_call.1} parent=1 // pred_check_branch
      %97 = sbr.rel (0) target = $region29
    $region28: #{tpu_custom_call.1} parent=1 // pred_region
      _
    $region29: #{tpu_custom_call.1} parent=1 // pred_fallthru
      _
    // Predicated region
    $region30: #{tpu_custom_call.1} parent=1 // pred_check
      _
    $region31: #{tpu_custom_call.1} parent=1 // pred_check_branch
      %99 = sbr.rel (0) target = $region33
    $region32: #{tpu_custom_call.1} parent=1 // pred_region
      _
    $region33: #{tpu_custom_call.1} parent=1 // pred_fallthru
      _
    // Predicated region
    $region34: #{tpu_custom_call.1} parent=1 // pred_check
      _
    $region35: #{tpu_custom_call.1} parent=1 // pred_check_branch
      %101 = sbr.rel (0) target = $region37
    $region36: #{tpu_custom_call.1} parent=1 // pred_region
      %103 = vsyncadd [#allocation12], 0
      %s104 = sshll.u32 %s8, 4
      %s105 = int_to_ptr.hbm [resolvable:$true] %s104
      %s106 = sshll.u32 [#allocation11], 4
      %s107 = int_to_ptr.vmem [resolvable:$true] %s106
      %112 = dma.hbm_to_vmem [thread:$0]  %s105, 1024, %s107, [#allocation12], 64, 64, 4
    $region37: #{tpu_custom_call.1} parent=1 // pred_fallthru
      _
    // Predicated region
    $region38: #{tpu_custom_call.1} parent=1 // pred_check
      _
    $region39: #{tpu_custom_call.1} parent=1 // pred_check_branch
      %114 = sbr.rel (0) target = $region41
    $region40: #{tpu_custom_call.1} parent=1 // pred_region
      _
    $region41: #{tpu_custom_call.1} parent=1 // pred_fallthru
      _
    // Predicated region
    $region42: #{tpu_custom_call.1} parent=1 // pred_check
      _
    $region43: #{tpu_custom_call.1} parent=1 // pred_check_branch
      %116 = sbr.rel (0) target = $region45
    $region44: #{tpu_custom_call.1} parent=1 // pred_region
      _
    $region45: #{tpu_custom_call.1} parent=1 // pred_fallthru
      _
    // Predicated region
    $region46: #{tpu_custom_call.1} parent=1 // pred_check
      _
    $region47: #{tpu_custom_call.1} parent=1 // pred_check_branch
      %118 = sbr.rel (0) target = $region49
    $region48: #{tpu_custom_call.1} parent=1 // pred_region
      _
    $region49: #{tpu_custom_call.1} parent=1 // pred_fallthru
      _
    // Predicated region
    $region50: #{tpu_custom_call.1} parent=1 // pred_check
      _
    $region51: #{tpu_custom_call.1} parent=1 // pred_check_branch
      %120 = sbr.rel (0) target = $region53
    $region52: #{tpu_custom_call.1} parent=1 // pred_region
      %122 = vsyncadd [#allocation12], 0
      %s123 = sshll.u32 %s12, 4
      %s124 = int_to_ptr.hbm [resolvable:$true] %s123
      %s125 = sshll.u32 [#allocation13], 4
      %s126 = int_to_ptr.vmem [resolvable:$true] %s125
      %131 = dma.hbm_to_vmem [thread:$0]  %s124, 4096, %s126, [#allocation12], 256, 256, 16
    $region53: #{tpu_custom_call.1} parent=1 // pred_fallthru
      _
    // Predicated region
    $region54: #{tpu_custom_call.1} parent=1 // pred_check
      _
    $region55: #{tpu_custom_call.1} parent=1 // pred_check_branch
      %133 = sbr.rel (0) target = $region57
    $region56: #{tpu_custom_call.1} parent=1 // pred_region
      _
    $region57: #{tpu_custom_call.1} parent=1 // pred_fallthru
      _
    // Predicated region
    $region58: #{tpu_custom_call.1} parent=1 // pred_check
      _
    $region59: #{tpu_custom_call.1} parent=1 // pred_check_branch
      %135 = sbr.rel (0) target = $region61
    $region60: #{tpu_custom_call.1} parent=1 // pred_region
      %137 = vsyncadd [#allocation15], 0
      %s138 = sshll.u32 %s14, 4
      %s139 = int_to_ptr.hbm [resolvable:$true] %s138
      %s140 = sshll.u32 [#allocation14], 4
      %s141 = int_to_ptr.vmem [resolvable:$true] %s140
      %146 = dma.hbm_to_vmem [thread:$0]  %s139, 4096, %s141, [#allocation15], 64, 64, 4
    $region61: #{tpu_custom_call.1} parent=1 // pred_fallthru
      _
    // Predicated region
    $region62: #{tpu_custom_call.1} parent=1 // pred_check
      _
    $region63: #{tpu_custom_call.1} parent=1 // pred_check_branch
      %148 = sbr.rel (0) target = $region65
    $region64: #{tpu_custom_call.1} parent=1 // pred_region
      _
    $region65: #{tpu_custom_call.1} parent=1 // pred_fallthru
      _
    // Predicated region
    $region66: #{tpu_custom_call.1} parent=1 // pred_check
      _
    $region67: #{tpu_custom_call.1} parent=1 // pred_check_branch
      %150 = sbr.rel (0) target = $region69
    $region68: #{tpu_custom_call.1} parent=1 // pred_region
      _
    $region69: #{tpu_custom_call.1} parent=1 // pred_fallthru
      _
    // Predicated region
    $region70: #{tpu_custom_call.1} parent=1 // pred_check
      _
    $region71: #{tpu_custom_call.1} parent=1 // pred_check_branch
      %152 = sbr.rel (0) target = $region73
    $region72: #{tpu_custom_call.1} parent=1 // pred_region
      _
    $region73: #{tpu_custom_call.1} parent=1 // pred_fallthru
      _
    // Predicated region
    $region74: #{tpu_custom_call.1} parent=1 // pred_check
      _
    $region75: #{tpu_custom_call.1} parent=1 // pred_check_branch
      %154 = sbr.rel (0) target = $region77
    $region76: #{tpu_custom_call.1} parent=1 // pred_region
      %156 = dma.done [#allocation3], 1024
    $region77: #{tpu_custom_call.1} parent=1 // pred_fallthru
      _
    // Predicated region
    $region78: #{tpu_custom_call.1} parent=1 // pred_check
      _
    $region79: #{tpu_custom_call.1} parent=1 // pred_check_branch
      %158 = sbr.rel (0) target = $region81
    $region80: #{tpu_custom_call.1} parent=1 // pred_region
      %160 = dma.done [#allocation6], 256
    $region81: #{tpu_custom_call.1} parent=1 // pred_fallthru
      _
    // Predicated region
    $region82: #{tpu_custom_call.1} parent=1 // pred_check
      _
    $region83: #{tpu_custom_call.1} parent=1 // pred_check_branch
      %162 = sbr.rel (0) target = $region85
    $region84: #{tpu_custom_call.1} parent=1 // pred_region
      %164 = dma.done [#allocation6], 1024
    $region85: #{tpu_custom_call.1} parent=1 // pred_fallthru
      _
    // Predicated region
    $region86: #{tpu_custom_call.1} parent=1 // pred_check
      _
    $region87: #{tpu_custom_call.1} parent=1 // pred_check_branch
      %166 = sbr.rel (0) target = $region89
    $region88: #{tpu_custom_call.1} parent=1 // pred_region
      %168 = dma.done [#allocation9], 1024
    $region89: #{tpu_custom_call.1} parent=1 // pred_fallthru
      _
    // Predicated region
    $region90: #{tpu_custom_call.1} parent=1 // pred_check
      _
    $region91: #{tpu_custom_call.1} parent=1 // pred_check_branch
      %170 = sbr.rel (0) target = $region93
    $region92: #{tpu_custom_call.1} parent=1 // pred_region
      %172 = dma.done [#allocation9], 1024
    $region93: #{tpu_custom_call.1} parent=1 // pred_fallthru
      _
    // Predicated region
    $region94: #{tpu_custom_call.1} parent=1 // pred_check
      _
    $region95: #{tpu_custom_call.1} parent=1 // pred_check_branch
      %174 = sbr.rel (0) target = $region97
    $region96: #{tpu_custom_call.1} parent=1 // pred_region
      %176 = dma.done [#allocation12], 1024
    $region97: #{tpu_custom_call.1} parent=1 // pred_fallthru
      _
    // Predicated region
    $region98: #{tpu_custom_call.1} parent=1 // pred_check
      _
    $region99: #{tpu_custom_call.1} parent=1 // pred_check_branch
      %178 = sbr.rel (0) target = $region101
    $region100: #{tpu_custom_call.1} parent=1 // pred_region
      %180 = dma.done [#allocation12], 4096
    $region101: #{tpu_custom_call.1} parent=1 // pred_fallthru
      _
    // Predicated region
    $region102: #{tpu_custom_call.1} parent=1 // pred_check
      _
    $region103: #{tpu_custom_call.1} parent=1 // pred_check_branch
      %182 = sbr.rel (0) target = $region105
    $region104: #{tpu_custom_call.1} parent=1 // pred_region
      %184 = dma.done [#allocation15], 4096
    $region105: #{tpu_custom_call.1} parent=1 // pred_fallthru
      _
    %v186 = vld [vmem:[#allocation2] sm:$0xff]
    %v187 = vld [vmem:[#allocation2 + $0x8] sm:$0xff]
    %v188 = vld [vmem:[#allocation2 + $0x10] sm:$0xff]
    %v189 = vld [vmem:[#allocation2 + $0x18] sm:$0xff]
    %v190 = vld [vmem:[#allocation2 + $0x20] sm:$0xff]
    %v191 = vld [vmem:[#allocation2 + $0x28] sm:$0xff]
    %v192 = vld [vmem:[#allocation2 + $0x30] sm:$0xff]
    %v193 = vld [vmem:[#allocation2 + $0x38] sm:$0xff]
    %v194 = vpack.c.bf16 %v187, %v186
    %v195 = vpack.c.bf16 %v189, %v188
    %v196 = vpack.c.bf16 %v191, %v190
    %v197 = vpack.c.bf16 %v193, %v192
    %v198 = vld [vmem:[#allocation7] sm:$0xf]
    %v199 = vld [vmem:[#allocation7 + $0x4] sm:$0xf]
    %v200 = vld [vmem:[#allocation7 + $0x8] sm:$0xf]
    %v201 = vld [vmem:[#allocation7 + $0xc] sm:$0xf]
    %v202 = vld [vmem:[#allocation7 + $0x10] sm:$0xf]
    %v203 = vld [vmem:[#allocation7 + $0x14] sm:$0xf]
    %v204 = vld [vmem:[#allocation7 + $0x18] sm:$0xf]
    %v205 = vld [vmem:[#allocation7 + $0x1c] sm:$0xf]
    %v206 = vld [vmem:[#allocation7 + $0x20] sm:$0xf]
    %v207 = vld [vmem:[#allocation7 + $0x24] sm:$0xf]
    %v208 = vld [vmem:[#allocation7 + $0x28] sm:$0xf]
    %v209 = vld [vmem:[#allocation7 + $0x2c] sm:$0xf]
    %v210 = vld [vmem:[#allocation7 + $0x30] sm:$0xf]
    %v211 = vld [vmem:[#allocation7 + $0x34] sm:$0xf]
    %v212 = vld [vmem:[#allocation7 + $0x38] sm:$0xf]
    %v213 = vld [vmem:[#allocation7 + $0x3c] sm:$0xf]
    %v214 = vld [vmem:[%s5] sm:$0x1]
    %v216 = vperm.slane %v214, 0
    %v234 = vunpack.c.l.b16 %v198
    %v235 = vunpack.c.l.b16 %v199
    %v236 = vunpack.c.l.b16 %v200
    %v237 = vunpack.c.l.b16 %v201
    %v238 = vunpack.c.l.b16 %v202
    %v239 = vunpack.c.l.b16 %v203
    %v240 = vunpack.c.l.b16 %v204
    %v241 = vunpack.c.l.b16 %v205
    %v242 = vunpack.c.l.b16 %v206
    %v243 = vunpack.c.l.b16 %v207
    %v244 = vunpack.c.l.b16 %v208
    %v245 = vunpack.c.l.b16 %v209
    %v246 = vunpack.c.l.b16 %v210
    %v247 = vunpack.c.l.b16 %v211
    %v248 = vunpack.c.l.b16 %v212
    %v249 = vunpack.c.l.b16 %v213
    %v250 = vpack.c.b16 %v235, %v234
    %v251 = vpack.c.b16 %v237, %v236
    %v252 = vpack.c.b16 %v239, %v238
    %v253 = vpack.c.b16 %v241, %v240
    %v254 = vpack.c.b16 %v243, %v242
    %v255 = vpack.c.b16 %v245, %v244
    %v256 = vpack.c.b16 %v247, %v246
    %v257 = vpack.c.b16 %v249, %v248
    %266 = vmatpush.bf16.msra.mxu0 %v257
    %267 = vmatpush.bf16.msra.mxu0 %v256
    %268 = vmatpush.bf16.msra.mxu0 %v255
    %269 = vmatpush.bf16.msra.mxu0 %v254
    %270 = vmatpush.bf16.msra.mxu0 %v253
    %271 = vmatpush.bf16.msra.mxu0 %v252
    %272 = vmatpush.bf16.msra.mxu0 %v251
    %273 = vmatpush.bf16.msra.mxu0 %v250
    %274 = vmatmul.bf16.gmra.mxu0 %v194
    %v275 = vpop.f32.mrf.mxu0
    %v276 = vadd.f32 %v216, %v275
    %v277 = vpop.f32.mrf.mxu0
    %v278 = vadd.f32 %v216, %v277
    %279 = vmatmul.bf16.gmra.mxu0 %v195
    %v280 = vpop.f32.mrf.mxu0
    %v281 = vadd.f32 %v216, %v280
    %v282 = vpop.f32.mrf.mxu0
    %v283 = vadd.f32 %v216, %v282
    %284 = vmatmul.bf16.gmra.mxu0 %v196
    %v285 = vpop.f32.mrf.mxu0
    %v286 = vadd.f32 %v216, %v285
    %v287 = vpop.f32.mrf.mxu0
    %v288 = vadd.f32 %v216, %v287
    %289 = vmatmul.bf16.gmra.mxu0 %v197
    %v290 = vpop.f32.mrf.mxu0
    %v291 = vadd.f32 %v216, %v290
    %v292 = vpop.f32.mrf.mxu0
    %v293 = vadd.f32 %v216, %v292
    %294 = vdwg.mxu0
    %v295 = vld [vmem:[#allocation8] sm:$0xf]
    %v296 = vld [vmem:[#allocation8 + $0x4] sm:$0xf]
    %v297 = vld [vmem:[#allocation8 + $0x8] sm:$0xf]
    %v298 = vld [vmem:[#allocation8 + $0xc] sm:$0xf]
    %v299 = vld [vmem:[#allocation8 + $0x10] sm:$0xf]
    %v300 = vld [vmem:[#allocation8 + $0x14] sm:$0xf]
    %v301 = vld [vmem:[#allocation8 + $0x18] sm:$0xf]
    %v302 = vld [vmem:[#allocation8 + $0x1c] sm:$0xf]
    %v303 = vld [vmem:[#allocation8 + $0x20] sm:$0xf]
    %v304 = vld [vmem:[#allocation8 + $0x24] sm:$0xf]
    %v305 = vld [vmem:[#allocation8 + $0x28] sm:$0xf]
    %v306 = vld [vmem:[#allocation8 + $0x2c] sm:$0xf]
    %v307 = vld [vmem:[#allocation8 + $0x30] sm:$0xf]
    %v308 = vld [vmem:[#allocation8 + $0x34] sm:$0xf]
    %v309 = vld [vmem:[#allocation8 + $0x38] sm:$0xf]
    %v310 = vld [vmem:[#allocation8 + $0x3c] sm:$0xf]
    %v311 = vld [vmem:[%s6] sm:$0x1]
    %v313 = vperm.slane %v311, 0
    %v331 = vunpack.c.l.b16 %v295
    %v332 = vunpack.c.l.b16 %v296
    %v333 = vunpack.c.l.b16 %v297
    %v334 = vunpack.c.l.b16 %v298
    %v335 = vunpack.c.l.b16 %v299
    %v336 = vunpack.c.l.b16 %v300
    %v337 = vunpack.c.l.b16 %v301
    %v338 = vunpack.c.l.b16 %v302
    %v339 = vunpack.c.l.b16 %v303
    %v340 = vunpack.c.l.b16 %v304
    %v341 = vunpack.c.l.b16 %v305
    %v342 = vunpack.c.l.b16 %v306
    %v343 = vunpack.c.l.b16 %v307
    %v344 = vunpack.c.l.b16 %v308
    %v345 = vunpack.c.l.b16 %v309
    %v346 = vunpack.c.l.b16 %v310
    %v347 = vpack.c.b16 %v332, %v331
    %v348 = vpack.c.b16 %v334, %v333
    %v349 = vpack.c.b16 %v336, %v335
    %v350 = vpack.c.b16 %v338, %v337
    %v351 = vpack.c.b16 %v340, %v339
    %v352 = vpack.c.b16 %v342, %v341
    %v353 = vpack.c.b16 %v344, %v343
    %v354 = vpack.c.b16 %v346, %v345
    %363 = vmatpush.bf16.msra.mxu0 %v354
    %364 = vmatpush.bf16.msra.mxu0 %v353
    %365 = vmatpush.bf16.msra.mxu0 %v352
    %366 = vmatpush.bf16.msra.mxu0 %v351
    %367 = vmatpush.bf16.msra.mxu0 %v350
    %368 = vmatpush.bf16.msra.mxu0 %v349
    %369 = vmatpush.bf16.msra.mxu0 %v348
    %370 = vmatpush.bf16.msra.mxu0 %v347
    %371 = vmatmul.bf16.gmra.mxu0 %v194
    %v372 = vpop.f32.mrf.mxu0
    %v373 = vadd.f32 %v313, %v372
    %v374 = vpop.f32.mrf.mxu0
    %v375 = vadd.f32 %v313, %v374
    %376 = vmatmul.bf16.gmra.mxu0 %v195
    %v377 = vpop.f32.mrf.mxu0
    %v378 = vadd.f32 %v313, %v377
    %v379 = vpop.f32.mrf.mxu0
    %v380 = vadd.f32 %v313, %v379
    %381 = vmatmul.bf16.gmra.mxu0 %v196
    %v382 = vpop.f32.mrf.mxu0
    %v383 = vadd.f32 %v313, %v382
    %v384 = vpop.f32.mrf.mxu0
    %v385 = vadd.f32 %v313, %v384
    %386 = vmatmul.bf16.gmra.mxu0 %v197
    %v387 = vpop.f32.mrf.mxu0
    %v388 = vadd.f32 %v313, %v387
    %v389 = vpop.f32.mrf.mxu0
    %v390 = vadd.f32 %v313, %v389
    %391 = vdwg.mxu0
    %v392 = vld [vmem:[#allocation10] sm:$0xf]
    %v393 = vld [vmem:[#allocation10 + $0x4] sm:$0xf]
    %v394 = vld [vmem:[#allocation10 + $0x8] sm:$0xf]
    %v395 = vld [vmem:[#allocation10 + $0xc] sm:$0xf]
    %v396 = vld [vmem:[#allocation10 + $0x10] sm:$0xf]
    %v397 = vld [vmem:[#allocation10 + $0x14] sm:$0xf]
    %v398 = vld [vmem:[#allocation10 + $0x18] sm:$0xf]
    %v399 = vld [vmem:[#allocation10 + $0x1c] sm:$0xf]
    %v400 = vld [vmem:[#allocation10 + $0x20] sm:$0xf]
    %v401 = vld [vmem:[#allocation10 + $0x24] sm:$0xf]
    %v402 = vld [vmem:[#allocation10 + $0x28] sm:$0xf]
    %v403 = vld [vmem:[#allocation10 + $0x2c] sm:$0xf]
    %v404 = vld [vmem:[#allocation10 + $0x30] sm:$0xf]
    %v405 = vld [vmem:[#allocation10 + $0x34] sm:$0xf]
    %v406 = vld [vmem:[#allocation10 + $0x38] sm:$0xf]
    %v407 = vld [vmem:[#allocation10 + $0x3c] sm:$0xf]
    %v408 = vld [vmem:[%s7] sm:$0x1]
    %v410 = vperm.slane %v408, 0
    %v428 = vunpack.c.l.b16 %v392
    %v429 = vunpack.c.l.b16 %v393
    %v430 = vunpack.c.l.b16 %v394
    %v431 = vunpack.c.l.b16 %v395
    %v432 = vunpack.c.l.b16 %v396
    %v433 = vunpack.c.l.b16 %v397
    %v434 = vunpack.c.l.b16 %v398
    %v435 = vunpack.c.l.b16 %v399
    %v436 = vunpack.c.l.b16 %v400
    %v437 = vunpack.c.l.b16 %v401
    %v438 = vunpack.c.l.b16 %v402
    %v439 = vunpack.c.l.b16 %v403
    %v440 = vunpack.c.l.b16 %v404
    %v441 = vunpack.c.l.b16 %v405
    %v442 = vunpack.c.l.b16 %v406
    %v443 = vunpack.c.l.b16 %v407
    %v444 = vpack.c.b16 %v429, %v428
    %v445 = vpack.c.b16 %v431, %v430
    %v446 = vpack.c.b16 %v433, %v432
    %v447 = vpack.c.b16 %v435, %v434
    %v448 = vpack.c.b16 %v437, %v436
    %v449 = vpack.c.b16 %v439, %v438
    %v450 = vpack.c.b16 %v441, %v440
    %v451 = vpack.c.b16 %v443, %v442
    %460 = vmatpush.bf16.msra.mxu0 %v451
    %461 = vmatpush.bf16.msra.mxu0 %v450
    %462 = vmatpush.bf16.msra.mxu0 %v449
    %463 = vmatpush.bf16.msra.mxu0 %v448
    %464 = vmatpush.bf16.msra.mxu0 %v447
    %465 = vmatpush.bf16.msra.mxu0 %v446
    %466 = vmatpush.bf16.msra.mxu0 %v445
    %467 = vmatpush.bf16.msra.mxu0 %v444
    %468 = vmatmul.bf16.gmra.mxu0 %v194
    %v469 = vpop.f32.mrf.mxu0
    %v470 = vadd.f32 %v410, %v469
    %v471 = vpop.f32.mrf.mxu0
    %v472 = vadd.f32 %v410, %v471
    %473 = vmatmul.bf16.gmra.mxu0 %v195
    %v474 = vpop.f32.mrf.mxu0
    %v475 = vadd.f32 %v410, %v474
    %v476 = vpop.f32.mrf.mxu0
    %v477 = vadd.f32 %v410, %v476
    %478 = vmatmul.bf16.gmra.mxu0 %v196
    %v479 = vpop.f32.mrf.mxu0
    %v480 = vadd.f32 %v410, %v479
    %v481 = vpop.f32.mrf.mxu0
    %v482 = vadd.f32 %v410, %v481
    %483 = vmatmul.bf16.gmra.mxu0 %v197
    %v484 = vpop.f32.mrf.mxu0
    %v485 = vadd.f32 %v410, %v484
    %v486 = vpop.f32.mrf.mxu0
    %v487 = vadd.f32 %v410, %v486
    %488 = vdwg.mxu0
    %v489 = vmul.f32 %v276, 0.17677669
    %v490 = vmul.f32 %v278, 0.17677669
    %v491 = vmul.f32 %v281, 0.17677669
    %v492 = vmul.f32 %v283, 0.17677669
    %v493 = vmul.f32 %v286, 0.17677669
    %v494 = vmul.f32 %v288, 0.17677669
    %v495 = vmul.f32 %v291, 0.17677669
    %v496 = vmul.f32 %v293, 0.17677669
    %v497 = vpack.c.bf16 %v489, %v489
    %v498 = vpack.c.bf16 %v490, %v490
    %v499 = vpack.c.bf16 %v491, %v491
    %v500 = vpack.c.bf16 %v492, %v492
    %v501 = vpack.c.bf16 %v493, %v493
    %v502 = vpack.c.bf16 %v494, %v494
    %v503 = vpack.c.bf16 %v495, %v495
    %v504 = vpack.c.bf16 %v496, %v496
    %v505 = vpack.c.bf16 %v373, %v373
    %v506 = vpack.c.bf16 %v375, %v375
    %v507 = vpack.c.bf16 %v378, %v378
    %v508 = vpack.c.bf16 %v380, %v380
    %v509 = vpack.c.bf16 %v383, %v383
    %v510 = vpack.c.bf16 %v385, %v385
    %v511 = vpack.c.bf16 %v388, %v388
    %v512 = vpack.c.bf16 %v390, %v390
    %v513 = vpack.c.bf16 %v470, %v470
    %v514 = vpack.c.bf16 %v472, %v472
    %v515 = vpack.c.bf16 %v475, %v475
    %v516 = vpack.c.bf16 %v477, %v477
    %v517 = vpack.c.bf16 %v480, %v480
    %v518 = vpack.c.bf16 %v482, %v482
    %v519 = vpack.c.bf16 %v485, %v485
    %v520 = vpack.c.bf16 %v487, %v487
    %v521 = vld [vmem:[#allocation5] sm:$0xff]
    %v522 = vld [vmem:[#allocation5 + $0x8] sm:$0xff]
    %v525 = vunpack.c.l.b16 %v497
    %v526 = vunpack.c.l.b16 %v498
    %v527 = vpack.c.b16 %v526, %v525
    %v530 = vunpack.c.l.b16 %v505
    %v531 = vunpack.c.l.b16 %v506
    %v532 = vpack.c.b16 %v531, %v530
    %vm533 = vcmask 261120
    %v535 = vsel %vm533, %v527, 0
    %v538 = vsel %vm533, %v532, 0
    %540 = vmatpush.bf16.xpose.msra.mxu0 0
    %541 = vmatpush.bf16.xpose.msra.mxu0 0
    %542 = vmatpush.bf16.xpose.msra.mxu0 0
    %543 = vmatpush.bf16.xpose.msra.mxu0 0
    %544 = vmatpush.bf16.xpose.msra.mxu0 0
    %545 = vmatpush.bf16.xpose.msra.mxu0 0
    %546 = vmatpush.bf16.xpose.msra.mxu0 0
    %547 = vmatpush.bf16.xpose.msra.mxu0 %v538
    %548 = vmatmul.bf16.gmra.mxu0 %v535
    %v549 = vpop.f32.mrf.mxu0
    %v550 = vadd.f32 %v521, %v549
    %v551 = vpop.f32.mrf.mxu0
    %v552 = vadd.f32 %v522, %v551
    %553 = vdwg.mxu0
    %v556 = vunpack.c.l.b16 %v499
    %v557 = vunpack.c.l.b16 %v500
    %v558 = vpack.c.b16 %v557, %v556
    %v561 = vunpack.c.l.b16 %v507
    %v562 = vunpack.c.l.b16 %v508
    %v563 = vpack.c.b16 %v562, %v561
    %v565 = vsel %vm533, %v558, 0
    %v568 = vsel %vm533, %v563, 0
    %570 = vmatpush.bf16.xpose.msra.mxu0 0
    %571 = vmatpush.bf16.xpose.msra.mxu0 0
    %572 = vmatpush.bf16.xpose.msra.mxu0 0
    %573 = vmatpush.bf16.xpose.msra.mxu0 0
    %574 = vmatpush.bf16.xpose.msra.mxu0 0
    %575 = vmatpush.bf16.xpose.msra.mxu0 0
    %576 = vmatpush.bf16.xpose.msra.mxu0 0
    %577 = vmatpush.bf16.xpose.msra.mxu0 %v568
    %578 = vmatmul.bf16.gmra.mxu0 %v565
    %v579 = vpop.f32.mrf.mxu0
    %v580 = vadd.f32 %v521, %v579
    %v581 = vpop.f32.mrf.mxu0
    %v582 = vadd.f32 %v522, %v581
    %583 = vdwg.mxu0
    %v586 = vunpack.c.l.b16 %v501
    %v587 = vunpack.c.l.b16 %v502
    %v588 = vpack.c.b16 %v587, %v586
    %v591 = vunpack.c.l.b16 %v509
    %v592 = vunpack.c.l.b16 %v510
    %v593 = vpack.c.b16 %v592, %v591
    %v595 = vsel %vm533, %v588, 0
    %v598 = vsel %vm533, %v593, 0
    %600 = vmatpush.bf16.xpose.msra.mxu0 0
    %601 = vmatpush.bf16.xpose.msra.mxu0 0
    %602 = vmatpush.bf16.xpose.msra.mxu0 0
    %603 = vmatpush.bf16.xpose.msra.mxu0 0
    %604 = vmatpush.bf16.xpose.msra.mxu0 0
    %605 = vmatpush.bf16.xpose.msra.mxu0 0
    %606 = vmatpush.bf16.xpose.msra.mxu0 0
    %607 = vmatpush.bf16.xpose.msra.mxu0 %v598
    %608 = vmatmul.bf16.gmra.mxu0 %v595
    %v609 = vpop.f32.mrf.mxu0
    %v610 = vadd.f32 %v521, %v609
    %v611 = vpop.f32.mrf.mxu0
    %v612 = vadd.f32 %v522, %v611
    %613 = vdwg.mxu0
    %v616 = vunpack.c.l.b16 %v503
    %v617 = vunpack.c.l.b16 %v504
    %v618 = vpack.c.b16 %v617, %v616
    %v621 = vunpack.c.l.b16 %v511
    %v622 = vunpack.c.l.b16 %v512
    %v623 = vpack.c.b16 %v622, %v621
    %v625 = vsel %vm533, %v618, 0
    %v628 = vsel %vm533, %v623, 0
    %630 = vmatpush.bf16.xpose.msra.mxu0 0
    %631 = vmatpush.bf16.xpose.msra.mxu0 0
    %632 = vmatpush.bf16.xpose.msra.mxu0 0
    %633 = vmatpush.bf16.xpose.msra.mxu0 0
    %634 = vmatpush.bf16.xpose.msra.mxu0 0
    %635 = vmatpush.bf16.xpose.msra.mxu0 0
    %636 = vmatpush.bf16.xpose.msra.mxu0 0
    %637 = vmatpush.bf16.xpose.msra.mxu0 %v628
    %638 = vmatmul.bf16.gmra.mxu0 %v625
    %v639 = vpop.f32.mrf.mxu0
    %v640 = vadd.f32 %v521, %v639
    %v641 = vpop.f32.mrf.mxu0
    %v642 = vadd.f32 %v522, %v641
    %643 = vdwg.mxu0
    %vm644 = vcmask 130048
    %v645 = vsel %vm644, %v550, -inf
    %646 = vmax.xlane.f32.xlu0 %v645
    %v647 = vpop.xlane.xlu0 %646
    %v648 = vsel %vm644, %v552, -inf
    %649 = vmax.xlane.f32.xlu0 %v648
    %v650 = vpop.xlane.xlu0 %649
    %v651 = vsel %vm644, %v580, -inf
    %652 = vmax.xlane.f32.xlu0 %v651
    %v653 = vpop.xlane.xlu0 %652
    %v654 = vsel %vm644, %v582, -inf
    %655 = vmax.xlane.f32.xlu0 %v654
    %v656 = vpop.xlane.xlu0 %655
    %v657 = vsel %vm644, %v610, -inf
    %658 = vmax.xlane.f32.xlu0 %v657
    %v659 = vpop.xlane.xlu0 %658
    %v660 = vsel %vm644, %v612, -inf
    %661 = vmax.xlane.f32.xlu0 %v660
    %v662 = vpop.xlane.xlu0 %661
    %v663 = vsel %vm644, %v640, -inf
    %664 = vmax.xlane.f32.xlu0 %v663
    %v665 = vpop.xlane.xlu0 %664
    %v666 = vsel %vm644, %v642, -inf
    %667 = vmax.xlane.f32.xlu0 %v666
    %v668 = vpop.xlane.xlu0 %667
    %v669 = vsub.f32 %v550, %v647
    %v670 = vsub.f32 %v552, %v650
    %v671 = vsub.f32 %v580, %v653
    %v672 = vsub.f32 %v582, %v656
    %v673 = vsub.f32 %v610, %v659
    %v674 = vsub.f32 %v612, %v662
    %v675 = vsub.f32 %v640, %v665
    %v676 = vsub.f32 %v642, %v668
    %v677 = vmul.f32 %v669, 1.442695
    %v678 = vpow.pop %v677
    %v679 = vmul.f32 %v670, 1.442695
    %v680 = vpow.pop %v679
    %v681 = vmul.f32 %v671, 1.442695
    %v682 = vpow.pop %v681
    %v683 = vmul.f32 %v672, 1.442695
    %v684 = vpow.pop %v683
    %v685 = vmul.f32 %v673, 1.442695
    %v686 = vpow.pop %v685
    %v687 = vmul.f32 %v674, 1.442695
    %v688 = vpow.pop %v687
    %v689 = vmul.f32 %v675, 1.442695
    %v690 = vpow.pop %v689
    %v691 = vmul.f32 %v676, 1.442695
    %v692 = vpow.pop %v691
    %v693 = vsel %vm644, %v678, 0.0
    %694 = vadd.xlane.f32.xlu0 %v693
    %v695 = vpop.xlane.xlu0 %694
    %v696 = vsel %vm644, %v680, 0.0
    %697 = vadd.xlane.f32.xlu0 %v696
    %v698 = vpop.xlane.xlu0 %697
    %v699 = vsel %vm644, %v682, 0.0
    %700 = vadd.xlane.f32.xlu0 %v699
    %v701 = vpop.xlane.xlu0 %700
    %v702 = vsel %vm644, %v684, 0.0
    %703 = vadd.xlane.f32.xlu0 %v702
    %v704 = vpop.xlane.xlu0 %703
    %v705 = vsel %vm644, %v686, 0.0
    %706 = vadd.xlane.f32.xlu0 %v705
    %v707 = vpop.xlane.xlu0 %706
    %v708 = vsel %vm644, %v688, 0.0
    %709 = vadd.xlane.f32.xlu0 %v708
    %v710 = vpop.xlane.xlu0 %709
    %v711 = vsel %vm644, %v690, 0.0
    %712 = vadd.xlane.f32.xlu0 %v711
    %v713 = vpop.xlane.xlu0 %712
    %v714 = vsel %vm644, %v692, 0.0
    %715 = vadd.xlane.f32.xlu0 %v714
    %v716 = vpop.xlane.xlu0 %715
    %v717 = vrcp.pop %v695
    %v718 = vrcp.pop %v698
    %v719 = vrcp.pop %v701
    %v720 = vrcp.pop %v704
    %v721 = vrcp.pop %v707
    %v722 = vrcp.pop %v710
    %v723 = vrcp.pop %v713
    %v724 = vrcp.pop %v716
    %v725 = vmul.f32 %v678, %v717
    %v726 = vmul.f32 %v680, %v718
    %v727 = vmul.f32 %v682, %v719
    %v728 = vmul.f32 %v684, %v720
    %v729 = vmul.f32 %v686, %v721
    %v730 = vmul.f32 %v688, %v722
    %v731 = vmul.f32 %v690, %v723
    %v732 = vmul.f32 %v692, %v724
    %v733 = vpack.c.bf16 %v725, %v725
    %v734 = vpack.c.bf16 %v726, %v726
    %v735 = vpack.c.bf16 %v727, %v727
    %v736 = vpack.c.bf16 %v728, %v728
    %v737 = vpack.c.bf16 %v729, %v729
    %v738 = vpack.c.bf16 %v730, %v730
    %v739 = vpack.c.bf16 %v731, %v731
    %v740 = vpack.c.bf16 %v732, %v732
    %v743 = vunpack.c.l.b16 %v733
    %v744 = vunpack.c.l.b16 %v734
    %v745 = vpack.c.b16 %v744, %v743
    %v748 = vunpack.c.l.b16 %v513
    %v749 = vunpack.c.l.b16 %v514
    %v750 = vpack.c.b16 %v749, %v748
    %v753 = vsel %vm644, %v745, 0
    %755 = vmatpush.bf16.msra.mxu0 0
    %756 = vmatpush.bf16.msra.mxu0 0
    %757 = vmatpush.bf16.msra.mxu0 0
    %758 = vmatpush.bf16.msra.mxu0 0
    %759 = vmatpush.bf16.msra.mxu0 0
    %760 = vmatpush.bf16.msra.mxu0 0
    %761 = vmatpush.bf16.msra.mxu0 0
    %762 = vmatpush.bf16.msra.mxu0 %v750
    %763 = vmatmul.bf16.gmra.mxu0 %v753
    %v764 = vpop.f32.mrf.mxu0
    %v765 = vadd.f32 0.0, %v764
    %v766 = vpop.f32.mrf.mxu0
    %v767 = vadd.f32 0.0, %v766
    %768 = vdwg.mxu0
    %v771 = vunpack.c.l.b16 %v735
    %v772 = vunpack.c.l.b16 %v736
    %v773 = vpack.c.b16 %v772, %v771
    %v776 = vunpack.c.l.b16 %v515
    %v777 = vunpack.c.l.b16 %v516
    %v778 = vpack.c.b16 %v777, %v776
    %v781 = vsel %vm644, %v773, 0
    %783 = vmatpush.bf16.msra.mxu0 0
    %784 = vmatpush.bf16.msra.mxu0 0
    %785 = vmatpush.bf16.msra.mxu0 0
    %786 = vmatpush.bf16.msra.mxu0 0
    %787 = vmatpush.bf16.msra.mxu0 0
    %788 = vmatpush.bf16.msra.mxu0 0
    %789 = vmatpush.bf16.msra.mxu0 0
    %790 = vmatpush.bf16.msra.mxu0 %v778
    %791 = vmatmul.bf16.gmra.mxu0 %v781
    %v792 = vpop.f32.mrf.mxu0
    %v793 = vadd.f32 0.0, %v792
    %v794 = vpop.f32.mrf.mxu0
    %v795 = vadd.f32 0.0, %v794
    %796 = vdwg.mxu0
    %v799 = vunpack.c.l.b16 %v737
    %v800 = vunpack.c.l.b16 %v738
    %v801 = vpack.c.b16 %v800, %v799
    %v804 = vunpack.c.l.b16 %v517
    %v805 = vunpack.c.l.b16 %v518
    %v806 = vpack.c.b16 %v805, %v804
    %v809 = vsel %vm644, %v801, 0
    %811 = vmatpush.bf16.msra.mxu0 0
    %812 = vmatpush.bf16.msra.mxu0 0
    %813 = vmatpush.bf16.msra.mxu0 0
    %814 = vmatpush.bf16.msra.mxu0 0
    %815 = vmatpush.bf16.msra.mxu0 0
    %816 = vmatpush.bf16.msra.mxu0 0
    %817 = vmatpush.bf16.msra.mxu0 0
    %818 = vmatpush.bf16.msra.mxu0 %v806
    %819 = vmatmul.bf16.gmra.mxu0 %v809
    %v820 = vpop.f32.mrf.mxu0
    %v821 = vadd.f32 0.0, %v820
    %v822 = vpop.f32.mrf.mxu0
    %v823 = vadd.f32 0.0, %v822
    %824 = vdwg.mxu0
    %v827 = vunpack.c.l.b16 %v739
    %v828 = vunpack.c.l.b16 %v740
    %v829 = vpack.c.b16 %v828, %v827
    %v832 = vunpack.c.l.b16 %v519
    %v833 = vunpack.c.l.b16 %v520
    %v834 = vpack.c.b16 %v833, %v832
    %v837 = vsel %vm644, %v829, 0
    %839 = vmatpush.bf16.msra.mxu0 0
    %840 = vmatpush.bf16.msra.mxu0 0
    %841 = vmatpush.bf16.msra.mxu0 0
    %842 = vmatpush.bf16.msra.mxu0 0
    %843 = vmatpush.bf16.msra.mxu0 0
    %844 = vmatpush.bf16.msra.mxu0 0
    %845 = vmatpush.bf16.msra.mxu0 0
    %846 = vmatpush.bf16.msra.mxu0 %v834
    %847 = vmatmul.bf16.gmra.mxu0 %v837
    %v848 = vpop.f32.mrf.mxu0
    %v849 = vadd.f32 0.0, %v848
    %v850 = vpop.f32.mrf.mxu0
    %v851 = vadd.f32 0.0, %v850
    %852 = vdwg.mxu0
    %v853 = vpack.c.bf16 %v767, %v765
    %v854 = vpack.c.bf16 %v795, %v793
    %v855 = vpack.c.bf16 %v823, %v821
    %v856 = vpack.c.bf16 %v851, %v849
    %v857 = vld [vmem:[#allocation11] sm:$0xf]
    %v858 = vld [vmem:[#allocation11 + $0x4] sm:$0xf]
    %v859 = vld [vmem:[#allocation11 + $0x8] sm:$0xf]
    %v860 = vld [vmem:[#allocation11 + $0xc] sm:$0xf]
    %861 = vrot.lane.b32.xlu0 %v527, 96
    %v862 = vpop.permute.xlu0 %861
    %863 = vrot.lane.b32.xlu0 %v532, 96
    %v864 = vpop.permute.xlu0 %863
    %v866 = vsel %vm533, %v862, 0
    %v869 = vsel %vm533, %v864, 0
    %871 = vmatpush.bf16.xpose.msra.mxu0 0
    %872 = vmatpush.bf16.xpose.msra.mxu0 0
    %873 = vmatpush.bf16.xpose.msra.mxu0 0
    %874 = vmatpush.bf16.xpose.msra.mxu0 0
    %875 = vmatpush.bf16.xpose.msra.mxu0 0
    %876 = vmatpush.bf16.xpose.msra.mxu0 0
    %877 = vmatpush.bf16.xpose.msra.mxu0 0
    %878 = vmatpush.bf16.xpose.msra.mxu0 %v869
    %879 = vmatmul.bf16.gmra.mxu0 %v866
    %v880 = vpop.f32.mrf.mxu0
    %v881 = vadd.f32 %v521, %v880
    %v882 = vpop.f32.mrf.mxu0
    %v883 = vadd.f32 %v522, %v882
    %884 = vdwg.mxu0
    %885 = vrot.lane.b32.xlu0 %v558, 96
    %v886 = vpop.permute.xlu0 %885
    %887 = vrot.lane.b32.xlu0 %v563, 96
    %v888 = vpop.permute.xlu0 %887
    %v890 = vsel %vm533, %v886, 0
    %v893 = vsel %vm533, %v888, 0
    %895 = vmatpush.bf16.xpose.msra.mxu0 0
    %896 = vmatpush.bf16.xpose.msra.mxu0 0
    %897 = vmatpush.bf16.xpose.msra.mxu0 0
    %898 = vmatpush.bf16.xpose.msra.mxu0 0
    %899 = vmatpush.bf16.xpose.msra.mxu0 0
    %900 = vmatpush.bf16.xpose.msra.mxu0 0
    %901 = vmatpush.bf16.xpose.msra.mxu0 0
    %902 = vmatpush.bf16.xpose.msra.mxu0 %v893
    %903 = vmatmul.bf16.gmra.mxu0 %v890
    %v904 = vpop.f32.mrf.mxu0
    %v905 = vadd.f32 %v521, %v904
    %v906 = vpop.f32.mrf.mxu0
    %v907 = vadd.f32 %v522, %v906
    %908 = vdwg.mxu0
    %909 = vrot.lane.b32.xlu0 %v588, 96
    %v910 = vpop.permute.xlu0 %909
    %911 = vrot.lane.b32.xlu0 %v593, 96
    %v912 = vpop.permute.xlu0 %911
    %v914 = vsel %vm533, %v910, 0
    %v917 = vsel %vm533, %v912, 0
    %919 = vmatpush.bf16.xpose.msra.mxu0 0
    %920 = vmatpush.bf16.xpose.msra.mxu0 0
    %921 = vmatpush.bf16.xpose.msra.mxu0 0
    %922 = vmatpush.bf16.xpose.msra.mxu0 0
    %923 = vmatpush.bf16.xpose.msra.mxu0 0
    %924 = vmatpush.bf16.xpose.msra.mxu0 0
    %925 = vmatpush.bf16.xpose.msra.mxu0 0
    %926 = vmatpush.bf16.xpose.msra.mxu0 %v917
    %927 = vmatmul.bf16.gmra.mxu0 %v914
    %v928 = vpop.f32.mrf.mxu0
    %v929 = vadd.f32 %v521, %v928
    %v930 = vpop.f32.mrf.mxu0
    %v931 = vadd.f32 %v522, %v930
    %932 = vdwg.mxu0
    %933 = vrot.lane.b32.xlu0 %v618, 96
    %v934 = vpop.permute.xlu0 %933
    %935 = vrot.lane.b32.xlu0 %v623, 96
    %v936 = vpop.permute.xlu0 %935
    %v938 = vsel %vm533, %v934, 0
    %v941 = vsel %vm533, %v936, 0
    %943 = vmatpush.bf16.xpose.msra.mxu0 0
    %944 = vmatpush.bf16.xpose.msra.mxu0 0
    %945 = vmatpush.bf16.xpose.msra.mxu0 0
    %946 = vmatpush.bf16.xpose.msra.mxu0 0
    %947 = vmatpush.bf16.xpose.msra.mxu0 0
    %948 = vmatpush.bf16.xpose.msra.mxu0 0
    %949 = vmatpush.bf16.xpose.msra.mxu0 0
    %950 = vmatpush.bf16.xpose.msra.mxu0 %v941
    %951 = vmatmul.bf16.gmra.mxu0 %v938
    %v952 = vpop.f32.mrf.mxu0
    %v953 = vadd.f32 %v521, %v952
    %v954 = vpop.f32.mrf.mxu0
    %v955 = vadd.f32 %v522, %v954
    %956 = vdwg.mxu0
    %v957 = vsel %vm644, %v881, -inf
    %958 = vmax.xlane.f32.xlu0 %v957
    %v959 = vpop.xlane.xlu0 %958
    %v960 = vsel %vm644, %v883, -inf
    %961 = vmax.xlane.f32.xlu0 %v960
    %v962 = vpop.xlane.xlu0 %961
    %v963 = vsel %vm644, %v905, -inf
    %964 = vmax.xlane.f32.xlu0 %v963
    %v965 = vpop.xlane.xlu0 %964
    %v966 = vsel %vm644, %v907, -inf
    %967 = vmax.xlane.f32.xlu0 %v966
    %v968 = vpop.xlane.xlu0 %967
    %v969 = vsel %vm644, %v929, -inf
    %970 = vmax.xlane.f32.xlu0 %v969
    %v971 = vpop.xlane.xlu0 %970
    %v972 = vsel %vm644, %v931, -inf
    %973 = vmax.xlane.f32.xlu0 %v972
    %v974 = vpop.xlane.xlu0 %973
    %v975 = vsel %vm644, %v953, -inf
    %976 = vmax.xlane.f32.xlu0 %v975
    %v977 = vpop.xlane.xlu0 %976
    %v978 = vsel %vm644, %v955, -inf
    %979 = vmax.xlane.f32.xlu0 %v978
    %v980 = vpop.xlane.xlu0 %979
    %v981 = vsub.f32 %v881, %v959
    %v982 = vsub.f32 %v883, %v962
    %v983 = vsub.f32 %v905, %v965
    %v984 = vsub.f32 %v907, %v968
    %v985 = vsub.f32 %v929, %v971
    %v986 = vsub.f32 %v931, %v974
    %v987 = vsub.f32 %v953, %v977
    %v988 = vsub.f32 %v955, %v980
    %v989 = vmul.f32 %v981, 1.442695
    %v990 = vpow.pop %v989
    %v991 = vmul.f32 %v982, 1.442695
    %v992 = vpow.pop %v991
    %v993 = vmul.f32 %v983, 1.442695
    %v994 = vpow.pop %v993
    %v995 = vmul.f32 %v984, 1.442695
    %v996 = vpow.pop %v995
    %v997 = vmul.f32 %v985, 1.442695
    %v998 = vpow.pop %v997
    %v999 = vmul.f32 %v986, 1.442695
    %v1000 = vpow.pop %v999
    %v1001 = vmul.f32 %v987, 1.442695
    %v1002 = vpow.pop %v1001
    %v1003 = vmul.f32 %v988, 1.442695
    %v1004 = vpow.pop %v1003
    %v1005 = vsel %vm644, %v990, 0.0
    %1006 = vadd.xlane.f32.xlu0 %v1005
    %v1007 = vpop.xlane.xlu0 %1006
    %v1008 = vsel %vm644, %v992, 0.0
    %1009 = vadd.xlane.f32.xlu0 %v1008
    %v1010 = vpop.xlane.xlu0 %1009
    %v1011 = vsel %vm644, %v994, 0.0
    %1012 = vadd.xlane.f32.xlu0 %v1011
    %v1013 = vpop.xlane.xlu0 %1012
    %v1014 = vsel %vm644, %v996, 0.0
    %1015 = vadd.xlane.f32.xlu0 %v1014
    %v1016 = vpop.xlane.xlu0 %1015
    %v1017 = vsel %vm644, %v998, 0.0
    %1018 = vadd.xlane.f32.xlu0 %v1017
    %v1019 = vpop.xlane.xlu0 %1018
    %v1020 = vsel %vm644, %v1000, 0.0
    %1021 = vadd.xlane.f32.xlu0 %v1020
    %v1022 = vpop.xlane.xlu0 %1021
    %v1023 = vsel %vm644, %v1002, 0.0
    %1024 = vadd.xlane.f32.xlu0 %v1023
    %v1025 = vpop.xlane.xlu0 %1024
    %v1026 = vsel %vm644, %v1004, 0.0
    %1027 = vadd.xlane.f32.xlu0 %v1026
    %v1028 = vpop.xlane.xlu0 %1027
    %v1029 = vrcp.pop %v1007
    %v1030 = vrcp.pop %v1010
    %v1031 = vrcp.pop %v1013
    %v1032 = vrcp.pop %v1016
    %v1033 = vrcp.pop %v1019
    %v1034 = vrcp.pop %v1022
    %v1035 = vrcp.pop %v1025
    %v1036 = vrcp.pop %v1028
    %v1037 = vmul.f32 %v990, %v1029
    %v1038 = vmul.f32 %v992, %v1030
    %v1039 = vmul.f32 %v994, %v1031
    %v1040 = vmul.f32 %v996, %v1032
    %v1041 = vmul.f32 %v998, %v1033
    %v1042 = vmul.f32 %v1000, %v1034
    %v1043 = vmul.f32 %v1002, %v1035
    %v1044 = vmul.f32 %v1004, %v1036
    %v1045 = vpack.c.bf16 %v1037, %v1037
    %v1046 = vpack.c.bf16 %v1038, %v1038
    %v1047 = vpack.c.bf16 %v1039, %v1039
    %v1048 = vpack.c.bf16 %v1040, %v1040
    %v1049 = vpack.c.bf16 %v1041, %v1041
    %v1050 = vpack.c.bf16 %v1042, %v1042
    %v1051 = vpack.c.bf16 %v1043, %v1043
    %v1052 = vpack.c.bf16 %v1044, %v1044
    %v1055 = vunpack.c.l.b16 %v1045
    %v1056 = vunpack.c.l.b16 %v1046
    %v1057 = vpack.c.b16 %v1056, %v1055
    %1058 = vrot.lane.b32.xlu0 %v750, 96
    %v1059 = vpop.permute.xlu0 %1058
    %v1062 = vsel %vm644, %v1057, 0
    %1064 = vmatpush.bf16.msra.mxu0 0
    %1065 = vmatpush.bf16.msra.mxu0 0
    %1066 = vmatpush.bf16.msra.mxu0 0
    %1067 = vmatpush.bf16.msra.mxu0 0
    %1068 = vmatpush.bf16.msra.mxu0 0
    %1069 = vmatpush.bf16.msra.mxu0 0
    %1070 = vmatpush.bf16.msra.mxu0 0
    %1071 = vmatpush.bf16.msra.mxu0 %v1059
    %1072 = vmatmul.bf16.gmra.mxu0 %v1062
    %v1073 = vpop.f32.mrf.mxu0
    %v1074 = vadd.f32 0.0, %v1073
    %v1075 = vpop.f32.mrf.mxu0
    %v1076 = vadd.f32 0.0, %v1075
    %1077 = vdwg.mxu0
    %v1080 = vunpack.c.l.b16 %v1047
    %v1081 = vunpack.c.l.b16 %v1048
    %v1082 = vpack.c.b16 %v1081, %v1080
    %1083 = vrot.lane.b32.xlu0 %v778, 96
    %v1084 = vpop.permute.xlu0 %1083
    %v1087 = vsel %vm644, %v1082, 0
    %1089 = vmatpush.bf16.msra.mxu0 0
    %1090 = vmatpush.bf16.msra.mxu0 0
    %1091 = vmatpush.bf16.msra.mxu0 0
    %1092 = vmatpush.bf16.msra.mxu0 0
    %1093 = vmatpush.bf16.msra.mxu0 0
    %1094 = vmatpush.bf16.msra.mxu0 0
    %1095 = vmatpush.bf16.msra.mxu0 0
    %1096 = vmatpush.bf16.msra.mxu0 %v1084
    %1097 = vmatmul.bf16.gmra.mxu0 %v1087
    %v1098 = vpop.f32.mrf.mxu0
    %v1099 = vadd.f32 0.0, %v1098
    %v1100 = vpop.f32.mrf.mxu0
    %v1101 = vadd.f32 0.0, %v1100
    %1102 = vdwg.mxu0
    %v1105 = vunpack.c.l.b16 %v1049
    %v1106 = vunpack.c.l.b16 %v1050
    %v1107 = vpack.c.b16 %v1106, %v1105
    %1108 = vrot.lane.b32.xlu0 %v806, 96
    %v1109 = vpop.permute.xlu0 %1108
    %v1112 = vsel %vm644, %v1107, 0
    %1114 = vmatpush.bf16.msra.mxu0 0
    %1115 = vmatpush.bf16.msra.mxu0 0
    %1116 = vmatpush.bf16.msra.mxu0 0
    %1117 = vmatpush.bf16.msra.mxu0 0
    %1118 = vmatpush.bf16.msra.mxu0 0
    %1119 = vmatpush.bf16.msra.mxu0 0
    %1120 = vmatpush.bf16.msra.mxu0 0
    %1121 = vmatpush.bf16.msra.mxu0 %v1109
    %1122 = vmatmul.bf16.gmra.mxu0 %v1112
    %v1123 = vpop.f32.mrf.mxu0
    %v1124 = vadd.f32 0.0, %v1123
    %v1125 = vpop.f32.mrf.mxu0
    %v1126 = vadd.f32 0.0, %v1125
    %1127 = vdwg.mxu0
    %v1130 = vunpack.c.l.b16 %v1051
    %v1131 = vunpack.c.l.b16 %v1052
    %v1132 = vpack.c.b16 %v1131, %v1130
    %1133 = vrot.lane.b32.xlu0 %v834, 96
    %v1134 = vpop.permute.xlu0 %1133
    %v1137 = vsel %vm644, %v1132, 0
    %1139 = vmatpush.bf16.msra.mxu0 0
    %1140 = vmatpush.bf16.msra.mxu0 0
    %1141 = vmatpush.bf16.msra.mxu0 0
    %1142 = vmatpush.bf16.msra.mxu0 0
    %1143 = vmatpush.bf16.msra.mxu0 0
    %1144 = vmatpush.bf16.msra.mxu0 0
    %1145 = vmatpush.bf16.msra.mxu0 0
    %1146 = vmatpush.bf16.msra.mxu0 %v1134
    %1147 = vmatmul.bf16.gmra.mxu0 %v1137
    %v1148 = vpop.f32.mrf.mxu0
    %v1149 = vadd.f32 0.0, %v1148
    %v1150 = vpop.f32.mrf.mxu0
    %v1151 = vadd.f32 0.0, %v1150
    %1152 = vdwg.mxu0
    %v1153 = vpack.c.bf16 %v1076, %v1074
    %v1154 = vpack.c.bf16 %v1101, %v1099
    %v1155 = vpack.c.bf16 %v1126, %v1124
    %v1156 = vpack.c.bf16 %v1151, %v1149
    %s1157 = scalar_lea.vmem [#allocation11], 16
    %v1158 = vld [vmem:[%s1157] sm:$0xf]
    %v1159 = vld [vmem:[%s1157 + $0x4] sm:$0xf]
    %v1160 = vld [vmem:[%s1157 + $0x8] sm:$0xf]
    %v1161 = vld [vmem:[%s1157 + $0xc] sm:$0xf]
    %v1166 = vunpack.c.l.b16 %v1158
    %v1167 = vunpack.c.l.b16 %v1159
    %v1168 = vunpack.c.l.b16 %v1160
    %v1169 = vunpack.c.l.b16 %v1161
    %v1170 = vpack.c.b16 %v1167, %v1166
    %v1171 = vpack.c.b16 %v1169, %v1168
    %v1175 = vsel %vm533, %v1153, 0
    %v1178 = vsel %vm533, %v1154, 0
    %v1181 = vsel %vm533, %v1155, 0
    %v1184 = vsel %vm533, %v1156, 0
    %1186 = vmatpush.bf16.msra.mxu0 0
    %1187 = vmatpush.bf16.msra.mxu0 0
    %1188 = vmatpush.bf16.msra.mxu0 0
    %1189 = vmatpush.bf16.msra.mxu0 0
    %1190 = vmatpush.bf16.msra.mxu0 0
    %1191 = vmatpush.bf16.msra.mxu0 0
    %1192 = vmatpush.bf16.msra.mxu0 %v1171
    %1193 = vmatpush.bf16.msra.mxu0 %v1170
    %1194 = vmatmul.bf16.gmra.mxu0 %v1175
    %v1195 = vpop.f32.mrf.mxu0
    %v1196 = vadd.f32 0.0, %v1195
    %v1197 = vpop.f32.mrf.mxu0
    %v1198 = vadd.f32 0.0, %v1197
    %1199 = vmatmul.bf16.gmra.mxu0 %v1178
    %v1200 = vpop.f32.mrf.mxu0
    %v1201 = vadd.f32 0.0, %v1200
    %v1202 = vpop.f32.mrf.mxu0
    %v1203 = vadd.f32 0.0, %v1202
    %1204 = vmatmul.bf16.gmra.mxu0 %v1181
    %v1205 = vpop.f32.mrf.mxu0
    %v1206 = vadd.f32 0.0, %v1205
    %v1207 = vpop.f32.mrf.mxu0
    %v1208 = vadd.f32 0.0, %v1207
    %1209 = vmatmul.bf16.gmra.mxu0 %v1184
    %v1210 = vpop.f32.mrf.mxu0
    %v1211 = vadd.f32 0.0, %v1210
    %v1212 = vpop.f32.mrf.mxu0
    %v1213 = vadd.f32 0.0, %v1212
    %1214 = vdwg.mxu0
    %v1219 = vunpack.c.l.b16 %v857
    %v1220 = vunpack.c.l.b16 %v858
    %v1221 = vunpack.c.l.b16 %v859
    %v1222 = vunpack.c.l.b16 %v860
    %v1223 = vpack.c.b16 %v1220, %v1219
    %v1224 = vpack.c.b16 %v1222, %v1221
    %v1228 = vsel %vm533, %v853, 0
    %v1231 = vsel %vm533, %v854, 0
    %v1234 = vsel %vm533, %v855, 0
    %v1237 = vsel %vm533, %v856, 0
    %1239 = vmatpush.bf16.msra.mxu0 0
    %1240 = vmatpush.bf16.msra.mxu0 0
    %1241 = vmatpush.bf16.msra.mxu0 0
    %1242 = vmatpush.bf16.msra.mxu0 0
    %1243 = vmatpush.bf16.msra.mxu0 0
    %1244 = vmatpush.bf16.msra.mxu0 0
    %1245 = vmatpush.bf16.msra.mxu0 %v1224
    %1246 = vmatpush.bf16.msra.mxu0 %v1223
    %1247 = vmatmul.bf16.gmra.mxu0 %v1228
    %v1248 = vpop.f32.mrf.mxu0
    %v1249 = vadd.f32 %v1196, %v1248
    %v1250 = vpop.f32.mrf.mxu0
    %v1251 = vadd.f32 %v1198, %v1250
    %1252 = vmatmul.bf16.gmra.mxu0 %v1231
    %v1253 = vpop.f32.mrf.mxu0
    %v1254 = vadd.f32 %v1201, %v1253
    %v1255 = vpop.f32.mrf.mxu0
    %v1256 = vadd.f32 %v1203, %v1255
    %1257 = vmatmul.bf16.gmra.mxu0 %v1234
    %v1258 = vpop.f32.mrf.mxu0
    %v1259 = vadd.f32 %v1206, %v1258
    %v1260 = vpop.f32.mrf.mxu0
    %v1261 = vadd.f32 %v1208, %v1260
    %1262 = vmatmul.bf16.gmra.mxu0 %v1237
    %v1263 = vpop.f32.mrf.mxu0
    %v1264 = vadd.f32 %v1211, %v1263
    %v1265 = vpop.f32.mrf.mxu0
    %v1266 = vadd.f32 %v1213, %v1265
    %1267 = vdwg.mxu0
    %1268 = vrot.lane.b32.xlu0 %v527, 64
    %v1269 = vpop.permute.xlu0 %1268
    %1270 = vrot.lane.b32.xlu0 %v532, 64
    %v1271 = vpop.permute.xlu0 %1270
    %v1273 = vsel %vm533, %v1269, 0
    %v1276 = vsel %vm533, %v1271, 0
    %1278 = vmatpush.bf16.xpose.msra.mxu0 0
    %1279 = vmatpush.bf16.xpose.msra.mxu0 0
    %1280 = vmatpush.bf16.xpose.msra.mxu0 0
    %1281 = vmatpush.bf16.xpose.msra.mxu0 0
    %1282 = vmatpush.bf16.xpose.msra.mxu0 0
    %1283 = vmatpush.bf16.xpose.msra.mxu0 0
    %1284 = vmatpush.bf16.xpose.msra.mxu0 0
    %1285 = vmatpush.bf16.xpose.msra.mxu0 %v1276
    %1286 = vmatmul.bf16.gmra.mxu0 %v1273
    %v1287 = vpop.f32.mrf.mxu0
    %v1288 = vadd.f32 %v521, %v1287
    %v1289 = vpop.f32.mrf.mxu0
    %v1290 = vadd.f32 %v522, %v1289
    %1291 = vdwg.mxu0
    %1292 = vrot.lane.b32.xlu0 %v558, 64
    %v1293 = vpop.permute.xlu0 %1292
    %1294 = vrot.lane.b32.xlu0 %v563, 64
    %v1295 = vpop.permute.xlu0 %1294
    %v1297 = vsel %vm533, %v1293, 0
    %v1300 = vsel %vm533, %v1295, 0
    %1302 = vmatpush.bf16.xpose.msra.mxu0 0
    %1303 = vmatpush.bf16.xpose.msra.mxu0 0
    %1304 = vmatpush.bf16.xpose.msra.mxu0 0
    %1305 = vmatpush.bf16.xpose.msra.mxu0 0
    %1306 = vmatpush.bf16.xpose.msra.mxu0 0
    %1307 = vmatpush.bf16.xpose.msra.mxu0 0
    %1308 = vmatpush.bf16.xpose.msra.mxu0 0
    %1309 = vmatpush.bf16.xpose.msra.mxu0 %v1300
    %1310 = vmatmul.bf16.gmra.mxu0 %v1297
    %v1311 = vpop.f32.mrf.mxu0
    %v1312 = vadd.f32 %v521, %v1311
    %v1313 = vpop.f32.mrf.mxu0
    %v1314 = vadd.f32 %v522, %v1313
    %1315 = vdwg.mxu0
    %1316 = vrot.lane.b32.xlu0 %v588, 64
    %v1317 = vpop.permute.xlu0 %1316
    %1318 = vrot.lane.b32.xlu0 %v593, 64
    %v1319 = vpop.permute.xlu0 %1318
    %v1321 = vsel %vm533, %v1317, 0
    %v1324 = vsel %vm533, %v1319, 0
    %1326 = vmatpush.bf16.xpose.msra.mxu0 0
    %1327 = vmatpush.bf16.xpose.msra.mxu0 0
    %1328 = vmatpush.bf16.xpose.msra.mxu0 0
    %1329 = vmatpush.bf16.xpose.msra.mxu0 0
    %1330 = vmatpush.bf16.xpose.msra.mxu0 0
    %1331 = vmatpush.bf16.xpose.msra.mxu0 0
    %1332 = vmatpush.bf16.xpose.msra.mxu0 0
    %1333 = vmatpush.bf16.xpose.msra.mxu0 %v1324
    %1334 = vmatmul.bf16.gmra.mxu0 %v1321
    %v1335 = vpop.f32.mrf.mxu0
    %v1336 = vadd.f32 %v521, %v1335
    %v1337 = vpop.f32.mrf.mxu0
    %v1338 = vadd.f32 %v522, %v1337
    %1339 = vdwg.mxu0
    %1340 = vrot.lane.b32.xlu0 %v618, 64
    %v1341 = vpop.permute.xlu0 %1340
    %1342 = vrot.lane.b32.xlu0 %v623, 64
    %v1343 = vpop.permute.xlu0 %1342
    %v1345 = vsel %vm533, %v1341, 0
    %v1348 = vsel %vm533, %v1343, 0
    %1350 = vmatpush.bf16.xpose.msra.mxu0 0
    %1351 = vmatpush.bf16.xpose.msra.mxu0 0
    %1352 = vmatpush.bf16.xpose.msra.mxu0 0
    %1353 = vmatpush.bf16.xpose.msra.mxu0 0
    %1354 = vmatpush.bf16.xpose.msra.mxu0 0
    %1355 = vmatpush.bf16.xpose.msra.mxu0 0
    %1356 = vmatpush.bf16.xpose.msra.mxu0 0
    %1357 = vmatpush.bf16.xpose.msra.mxu0 %v1348
    %1358 = vmatmul.bf16.gmra.mxu0 %v1345
    %v1359 = vpop.f32.mrf.mxu0
    %v1360 = vadd.f32 %v521, %v1359
    %v1361 = vpop.f32.mrf.mxu0
    %v1362 = vadd.f32 %v522, %v1361
    %1363 = vdwg.mxu0
    %v1364 = vsel %vm644, %v1288, -inf
    %1365 = vmax.xlane.f32.xlu0 %v1364
    %v1366 = vpop.xlane.xlu0 %1365
    %v1367 = vsel %vm644, %v1290, -inf
    %1368 = vmax.xlane.f32.xlu0 %v1367
    %v1369 = vpop.xlane.xlu0 %1368
    %v1370 = vsel %vm644, %v1312, -inf
    %1371 = vmax.xlane.f32.xlu0 %v1370
    %v1372 = vpop.xlane.xlu0 %1371
    %v1373 = vsel %vm644, %v1314, -inf
    %1374 = vmax.xlane.f32.xlu0 %v1373
    %v1375 = vpop.xlane.xlu0 %1374
    %v1376 = vsel %vm644, %v1336, -inf
    %1377 = vmax.xlane.f32.xlu0 %v1376
    %v1378 = vpop.xlane.xlu0 %1377
    %v1379 = vsel %vm644, %v1338, -inf
    %1380 = vmax.xlane.f32.xlu0 %v1379
    %v1381 = vpop.xlane.xlu0 %1380
    %v1382 = vsel %vm644, %v1360, -inf
    %1383 = vmax.xlane.f32.xlu0 %v1382
    %v1384 = vpop.xlane.xlu0 %1383
    %v1385 = vsel %vm644, %v1362, -inf
    %1386 = vmax.xlane.f32.xlu0 %v1385
    %v1387 = vpop.xlane.xlu0 %1386
    %v1388 = vsub.f32 %v1288, %v1366
    %v1389 = vsub.f32 %v1290, %v1369
    %v1390 = vsub.f32 %v1312, %v1372
    %v1391 = vsub.f32 %v1314, %v1375
    %v1392 = vsub.f32 %v1336, %v1378
    %v1393 = vsub.f32 %v1338, %v1381
    %v1394 = vsub.f32 %v1360, %v1384
    %v1395 = vsub.f32 %v1362, %v1387
    %v1396 = vmul.f32 %v1388, 1.442695
    %v1397 = vpow.pop %v1396
    %v1398 = vmul.f32 %v1389, 1.442695
    %v1399 = vpow.pop %v1398
    %v1400 = vmul.f32 %v1390, 1.442695
    %v1401 = vpow.pop %v1400
    %v1402 = vmul.f32 %v1391, 1.442695
    %v1403 = vpow.pop %v1402
    %v1404 = vmul.f32 %v1392, 1.442695
    %v1405 = vpow.pop %v1404
    %v1406 = vmul.f32 %v1393, 1.442695
    %v1407 = vpow.pop %v1406
    %v1408 = vmul.f32 %v1394, 1.442695
    %v1409 = vpow.pop %v1408
    %v1410 = vmul.f32 %v1395, 1.442695
    %v1411 = vpow.pop %v1410
    %v1412 = vsel %vm644, %v1397, 0.0
    %1413 = vadd.xlane.f32.xlu0 %v1412
    %v1414 = vpop.xlane.xlu0 %1413
    %v1415 = vsel %vm644, %v1399, 0.0
    %1416 = vadd.xlane.f32.xlu0 %v1415
    %v1417 = vpop.xlane.xlu0 %1416
    %v1418 = vsel %vm644, %v1401, 0.0
    %1419 = vadd.xlane.f32.xlu0 %v1418
    %v1420 = vpop.xlane.xlu0 %1419
    %v1421 = vsel %vm644, %v1403, 0.0
    %1422 = vadd.xlane.f32.xlu0 %v1421
    %v1423 = vpop.xlane.xlu0 %1422
    %v1424 = vsel %vm644, %v1405, 0.0
    %1425 = vadd.xlane.f32.xlu0 %v1424
    %v1426 = vpop.xlane.xlu0 %1425
    %v1427 = vsel %vm644, %v1407, 0.0
    %1428 = vadd.xlane.f32.xlu0 %v1427
    %v1429 = vpop.xlane.xlu0 %1428
    %v1430 = vsel %vm644, %v1409, 0.0
    %1431 = vadd.xlane.f32.xlu0 %v1430
    %v1432 = vpop.xlane.xlu0 %1431
    %v1433 = vsel %vm644, %v1411, 0.0
    %1434 = vadd.xlane.f32.xlu0 %v1433
    %v1435 = vpop.xlane.xlu0 %1434
    %v1436 = vrcp.pop %v1414
    %v1437 = vrcp.pop %v1417
    %v1438 = vrcp.pop %v1420
    %v1439 = vrcp.pop %v1423
    %v1440 = vrcp.pop %v1426
    %v1441 = vrcp.pop %v1429
    %v1442 = vrcp.pop %v1432
    %v1443 = vrcp.pop %v1435
    %v1444 = vmul.f32 %v1397, %v1436
    %v1445 = vmul.f32 %v1399, %v1437
    %v1446 = vmul.f32 %v1401, %v1438
    %v1447 = vmul.f32 %v1403, %v1439
    %v1448 = vmul.f32 %v1405, %v1440
    %v1449 = vmul.f32 %v1407, %v1441
    %v1450 = vmul.f32 %v1409, %v1442
    %v1451 = vmul.f32 %v1411, %v1443
    %v1452 = vpack.c.bf16 %v1444, %v1444
    %v1453 = vpack.c.bf16 %v1445, %v1445
    %v1454 = vpack.c.bf16 %v1446, %v1446
    %v1455 = vpack.c.bf16 %v1447, %v1447
    %v1456 = vpack.c.bf16 %v1448, %v1448
    %v1457 = vpack.c.bf16 %v1449, %v1449
    %v1458 = vpack.c.bf16 %v1450, %v1450
    %v1459 = vpack.c.bf16 %v1451, %v1451
    %v1462 = vunpack.c.l.b16 %v1452
    %v1463 = vunpack.c.l.b16 %v1453
    %v1464 = vpack.c.b16 %v1463, %v1462
    %1465 = vrot.lane.b32.xlu0 %v750, 64
    %v1466 = vpop.permute.xlu0 %1465
    %v1469 = vsel %vm644, %v1464, 0
    %1471 = vmatpush.bf16.msra.mxu0 0
    %1472 = vmatpush.bf16.msra.mxu0 0
    %1473 = vmatpush.bf16.msra.mxu0 0
    %1474 = vmatpush.bf16.msra.mxu0 0
    %1475 = vmatpush.bf16.msra.mxu0 0
    %1476 = vmatpush.bf16.msra.mxu0 0
    %1477 = vmatpush.bf16.msra.mxu0 0
    %1478 = vmatpush.bf16.msra.mxu0 %v1466
    %1479 = vmatmul.bf16.gmra.mxu0 %v1469
    %v1480 = vpop.f32.mrf.mxu0
    %v1481 = vadd.f32 0.0, %v1480
    %v1482 = vpop.f32.mrf.mxu0
    %v1483 = vadd.f32 0.0, %v1482
    %1484 = vdwg.mxu0
    %v1487 = vunpack.c.l.b16 %v1454
    %v1488 = vunpack.c.l.b16 %v1455
    %v1489 = vpack.c.b16 %v1488, %v1487
    %1490 = vrot.lane.b32.xlu0 %v778, 64
    %v1491 = vpop.permute.xlu0 %1490
    %v1494 = vsel %vm644, %v1489, 0
    %1496 = vmatpush.bf16.msra.mxu0 0
    %1497 = vmatpush.bf16.msra.mxu0 0
    %1498 = vmatpush.bf16.msra.mxu0 0
    %1499 = vmatpush.bf16.msra.mxu0 0
    %1500 = vmatpush.bf16.msra.mxu0 0
    %1501 = vmatpush.bf16.msra.mxu0 0
    %1502 = vmatpush.bf16.msra.mxu0 0
    %1503 = vmatpush.bf16.msra.mxu0 %v1491
    %1504 = vmatmul.bf16.gmra.mxu0 %v1494
    %v1505 = vpop.f32.mrf.mxu0
    %v1506 = vadd.f32 0.0, %v1505
    %v1507 = vpop.f32.mrf.mxu0
    %v1508 = vadd.f32 0.0, %v1507
    %1509 = vdwg.mxu0
    %v1512 = vunpack.c.l.b16 %v1456
    %v1513 = vunpack.c.l.b16 %v1457
    %v1514 = vpack.c.b16 %v1513, %v1512
    %1515 = vrot.lane.b32.xlu0 %v806, 64
    %v1516 = vpop.permute.xlu0 %1515
    %v1519 = vsel %vm644, %v1514, 0
    %1521 = vmatpush.bf16.msra.mxu0 0
    %1522 = vmatpush.bf16.msra.mxu0 0
    %1523 = vmatpush.bf16.msra.mxu0 0
    %1524 = vmatpush.bf16.msra.mxu0 0
    %1525 = vmatpush.bf16.msra.mxu0 0
    %1526 = vmatpush.bf16.msra.mxu0 0
    %1527 = vmatpush.bf16.msra.mxu0 0
    %1528 = vmatpush.bf16.msra.mxu0 %v1516
    %1529 = vmatmul.bf16.gmra.mxu0 %v1519
    %v1530 = vpop.f32.mrf.mxu0
    %v1531 = vadd.f32 0.0, %v1530
    %v1532 = vpop.f32.mrf.mxu0
    %v1533 = vadd.f32 0.0, %v1532
    %1534 = vdwg.mxu0
    %v1537 = vunpack.c.l.b16 %v1458
    %v1538 = vunpack.c.l.b16 %v1459
    %v1539 = vpack.c.b16 %v1538, %v1537
    %1540 = vrot.lane.b32.xlu0 %v834, 64
    %v1541 = vpop.permute.xlu0 %1540
    %v1544 = vsel %vm644, %v1539, 0
    %1546 = vmatpush.bf16.msra.mxu0 0
    %1547 = vmatpush.bf16.msra.mxu0 0
    %1548 = vmatpush.bf16.msra.mxu0 0
    %1549 = vmatpush.bf16.msra.mxu0 0
    %1550 = vmatpush.bf16.msra.mxu0 0
    %1551 = vmatpush.bf16.msra.mxu0 0
    %1552 = vmatpush.bf16.msra.mxu0 0
    %1553 = vmatpush.bf16.msra.mxu0 %v1541
    %1554 = vmatmul.bf16.gmra.mxu0 %v1544
    %v1555 = vpop.f32.mrf.mxu0
    %v1556 = vadd.f32 0.0, %v1555
    %v1557 = vpop.f32.mrf.mxu0
    %v1558 = vadd.f32 0.0, %v1557
    %1559 = vdwg.mxu0
    %v1560 = vpack.c.bf16 %v1483, %v1481
    %v1561 = vpack.c.bf16 %v1508, %v1506
    %v1562 = vpack.c.bf16 %v1533, %v1531
    %v1563 = vpack.c.bf16 %v1558, %v1556
    %s1564 = scalar_lea.vmem [#allocation11], 32
    %v1565 = vld [vmem:[%s1564] sm:$0xf]
    %v1566 = vld [vmem:[%s1564 + $0x4] sm:$0xf]
    %v1567 = vld [vmem:[%s1564 + $0x8] sm:$0xf]
    %v1568 = vld [vmem:[%s1564 + $0xc] sm:$0xf]
    %v1573 = vunpack.c.l.b16 %v1565
    %v1574 = vunpack.c.l.b16 %v1566
    %v1575 = vunpack.c.l.b16 %v1567
    %v1576 = vunpack.c.l.b16 %v1568
    %v1577 = vpack.c.b16 %v1574, %v1573
    %v1578 = vpack.c.b16 %v1576, %v1575
    %v1582 = vsel %vm533, %v1560, 0
    %v1585 = vsel %vm533, %v1561, 0
    %v1588 = vsel %vm533, %v1562, 0
    %v1591 = vsel %vm533, %v1563, 0
    %1593 = vmatpush.bf16.msra.mxu0 0
    %1594 = vmatpush.bf16.msra.mxu0 0
    %1595 = vmatpush.bf16.msra.mxu0 0
    %1596 = vmatpush.bf16.msra.mxu0 0
    %1597 = vmatpush.bf16.msra.mxu0 0
    %1598 = vmatpush.bf16.msra.mxu0 0
    %1599 = vmatpush.bf16.msra.mxu0 %v1578
    %1600 = vmatpush.bf16.msra.mxu0 %v1577
    %1601 = vmatmul.bf16.gmra.mxu0 %v1582
    %v1602 = vpop.f32.mrf.mxu0
    %v1603 = vadd.f32 0.0, %v1602
    %v1604 = vpop.f32.mrf.mxu0
    %v1605 = vadd.f32 0.0, %v1604
    %1606 = vmatmul.bf16.gmra.mxu0 %v1585
    %v1607 = vpop.f32.mrf.mxu0
    %v1608 = vadd.f32 0.0, %v1607
    %v1609 = vpop.f32.mrf.mxu0
    %v1610 = vadd.f32 0.0, %v1609
    %1611 = vmatmul.bf16.gmra.mxu0 %v1588
    %v1612 = vpop.f32.mrf.mxu0
    %v1613 = vadd.f32 0.0, %v1612
    %v1614 = vpop.f32.mrf.mxu0
    %v1615 = vadd.f32 0.0, %v1614
    %1616 = vmatmul.bf16.gmra.mxu0 %v1591
    %v1617 = vpop.f32.mrf.mxu0
    %v1618 = vadd.f32 0.0, %v1617
    %v1619 = vpop.f32.mrf.mxu0
    %v1620 = vadd.f32 0.0, %v1619
    %1621 = vdwg.mxu0
    %v1622 = vadd.f32 %v1249, %v1603
    %v1623 = vadd.f32 %v1251, %v1605
    %v1624 = vadd.f32 %v1254, %v1608
    %v1625 = vadd.f32 %v1256, %v1610
    %v1626 = vadd.f32 %v1259, %v1613
    %v1627 = vadd.f32 %v1261, %v1615
    %v1628 = vadd.f32 %v1264, %v1618
    %v1629 = vadd.f32 %v1266, %v1620
    %1630 = vrot.lane.b32.xlu0 %v527, 32
    %v1631 = vpop.permute.xlu0 %1630
    %1632 = vrot.lane.b32.xlu0 %v532, 32
    %v1633 = vpop.permute.xlu0 %1632
    %v1635 = vsel %vm533, %v1631, 0
    %v1638 = vsel %vm533, %v1633, 0
    %1640 = vmatpush.bf16.xpose.msra.mxu0 0
    %1641 = vmatpush.bf16.xpose.msra.mxu0 0
    %1642 = vmatpush.bf16.xpose.msra.mxu0 0
    %1643 = vmatpush.bf16.xpose.msra.mxu0 0
    %1644 = vmatpush.bf16.xpose.msra.mxu0 0
    %1645 = vmatpush.bf16.xpose.msra.mxu0 0
    %1646 = vmatpush.bf16.xpose.msra.mxu0 0
    %1647 = vmatpush.bf16.xpose.msra.mxu0 %v1638
    %1648 = vmatmul.bf16.gmra.mxu0 %v1635
    %v1649 = vpop.f32.mrf.mxu0
    %v1650 = vadd.f32 %v521, %v1649
    %v1651 = vpop.f32.mrf.mxu0
    %v1652 = vadd.f32 %v522, %v1651
    %1653 = vdwg.mxu0
    %1654 = vrot.lane.b32.xlu0 %v558, 32
    %v1655 = vpop.permute.xlu0 %1654
    %1656 = vrot.lane.b32.xlu0 %v563, 32
    %v1657 = vpop.permute.xlu0 %1656
    %v1659 = vsel %vm533, %v1655, 0
    %v1662 = vsel %vm533, %v1657, 0
    %1664 = vmatpush.bf16.xpose.msra.mxu0 0
    %1665 = vmatpush.bf16.xpose.msra.mxu0 0
    %1666 = vmatpush.bf16.xpose.msra.mxu0 0
    %1667 = vmatpush.bf16.xpose.msra.mxu0 0
    %1668 = vmatpush.bf16.xpose.msra.mxu0 0
    %1669 = vmatpush.bf16.xpose.msra.mxu0 0
    %1670 = vmatpush.bf16.xpose.msra.mxu0 0
    %1671 = vmatpush.bf16.xpose.msra.mxu0 %v1662
    %1672 = vmatmul.bf16.gmra.mxu0 %v1659
    %v1673 = vpop.f32.mrf.mxu0
    %v1674 = vadd.f32 %v521, %v1673
    %v1675 = vpop.f32.mrf.mxu0
    %v1676 = vadd.f32 %v522, %v1675
    %1677 = vdwg.mxu0
    %1678 = vrot.lane.b32.xlu0 %v588, 32
    %v1679 = vpop.permute.xlu0 %1678
    %1680 = vrot.lane.b32.xlu0 %v593, 32
    %v1681 = vpop.permute.xlu0 %1680
    %v1683 = vsel %vm533, %v1679, 0
    %v1686 = vsel %vm533, %v1681, 0
    %1688 = vmatpush.bf16.xpose.msra.mxu0 0
    %1689 = vmatpush.bf16.xpose.msra.mxu0 0
    %1690 = vmatpush.bf16.xpose.msra.mxu0 0
    %1691 = vmatpush.bf16.xpose.msra.mxu0 0
    %1692 = vmatpush.bf16.xpose.msra.mxu0 0
    %1693 = vmatpush.bf16.xpose.msra.mxu0 0
    %1694 = vmatpush.bf16.xpose.msra.mxu0 0
    %1695 = vmatpush.bf16.xpose.msra.mxu0 %v1686
    %1696 = vmatmul.bf16.gmra.mxu0 %v1683
    %v1697 = vpop.f32.mrf.mxu0
    %v1698 = vadd.f32 %v521, %v1697
    %v1699 = vpop.f32.mrf.mxu0
    %v1700 = vadd.f32 %v522, %v1699
    %1701 = vdwg.mxu0
    %1702 = vrot.lane.b32.xlu0 %v618, 32
    %v1703 = vpop.permute.xlu0 %1702
    %1704 = vrot.lane.b32.xlu0 %v623, 32
    %v1705 = vpop.permute.xlu0 %1704
    %v1707 = vsel %vm533, %v1703, 0
    %v1710 = vsel %vm533, %v1705, 0
    %1712 = vmatpush.bf16.xpose.msra.mxu0 0
    %1713 = vmatpush.bf16.xpose.msra.mxu0 0
    %1714 = vmatpush.bf16.xpose.msra.mxu0 0
    %1715 = vmatpush.bf16.xpose.msra.mxu0 0
    %1716 = vmatpush.bf16.xpose.msra.mxu0 0
    %1717 = vmatpush.bf16.xpose.msra.mxu0 0
    %1718 = vmatpush.bf16.xpose.msra.mxu0 0
    %1719 = vmatpush.bf16.xpose.msra.mxu0 %v1710
    %1720 = vmatmul.bf16.gmra.mxu0 %v1707
    %v1721 = vpop.f32.mrf.mxu0
    %v1722 = vadd.f32 %v521, %v1721
    %v1723 = vpop.f32.mrf.mxu0
    %v1724 = vadd.f32 %v522, %v1723
    %1725 = vdwg.mxu0
    %v1726 = vsel %vm644, %v1650, -inf
    %1727 = vmax.xlane.f32.xlu0 %v1726
    %v1728 = vpop.xlane.xlu0 %1727
    %v1729 = vsel %vm644, %v1652, -inf
    %1730 = vmax.xlane.f32.xlu0 %v1729
    %v1731 = vpop.xlane.xlu0 %1730
    %v1732 = vsel %vm644, %v1674, -inf
    %1733 = vmax.xlane.f32.xlu0 %v1732
    %v1734 = vpop.xlane.xlu0 %1733
    %v1735 = vsel %vm644, %v1676, -inf
    %1736 = vmax.xlane.f32.xlu0 %v1735
    %v1737 = vpop.xlane.xlu0 %1736
    %v1738 = vsel %vm644, %v1698, -inf
    %1739 = vmax.xlane.f32.xlu0 %v1738
    %v1740 = vpop.xlane.xlu0 %1739
    %v1741 = vsel %vm644, %v1700, -inf
    %1742 = vmax.xlane.f32.xlu0 %v1741
    %v1743 = vpop.xlane.xlu0 %1742
    %v1744 = vsel %vm644, %v1722, -inf
    %1745 = vmax.xlane.f32.xlu0 %v1744
    %v1746 = vpop.xlane.xlu0 %1745
    %v1747 = vsel %vm644, %v1724, -inf
    %1748 = vmax.xlane.f32.xlu0 %v1747
    %v1749 = vpop.xlane.xlu0 %1748
    %v1750 = vsub.f32 %v1650, %v1728
    %v1751 = vsub.f32 %v1652, %v1731
    %v1752 = vsub.f32 %v1674, %v1734
    %v1753 = vsub.f32 %v1676, %v1737
    %v1754 = vsub.f32 %v1698, %v1740
    %v1755 = vsub.f32 %v1700, %v1743
    %v1756 = vsub.f32 %v1722, %v1746
    %v1757 = vsub.f32 %v1724, %v1749
    %v1758 = vmul.f32 %v1750, 1.442695
    %v1759 = vpow.pop %v1758
    %v1760 = vmul.f32 %v1751, 1.442695
    %v1761 = vpow.pop %v1760
    %v1762 = vmul.f32 %v1752, 1.442695
    %v1763 = vpow.pop %v1762
    %v1764 = vmul.f32 %v1753, 1.442695
    %v1765 = vpow.pop %v1764
    %v1766 = vmul.f32 %v1754, 1.442695
    %v1767 = vpow.pop %v1766
    %v1768 = vmul.f32 %v1755, 1.442695
    %v1769 = vpow.pop %v1768
    %v1770 = vmul.f32 %v1756, 1.442695
    %v1771 = vpow.pop %v1770
    %v1772 = vmul.f32 %v1757, 1.442695
    %v1773 = vpow.pop %v1772
    %v1774 = vsel %vm644, %v1759, 0.0
    %1775 = vadd.xlane.f32.xlu0 %v1774
    %v1776 = vpop.xlane.xlu0 %1775
    %v1777 = vsel %vm644, %v1761, 0.0
    %1778 = vadd.xlane.f32.xlu0 %v1777
    %v1779 = vpop.xlane.xlu0 %1778
    %v1780 = vsel %vm644, %v1763, 0.0
    %1781 = vadd.xlane.f32.xlu0 %v1780
    %v1782 = vpop.xlane.xlu0 %1781
    %v1783 = vsel %vm644, %v1765, 0.0
    %1784 = vadd.xlane.f32.xlu0 %v1783
    %v1785 = vpop.xlane.xlu0 %1784
    %v1786 = vsel %vm644, %v1767, 0.0
    %1787 = vadd.xlane.f32.xlu0 %v1786
    %v1788 = vpop.xlane.xlu0 %1787
    %v1789 = vsel %vm644, %v1769, 0.0
    %1790 = vadd.xlane.f32.xlu0 %v1789
    %v1791 = vpop.xlane.xlu0 %1790
    %v1792 = vsel %vm644, %v1771, 0.0
    %1793 = vadd.xlane.f32.xlu0 %v1792
    %v1794 = vpop.xlane.xlu0 %1793
    %v1795 = vsel %vm644, %v1773, 0.0
    %1796 = vadd.xlane.f32.xlu0 %v1795
    %v1797 = vpop.xlane.xlu0 %1796
    %v1798 = vrcp.pop %v1776
    %v1799 = vrcp.pop %v1779
    %v1800 = vrcp.pop %v1782
    %v1801 = vrcp.pop %v1785
    %v1802 = vrcp.pop %v1788
    %v1803 = vrcp.pop %v1791
    %v1804 = vrcp.pop %v1794
    %v1805 = vrcp.pop %v1797
    %v1806 = vmul.f32 %v1759, %v1798
    %v1807 = vmul.f32 %v1761, %v1799
    %v1808 = vmul.f32 %v1763, %v1800
    %v1809 = vmul.f32 %v1765, %v1801
    %v1810 = vmul.f32 %v1767, %v1802
    %v1811 = vmul.f32 %v1769, %v1803
    %v1812 = vmul.f32 %v1771, %v1804
    %v1813 = vmul.f32 %v1773, %v1805
    %v1814 = vpack.c.bf16 %v1806, %v1806
    %v1815 = vpack.c.bf16 %v1807, %v1807
    %v1816 = vpack.c.bf16 %v1808, %v1808
    %v1817 = vpack.c.bf16 %v1809, %v1809
    %v1818 = vpack.c.bf16 %v1810, %v1810
    %v1819 = vpack.c.bf16 %v1811, %v1811
    %v1820 = vpack.c.bf16 %v1812, %v1812
    %v1821 = vpack.c.bf16 %v1813, %v1813
    %v1824 = vunpack.c.l.b16 %v1814
    %v1825 = vunpack.c.l.b16 %v1815
    %v1826 = vpack.c.b16 %v1825, %v1824
    %1827 = vrot.lane.b32.xlu0 %v750, 32
    %v1828 = vpop.permute.xlu0 %1827
    %v1831 = vsel %vm644, %v1826, 0
    %1833 = vmatpush.bf16.msra.mxu0 0
    %1834 = vmatpush.bf16.msra.mxu0 0
    %1835 = vmatpush.bf16.msra.mxu0 0
    %1836 = vmatpush.bf16.msra.mxu0 0
    %1837 = vmatpush.bf16.msra.mxu0 0
    %1838 = vmatpush.bf16.msra.mxu0 0
    %1839 = vmatpush.bf16.msra.mxu0 0
    %1840 = vmatpush.bf16.msra.mxu0 %v1828
    %1841 = vmatmul.bf16.gmra.mxu0 %v1831
    %v1842 = vpop.f32.mrf.mxu0
    %v1843 = vadd.f32 0.0, %v1842
    %v1844 = vpop.f32.mrf.mxu0
    %v1845 = vadd.f32 0.0, %v1844
    %1846 = vdwg.mxu0
    %v1849 = vunpack.c.l.b16 %v1816
    %v1850 = vunpack.c.l.b16 %v1817
    %v1851 = vpack.c.b16 %v1850, %v1849
    %1852 = vrot.lane.b32.xlu0 %v778, 32
    %v1853 = vpop.permute.xlu0 %1852
    %v1856 = vsel %vm644, %v1851, 0
    %1858 = vmatpush.bf16.msra.mxu0 0
    %1859 = vmatpush.bf16.msra.mxu0 0
    %1860 = vmatpush.bf16.msra.mxu0 0
    %1861 = vmatpush.bf16.msra.mxu0 0
    %1862 = vmatpush.bf16.msra.mxu0 0
    %1863 = vmatpush.bf16.msra.mxu0 0
    %1864 = vmatpush.bf16.msra.mxu0 0
    %1865 = vmatpush.bf16.msra.mxu0 %v1853
    %1866 = vmatmul.bf16.gmra.mxu0 %v1856
    %v1867 = vpop.f32.mrf.mxu0
    %v1868 = vadd.f32 0.0, %v1867
    %v1869 = vpop.f32.mrf.mxu0
    %v1870 = vadd.f32 0.0, %v1869
    %1871 = vdwg.mxu0
    %v1874 = vunpack.c.l.b16 %v1818
    %v1875 = vunpack.c.l.b16 %v1819
    %v1876 = vpack.c.b16 %v1875, %v1874
    %1877 = vrot.lane.b32.xlu0 %v806, 32
    %v1878 = vpop.permute.xlu0 %1877
    %v1881 = vsel %vm644, %v1876, 0
    %1883 = vmatpush.bf16.msra.mxu0 0
    %1884 = vmatpush.bf16.msra.mxu0 0
    %1885 = vmatpush.bf16.msra.mxu0 0
    %1886 = vmatpush.bf16.msra.mxu0 0
    %1887 = vmatpush.bf16.msra.mxu0 0
    %1888 = vmatpush.bf16.msra.mxu0 0
    %1889 = vmatpush.bf16.msra.mxu0 0
    %1890 = vmatpush.bf16.msra.mxu0 %v1878
    %1891 = vmatmul.bf16.gmra.mxu0 %v1881
    %v1892 = vpop.f32.mrf.mxu0
    %v1893 = vadd.f32 0.0, %v1892
    %v1894 = vpop.f32.mrf.mxu0
    %v1895 = vadd.f32 0.0, %v1894
    %1896 = vdwg.mxu0
    %v1899 = vunpack.c.l.b16 %v1820
    %v1900 = vunpack.c.l.b16 %v1821
    %v1901 = vpack.c.b16 %v1900, %v1899
    %1902 = vrot.lane.b32.xlu0 %v834, 32
    %v1903 = vpop.permute.xlu0 %1902
    %v1906 = vsel %vm644, %v1901, 0
    %1908 = vmatpush.bf16.msra.mxu0 0
    %1909 = vmatpush.bf16.msra.mxu0 0
    %1910 = vmatpush.bf16.msra.mxu0 0
    %1911 = vmatpush.bf16.msra.mxu0 0
    %1912 = vmatpush.bf16.msra.mxu0 0
    %1913 = vmatpush.bf16.msra.mxu0 0
    %1914 = vmatpush.bf16.msra.mxu0 0
    %1915 = vmatpush.bf16.msra.mxu0 %v1903
    %1916 = vmatmul.bf16.gmra.mxu0 %v1906
    %v1917 = vpop.f32.mrf.mxu0
    %v1918 = vadd.f32 0.0, %v1917
    %v1919 = vpop.f32.mrf.mxu0
    %v1920 = vadd.f32 0.0, %v1919
    %1921 = vdwg.mxu0
    %v1922 = vpack.c.bf16 %v1845, %v1843
    %v1923 = vpack.c.bf16 %v1870, %v1868
    %v1924 = vpack.c.bf16 %v1895, %v1893
    %v1925 = vpack.c.bf16 %v1920, %v1918
    %s1926 = scalar_lea.vmem [#allocation11], 48
    %v1927 = vld [vmem:[%s1926] sm:$0xf]
    %v1928 = vld [vmem:[%s1926 + $0x4] sm:$0xf]
    %v1929 = vld [vmem:[%s1926 + $0x8] sm:$0xf]
    %v1930 = vld [vmem:[%s1926 + $0xc] sm:$0xf]
    %v1935 = vunpack.c.l.b16 %v1927
    %v1936 = vunpack.c.l.b16 %v1928
    %v1937 = vunpack.c.l.b16 %v1929
    %v1938 = vunpack.c.l.b16 %v1930
    %v1939 = vpack.c.b16 %v1936, %v1935
    %v1940 = vpack.c.b16 %v1938, %v1937
    %v1944 = vsel %vm533, %v1922, 0
    %v1947 = vsel %vm533, %v1923, 0
    %v1950 = vsel %vm533, %v1924, 0
    %v1953 = vsel %vm533, %v1925, 0
    %1955 = vmatpush.bf16.msra.mxu0 0
    %1956 = vmatpush.bf16.msra.mxu0 0
    %1957 = vmatpush.bf16.msra.mxu0 0
    %1958 = vmatpush.bf16.msra.mxu0 0
    %1959 = vmatpush.bf16.msra.mxu0 0
    %1960 = vmatpush.bf16.msra.mxu0 0
    %1961 = vmatpush.bf16.msra.mxu0 %v1940
    %1962 = vmatpush.bf16.msra.mxu0 %v1939
    %1963 = vmatmul.bf16.gmra.mxu0 %v1944
    %v1964 = vpop.f32.mrf.mxu0
    %v1965 = vadd.f32 0.0, %v1964
    %v1966 = vpop.f32.mrf.mxu0
    %v1967 = vadd.f32 0.0, %v1966
    %1968 = vmatmul.bf16.gmra.mxu0 %v1947
    %v1969 = vpop.f32.mrf.mxu0
    %v1970 = vadd.f32 0.0, %v1969
    %v1971 = vpop.f32.mrf.mxu0
    %v1972 = vadd.f32 0.0, %v1971
    %1973 = vmatmul.bf16.gmra.mxu0 %v1950
    %v1974 = vpop.f32.mrf.mxu0
    %v1975 = vadd.f32 0.0, %v1974
    %v1976 = vpop.f32.mrf.mxu0
    %v1977 = vadd.f32 0.0, %v1976
    %1978 = vmatmul.bf16.gmra.mxu0 %v1953
    %v1979 = vpop.f32.mrf.mxu0
    %v1980 = vadd.f32 0.0, %v1979
    %v1981 = vpop.f32.mrf.mxu0
    %v1982 = vadd.f32 0.0, %v1981
    %1983 = vdwg.mxu0
    %v1984 = vadd.f32 %v1622, %v1965
    %v1985 = vadd.f32 %v1623, %v1967
    %v1986 = vadd.f32 %v1624, %v1970
    %v1987 = vadd.f32 %v1625, %v1972
    %v1988 = vadd.f32 %v1626, %v1975
    %v1989 = vadd.f32 %v1627, %v1977
    %v1990 = vadd.f32 %v1628, %v1980
    %v1991 = vadd.f32 %v1629, %v1982
    %v1992 = vld [vmem:[%s9] sm:$0x1]
    %v1994 = vperm.slane %v1992, 0
    %v1996 = vadd.f32 %v1984, %v1994
    %v1997 = vadd.f32 %v1985, %v1994
    %v1998 = vadd.f32 %v1986, %v1994
    %v1999 = vadd.f32 %v1987, %v1994
    %v2000 = vadd.f32 %v1988, %v1994
    %v2001 = vadd.f32 %v1989, %v1994
    %v2002 = vadd.f32 %v1990, %v1994
    %v2003 = vadd.f32 %v1991, %v1994
    %v2004 = vadd.f32 %v186, %v1996
    %v2005 = vadd.f32 %v187, %v1997
    %v2006 = vadd.f32 %v188, %v1998
    %v2007 = vadd.f32 %v189, %v1999
    %v2008 = vadd.f32 %v190, %v2000
    %v2009 = vadd.f32 %v191, %v2001
    %v2010 = vadd.f32 %v192, %v2002
    %v2011 = vadd.f32 %v193, %v2003
    %v2012 = vld [vmem:[%s10] sm:$0x1]
    %v2013 = vld [vmem:[%s11] sm:$0x1]
    %2014 = vadd.xlane.f32.xlu0 %v2004
    %v2015 = vpop.xlane.xlu0 %2014
    %2016 = vadd.xlane.f32.xlu0 %v2005
    %v2017 = vpop.xlane.xlu0 %2016
    %2018 = vadd.xlane.f32.xlu0 %v2006
    %v2019 = vpop.xlane.xlu0 %2018
    %2020 = vadd.xlane.f32.xlu0 %v2007
    %v2021 = vpop.xlane.xlu0 %2020
    %2022 = vadd.xlane.f32.xlu0 %v2008
    %v2023 = vpop.xlane.xlu0 %2022
    %2024 = vadd.xlane.f32.xlu0 %v2009
    %v2025 = vpop.xlane.xlu0 %2024
    %2026 = vadd.xlane.f32.xlu0 %v2010
    %v2027 = vpop.xlane.xlu0 %2026
    %2028 = vadd.xlane.f32.xlu0 %v2011
    %v2029 = vpop.xlane.xlu0 %2028
    %v2030 = vrcp.pop 128.0
    %v2031 = vmul.f32 128.0, %v2030
    %v2032 = vsub.f32 1.0, %v2031
    %v2033 = vmul.f32 %v2030, %v2032
    %v2034 = vadd.f32 %v2030, %v2033
    %vm2035 = vweird.f32 %v2030
    %v2036 = vsel %vm2035, %v2030, %v2034
    %v2037 = vmul.f32 %v2015, %v2036
    %v2038 = vmul.f32 %v2017, %v2036
    %v2039 = vmul.f32 %v2019, %v2036
    %v2040 = vmul.f32 %v2021, %v2036
    %v2041 = vmul.f32 %v2023, %v2036
    %v2042 = vmul.f32 %v2025, %v2036
    %v2043 = vmul.f32 %v2027, %v2036
    %v2044 = vmul.f32 %v2029, %v2036
    %v2045 = vsub.f32 %v2004, %v2037
    %v2046 = vsub.f32 %v2005, %v2038
    %v2047 = vsub.f32 %v2006, %v2039
    %v2048 = vsub.f32 %v2007, %v2040
    %v2049 = vsub.f32 %v2008, %v2041
    %v2050 = vsub.f32 %v2009, %v2042
    %v2051 = vsub.f32 %v2010, %v2043
    %v2052 = vsub.f32 %v2011, %v2044
    %v2053 = vmul.f32 %v2045, %v2045
    %v2054 = vmul.f32 %v2046, %v2046
    %v2055 = vmul.f32 %v2047, %v2047
    %v2056 = vmul.f32 %v2048, %v2048
    %v2057 = vmul.f32 %v2049, %v2049
    %v2058 = vmul.f32 %v2050, %v2050
    %v2059 = vmul.f32 %v2051, %v2051
    %v2060 = vmul.f32 %v2052, %v2052
    %2061 = vadd.xlane.f32.xlu0 %v2053
    %v2062 = vpop.xlane.xlu0 %2061
    %2063 = vadd.xlane.f32.xlu0 %v2054
    %v2064 = vpop.xlane.xlu0 %2063
    %2065 = vadd.xlane.f32.xlu0 %v2055
    %v2066 = vpop.xlane.xlu0 %2065
    %2067 = vadd.xlane.f32.xlu0 %v2056
    %v2068 = vpop.xlane.xlu0 %2067
    %2069 = vadd.xlane.f32.xlu0 %v2057
    %v2070 = vpop.xlane.xlu0 %2069
    %2071 = vadd.xlane.f32.xlu0 %v2058
    %v2072 = vpop.xlane.xlu0 %2071
    %2073 = vadd.xlane.f32.xlu0 %v2059
    %v2074 = vpop.xlane.xlu0 %2073
    %2075 = vadd.xlane.f32.xlu0 %v2060
    %v2076 = vpop.xlane.xlu0 %2075
    %v2077 = vmul.f32 %v2062, %v2036
    %v2078 = vmul.f32 %v2064, %v2036
    %v2079 = vmul.f32 %v2066, %v2036
    %v2080 = vmul.f32 %v2068, %v2036
    %v2081 = vmul.f32 %v2070, %v2036
    %v2082 = vmul.f32 %v2072, %v2036
    %v2083 = vmul.f32 %v2074, %v2036
    %v2084 = vmul.f32 %v2076, %v2036
    %v2085 = vadd.f32 %v2077, 1e-05
    %v2086 = vadd.f32 %v2078, 1e-05
    %v2087 = vadd.f32 %v2079, 1e-05
    %v2088 = vadd.f32 %v2080, 1e-05
    %v2089 = vadd.f32 %v2081, 1e-05
    %v2090 = vadd.f32 %v2082, 1e-05
    %v2091 = vadd.f32 %v2083, 1e-05
    %v2092 = vadd.f32 %v2084, 1e-05
    %v2093 = vrsqrt.pop %v2085
    %v2094 = vmul.f32 %v2093, %v2085
    %v2095 = vmul.f32 %v2094, %v2093
    %v2096 = vmul.f32 0.5, %v2095
    %v2097 = vsub.f32 1.5, %v2096
    %v2098 = vmul.f32 %v2093, %v2097
    %vm2099 = vweird.f32 %v2085
    %vm2100 = vweird.f32 %v2093
    %vm2101 = vmor %vm2099, %vm2100
    %v2102 = vsel %vm2101, %v2093, %v2098
    %v2103 = vrsqrt.pop %v2086
    %v2104 = vmul.f32 %v2103, %v2086
    %v2105 = vmul.f32 %v2104, %v2103
    %v2106 = vmul.f32 0.5, %v2105
    %v2107 = vsub.f32 1.5, %v2106
    %v2108 = vmul.f32 %v2103, %v2107
    %vm2109 = vweird.f32 %v2086
    %vm2110 = vweird.f32 %v2103
    %vm2111 = vmor %vm2109, %vm2110
    %v2112 = vsel %vm2111, %v2103, %v2108
    %v2113 = vrsqrt.pop %v2087
    %v2114 = vmul.f32 %v2113, %v2087
    %v2115 = vmul.f32 %v2114, %v2113
    %v2116 = vmul.f32 0.5, %v2115
    %v2117 = vsub.f32 1.5, %v2116
    %v2118 = vmul.f32 %v2113, %v2117
    %vm2119 = vweird.f32 %v2087
    %vm2120 = vweird.f32 %v2113
    %vm2121 = vmor %vm2119, %vm2120
    %v2122 = vsel %vm2121, %v2113, %v2118
    %v2123 = vrsqrt.pop %v2088
    %v2124 = vmul.f32 %v2123, %v2088
    %v2125 = vmul.f32 %v2124, %v2123
    %v2126 = vmul.f32 0.5, %v2125
    %v2127 = vsub.f32 1.5, %v2126
    %v2128 = vmul.f32 %v2123, %v2127
    %vm2129 = vweird.f32 %v2088
    %vm2130 = vweird.f32 %v2123
    %vm2131 = vmor %vm2129, %vm2130
    %v2132 = vsel %vm2131, %v2123, %v2128
    %v2133 = vrsqrt.pop %v2089
    %v2134 = vmul.f32 %v2133, %v2089
    %v2135 = vmul.f32 %v2134, %v2133
    %v2136 = vmul.f32 0.5, %v2135
    %v2137 = vsub.f32 1.5, %v2136
    %v2138 = vmul.f32 %v2133, %v2137
    %vm2139 = vweird.f32 %v2089
    %vm2140 = vweird.f32 %v2133
    %vm2141 = vmor %vm2139, %vm2140
    %v2142 = vsel %vm2141, %v2133, %v2138
    %v2143 = vrsqrt.pop %v2090
    %v2144 = vmul.f32 %v2143, %v2090
    %v2145 = vmul.f32 %v2144, %v2143
    %v2146 = vmul.f32 0.5, %v2145
    %v2147 = vsub.f32 1.5, %v2146
    %v2148 = vmul.f32 %v2143, %v2147
    %vm2149 = vweird.f32 %v2090
    %vm2150 = vweird.f32 %v2143
    %vm2151 = vmor %vm2149, %vm2150
    %v2152 = vsel %vm2151, %v2143, %v2148
    %v2153 = vrsqrt.pop %v2091
    %v2154 = vmul.f32 %v2153, %v2091
    %v2155 = vmul.f32 %v2154, %v2153
    %v2156 = vmul.f32 0.5, %v2155
    %v2157 = vsub.f32 1.5, %v2156
    %v2158 = vmul.f32 %v2153, %v2157
    %vm2159 = vweird.f32 %v2091
    %vm2160 = vweird.f32 %v2153
    %vm2161 = vmor %vm2159, %vm2160
    %v2162 = vsel %vm2161, %v2153, %v2158
    %v2163 = vrsqrt.pop %v2092
    %v2164 = vmul.f32 %v2163, %v2092
    %v2165 = vmul.f32 %v2164, %v2163
    %v2166 = vmul.f32 0.5, %v2165
    %v2167 = vsub.f32 1.5, %v2166
    %v2168 = vmul.f32 %v2163, %v2167
    %vm2169 = vweird.f32 %v2092
    %vm2170 = vweird.f32 %v2163
    %vm2171 = vmor %vm2169, %vm2170
    %v2172 = vsel %vm2171, %v2163, %v2168
    %v2173 = vmul.f32 %v2045, %v2102
    %v2174 = vmul.f32 %v2046, %v2112
    %v2175 = vmul.f32 %v2047, %v2122
    %v2176 = vmul.f32 %v2048, %v2132
    %v2177 = vmul.f32 %v2049, %v2142
    %v2178 = vmul.f32 %v2050, %v2152
    %v2179 = vmul.f32 %v2051, %v2162
    %v2180 = vmul.f32 %v2052, %v2172
    %v2182 = vperm.slane %v2012, 0
    %v2184 = vmul.f32 %v2173, %v2182
    %v2185 = vmul.f32 %v2174, %v2182
    %v2186 = vmul.f32 %v2175, %v2182
    %v2187 = vmul.f32 %v2176, %v2182
    %v2188 = vmul.f32 %v2177, %v2182
    %v2189 = vmul.f32 %v2178, %v2182
    %v2190 = vmul.f32 %v2179, %v2182
    %v2191 = vmul.f32 %v2180, %v2182
    %v2193 = vperm.slane %v2013, 0
    %v2195 = vadd.f32 %v2184, %v2193
    %v2196 = vadd.f32 %v2185, %v2193
    %v2197 = vadd.f32 %v2186, %v2193
    %v2198 = vadd.f32 %v2187, %v2193
    %v2199 = vadd.f32 %v2188, %v2193
    %v2200 = vadd.f32 %v2189, %v2193
    %v2201 = vadd.f32 %v2190, %v2193
    %v2202 = vadd.f32 %v2191, %v2193
    %v2203 = vpack.c.bf16 %v2196, %v2195
    %v2204 = vpack.c.bf16 %v2198, %v2197
    %v2205 = vpack.c.bf16 %v2200, %v2199
    %v2206 = vpack.c.bf16 %v2202, %v2201
    %v2207 = vld [vmem:[#allocation13] sm:$0xff]
    %v2208 = vld [vmem:[#allocation13 + $0x8] sm:$0xff]
    %v2209 = vld [vmem:[#allocation13 + $0x10] sm:$0xff]
    %v2210 = vld [vmem:[#allocation13 + $0x18] sm:$0xff]
    %v2211 = vld [vmem:[#allocation13 + $0x20] sm:$0xff]
    %v2212 = vld [vmem:[#allocation13 + $0x28] sm:$0xff]
    %v2213 = vld [vmem:[#allocation13 + $0x30] sm:$0xff]
    %v2214 = vld [vmem:[#allocation13 + $0x38] sm:$0xff]
    %v2215 = vld [vmem:[#allocation13 + $0x40] sm:$0xff]
    %v2216 = vld [vmem:[#allocation13 + $0x48] sm:$0xff]
    %v2217 = vld [vmem:[#allocation13 + $0x50] sm:$0xff]
    %v2218 = vld [vmem:[#allocation13 + $0x58] sm:$0xff]
    %v2219 = vld [vmem:[#allocation13 + $0x60] sm:$0xff]
    %v2220 = vld [vmem:[#allocation13 + $0x68] sm:$0xff]
    %v2221 = vld [vmem:[#allocation13 + $0x70] sm:$0xff]
    %v2222 = vld [vmem:[#allocation13 + $0x78] sm:$0xff]
    %v2223 = vld [vmem:[#allocation13 + $0x80] sm:$0xff]
    %v2224 = vld [vmem:[#allocation13 + $0x88] sm:$0xff]
    %v2225 = vld [vmem:[#allocation13 + $0x90] sm:$0xff]
    %v2226 = vld [vmem:[#allocation13 + $0x98] sm:$0xff]
    %v2227 = vld [vmem:[#allocation13 + $0xa0] sm:$0xff]
    %v2228 = vld [vmem:[#allocation13 + $0xa8] sm:$0xff]
    %v2229 = vld [vmem:[#allocation13 + $0xb0] sm:$0xff]
    %v2230 = vld [vmem:[#allocation13 + $0xb8] sm:$0xff]
    %v2231 = vld [vmem:[#allocation13 + $0xc0] sm:$0xff]
    %v2232 = vld [vmem:[#allocation13 + $0xc8] sm:$0xff]
    %v2233 = vld [vmem:[#allocation13 + $0xd0] sm:$0xff]
    %v2234 = vld [vmem:[#allocation13 + $0xd8] sm:$0xff]
    %v2235 = vld [vmem:[#allocation13 + $0xe0] sm:$0xff]
    %v2236 = vld [vmem:[#allocation13 + $0xe8] sm:$0xff]
    %v2237 = vld [vmem:[#allocation13 + $0xf0] sm:$0xff]
    %v2238 = vld [vmem:[#allocation13 + $0xf8] sm:$0xff]
    %v2239 = vld [vmem:[%s13] sm:$0xf]
    %v2241 = vperm.slane %v2239, 0
    %v2242 = vperm.slane %v2239, 1
    %v2243 = vperm.slane %v2239, 2
    %v2244 = vperm.slane %v2239, 3
    %v2281 = vunpack.c.l.b16 %v2207
    %v2282 = vunpack.c.h.b16 %v2207
    %v2283 = vunpack.c.l.b16 %v2208
    %v2284 = vunpack.c.h.b16 %v2208
    %v2285 = vunpack.c.l.b16 %v2209
    %v2286 = vunpack.c.h.b16 %v2209
    %v2287 = vunpack.c.l.b16 %v2210
    %v2288 = vunpack.c.h.b16 %v2210
    %v2289 = vunpack.c.l.b16 %v2211
    %v2290 = vunpack.c.h.b16 %v2211
    %v2291 = vunpack.c.l.b16 %v2212
    %v2292 = vunpack.c.h.b16 %v2212
    %v2293 = vunpack.c.l.b16 %v2213
    %v2294 = vunpack.c.h.b16 %v2213
    %v2295 = vunpack.c.l.b16 %v2214
    %v2296 = vunpack.c.h.b16 %v2214
    %v2297 = vunpack.c.l.b16 %v2215
    %v2298 = vunpack.c.h.b16 %v2215
    %v2299 = vunpack.c.l.b16 %v2216
    %v2300 = vunpack.c.h.b16 %v2216
    %v2301 = vunpack.c.l.b16 %v2217
    %v2302 = vunpack.c.h.b16 %v2217
    %v2303 = vunpack.c.l.b16 %v2218
    %v2304 = vunpack.c.h.b16 %v2218
    %v2305 = vunpack.c.l.b16 %v2219
    %v2306 = vunpack.c.h.b16 %v2219
    %v2307 = vunpack.c.l.b16 %v2220
    %v2308 = vunpack.c.h.b16 %v2220
    %v2309 = vunpack.c.l.b16 %v2221
    %v2310 = vunpack.c.h.b16 %v2221
    %v2311 = vunpack.c.l.b16 %v2222
    %v2312 = vunpack.c.h.b16 %v2222
    %v2313 = vunpack.c.l.b16 %v2223
    %v2314 = vunpack.c.h.b16 %v2223
    %v2315 = vunpack.c.l.b16 %v2224
    %v2316 = vunpack.c.h.b16 %v2224
    %v2317 = vunpack.c.l.b16 %v2225
    %v2318 = vunpack.c.h.b16 %v2225
    %v2319 = vunpack.c.l.b16 %v2226
    %v2320 = vunpack.c.h.b16 %v2226
    %v2321 = vunpack.c.l.b16 %v2227
    %v2322 = vunpack.c.h.b16 %v2227
    %v2323 = vunpack.c.l.b16 %v2228
    %v2324 = vunpack.c.h.b16 %v2228
    %v2325 = vunpack.c.l.b16 %v2229
    %v2326 = vunpack.c.h.b16 %v2229
    %v2327 = vunpack.c.l.b16 %v2230
    %v2328 = vunpack.c.h.b16 %v2230
    %v2329 = vunpack.c.l.b16 %v2231
    %v2330 = vunpack.c.h.b16 %v2231
    %v2331 = vunpack.c.l.b16 %v2232
    %v2332 = vunpack.c.h.b16 %v2232
    %v2333 = vunpack.c.l.b16 %v2233
    %v2334 = vunpack.c.h.b16 %v2233
    %v2335 = vunpack.c.l.b16 %v2234
    %v2336 = vunpack.c.h.b16 %v2234
    %v2337 = vunpack.c.l.b16 %v2235
    %v2338 = vunpack.c.h.b16 %v2235
    %v2339 = vunpack.c.l.b16 %v2236
    %v2340 = vunpack.c.h.b16 %v2236
    %v2341 = vunpack.c.l.b16 %v2237
    %v2342 = vunpack.c.h.b16 %v2237
    %v2343 = vunpack.c.l.b16 %v2238
    %v2344 = vunpack.c.h.b16 %v2238
    %v2345 = vpack.c.b16 %v2285, %v2281
    %v2346 = vpack.c.b16 %v2286, %v2282
    %v2347 = vpack.c.b16 %v2287, %v2283
    %v2348 = vpack.c.b16 %v2288, %v2284
    %v2349 = vpack.c.b16 %v2293, %v2289
    %v2350 = vpack.c.b16 %v2294, %v2290
    %v2351 = vpack.c.b16 %v2295, %v2291
    %v2352 = vpack.c.b16 %v2296, %v2292
    %v2353 = vpack.c.b16 %v2301, %v2297
    %v2354 = vpack.c.b16 %v2302, %v2298
    %v2355 = vpack.c.b16 %v2303, %v2299
    %v2356 = vpack.c.b16 %v2304, %v2300
    %v2357 = vpack.c.b16 %v2309, %v2305
    %v2358 = vpack.c.b16 %v2310, %v2306
    %v2359 = vpack.c.b16 %v2311, %v2307
    %v2360 = vpack.c.b16 %v2312, %v2308
    %v2361 = vpack.c.b16 %v2317, %v2313
    %v2362 = vpack.c.b16 %v2318, %v2314
    %v2363 = vpack.c.b16 %v2319, %v2315
    %v2364 = vpack.c.b16 %v2320, %v2316
    %v2365 = vpack.c.b16 %v2325, %v2321
    %v2366 = vpack.c.b16 %v2326, %v2322
    %v2367 = vpack.c.b16 %v2327, %v2323
    %v2368 = vpack.c.b16 %v2328, %v2324
    %v2369 = vpack.c.b16 %v2333, %v2329
    %v2370 = vpack.c.b16 %v2334, %v2330
    %v2371 = vpack.c.b16 %v2335, %v2331
    %v2372 = vpack.c.b16 %v2336, %v2332
    %v2373 = vpack.c.b16 %v2341, %v2337
    %v2374 = vpack.c.b16 %v2342, %v2338
    %v2375 = vpack.c.b16 %v2343, %v2339
    %v2376 = vpack.c.b16 %v2344, %v2340
    %2409 = vmatpush.bf16.msra.mxu0 %v2373
    %2410 = vmatpush.bf16.msra.mxu0 %v2369
    %2411 = vmatpush.bf16.msra.mxu0 %v2365
    %2412 = vmatpush.bf16.msra.mxu0 %v2361
    %2413 = vmatpush.bf16.msra.mxu0 %v2357
    %2414 = vmatpush.bf16.msra.mxu0 %v2353
    %2415 = vmatpush.bf16.msra.mxu0 %v2349
    %2416 = vmatpush.bf16.msra.mxu0 %v2345
    %2417 = vmatmul.bf16.gmra.mxu0 %v2203
    %v2418 = vpop.f32.mrf.mxu0
    %v2419 = vadd.f32 %v2241, %v2418
    %v2420 = vpop.f32.mrf.mxu0
    %v2421 = vadd.f32 %v2241, %v2420
    %2422 = vmatmul.bf16.gmra.mxu0 %v2204
    %v2423 = vpop.f32.mrf.mxu0
    %v2424 = vadd.f32 %v2241, %v2423
    %v2425 = vpop.f32.mrf.mxu0
    %v2426 = vadd.f32 %v2241, %v2425
    %2427 = vmatmul.bf16.gmra.mxu0 %v2205
    %v2428 = vpop.f32.mrf.mxu0
    %v2429 = vadd.f32 %v2241, %v2428
    %v2430 = vpop.f32.mrf.mxu0
    %v2431 = vadd.f32 %v2241, %v2430
    %2432 = vmatmul.bf16.gmra.mxu0 %v2206
    %v2433 = vpop.f32.mrf.mxu0
    %v2434 = vadd.f32 %v2241, %v2433
    %v2435 = vpop.f32.mrf.mxu0
    %v2436 = vadd.f32 %v2241, %v2435
    %2437 = vdwg.mxu0
    %2438 = vmatpush.bf16.msra.mxu0 %v2374
    %2439 = vmatpush.bf16.msra.mxu0 %v2370
    %2440 = vmatpush.bf16.msra.mxu0 %v2366
    %2441 = vmatpush.bf16.msra.mxu0 %v2362
    %2442 = vmatpush.bf16.msra.mxu0 %v2358
    %2443 = vmatpush.bf16.msra.mxu0 %v2354
    %2444 = vmatpush.bf16.msra.mxu0 %v2350
    %2445 = vmatpush.bf16.msra.mxu0 %v2346
    %2446 = vmatmul.bf16.gmra.mxu0 %v2203
    %v2447 = vpop.f32.mrf.mxu0
    %v2448 = vadd.f32 %v2242, %v2447
    %v2449 = vpop.f32.mrf.mxu0
    %v2450 = vadd.f32 %v2242, %v2449
    %2451 = vmatmul.bf16.gmra.mxu0 %v2204
    %v2452 = vpop.f32.mrf.mxu0
    %v2453 = vadd.f32 %v2242, %v2452
    %v2454 = vpop.f32.mrf.mxu0
    %v2455 = vadd.f32 %v2242, %v2454
    %2456 = vmatmul.bf16.gmra.mxu0 %v2205
    %v2457 = vpop.f32.mrf.mxu0
    %v2458 = vadd.f32 %v2242, %v2457
    %v2459 = vpop.f32.mrf.mxu0
    %v2460 = vadd.f32 %v2242, %v2459
    %2461 = vmatmul.bf16.gmra.mxu0 %v2206
    %v2462 = vpop.f32.mrf.mxu0
    %v2463 = vadd.f32 %v2242, %v2462
    %v2464 = vpop.f32.mrf.mxu0
    %v2465 = vadd.f32 %v2242, %v2464
    %2466 = vdwg.mxu0
    %2467 = vmatpush.bf16.msra.mxu0 %v2375
    %2468 = vmatpush.bf16.msra.mxu0 %v2371
    %2469 = vmatpush.bf16.msra.mxu0 %v2367
    %2470 = vmatpush.bf16.msra.mxu0 %v2363
    %2471 = vmatpush.bf16.msra.mxu0 %v2359
    %2472 = vmatpush.bf16.msra.mxu0 %v2355
    %2473 = vmatpush.bf16.msra.mxu0 %v2351
    %2474 = vmatpush.bf16.msra.mxu0 %v2347
    %2475 = vmatmul.bf16.gmra.mxu0 %v2203
    %v2476 = vpop.f32.mrf.mxu0
    %v2477 = vadd.f32 %v2243, %v2476
    %v2478 = vpop.f32.mrf.mxu0
    %v2479 = vadd.f32 %v2243, %v2478
    %2480 = vmatmul.bf16.gmra.mxu0 %v2204
    %v2481 = vpop.f32.mrf.mxu0
    %v2482 = vadd.f32 %v2243, %v2481
    %v2483 = vpop.f32.mrf.mxu0
    %v2484 = vadd.f32 %v2243, %v2483
    %2485 = vmatmul.bf16.gmra.mxu0 %v2205
    %v2486 = vpop.f32.mrf.mxu0
    %v2487 = vadd.f32 %v2243, %v2486
    %v2488 = vpop.f32.mrf.mxu0
    %v2489 = vadd.f32 %v2243, %v2488
    %2490 = vmatmul.bf16.gmra.mxu0 %v2206
    %v2491 = vpop.f32.mrf.mxu0
    %v2492 = vadd.f32 %v2243, %v2491
    %v2493 = vpop.f32.mrf.mxu0
    %v2494 = vadd.f32 %v2243, %v2493
    %2495 = vdwg.mxu0
    %2496 = vmatpush.bf16.msra.mxu0 %v2376
    %2497 = vmatpush.bf16.msra.mxu0 %v2372
    %2498 = vmatpush.bf16.msra.mxu0 %v2368
    %2499 = vmatpush.bf16.msra.mxu0 %v2364
    %2500 = vmatpush.bf16.msra.mxu0 %v2360
    %2501 = vmatpush.bf16.msra.mxu0 %v2356
    %2502 = vmatpush.bf16.msra.mxu0 %v2352
    %2503 = vmatpush.bf16.msra.mxu0 %v2348
    %2504 = vmatmul.bf16.gmra.mxu0 %v2203
    %v2505 = vpop.f32.mrf.mxu0
    %v2506 = vadd.f32 %v2244, %v2505
    %v2507 = vpop.f32.mrf.mxu0
    %v2508 = vadd.f32 %v2244, %v2507
    %2509 = vmatmul.bf16.gmra.mxu0 %v2204
    %v2510 = vpop.f32.mrf.mxu0
    %v2511 = vadd.f32 %v2244, %v2510
    %v2512 = vpop.f32.mrf.mxu0
    %v2513 = vadd.f32 %v2244, %v2512
    %2514 = vmatmul.bf16.gmra.mxu0 %v2205
    %v2515 = vpop.f32.mrf.mxu0
    %v2516 = vadd.f32 %v2244, %v2515
    %v2517 = vpop.f32.mrf.mxu0
    %v2518 = vadd.f32 %v2244, %v2517
    %2519 = vmatmul.bf16.gmra.mxu0 %v2206
    %v2520 = vpop.f32.mrf.mxu0
    %v2521 = vadd.f32 %v2244, %v2520
    %v2522 = vpop.f32.mrf.mxu0
    %v2523 = vadd.f32 %v2244, %v2522
    %2524 = vdwg.mxu0
    %v2525 = vmul.f32 %v2419, 0.5
    %v2526 = vmul.f32 %v2448, 0.5
    %v2527 = vmul.f32 %v2477, 0.5
    %v2528 = vmul.f32 %v2506, 0.5
    %v2529 = vmul.f32 %v2421, 0.5
    %v2530 = vmul.f32 %v2450, 0.5
    %v2531 = vmul.f32 %v2479, 0.5
    %v2532 = vmul.f32 %v2508, 0.5
    %v2533 = vmul.f32 %v2424, 0.5
    %v2534 = vmul.f32 %v2453, 0.5
    %v2535 = vmul.f32 %v2482, 0.5
    %v2536 = vmul.f32 %v2511, 0.5
    %v2537 = vmul.f32 %v2426, 0.5
    %v2538 = vmul.f32 %v2455, 0.5
    %v2539 = vmul.f32 %v2484, 0.5
    %v2540 = vmul.f32 %v2513, 0.5
    %v2541 = vmul.f32 %v2429, 0.5
    %v2542 = vmul.f32 %v2458, 0.5
    %v2543 = vmul.f32 %v2487, 0.5
    %v2544 = vmul.f32 %v2516, 0.5
    %v2545 = vmul.f32 %v2431, 0.5
    %v2546 = vmul.f32 %v2460, 0.5
    %v2547 = vmul.f32 %v2489, 0.5
    %v2548 = vmul.f32 %v2518, 0.5
    %v2549 = vmul.f32 %v2434, 0.5
    %v2550 = vmul.f32 %v2463, 0.5
    %v2551 = vmul.f32 %v2492, 0.5
    %v2552 = vmul.f32 %v2521, 0.5
    %v2553 = vmul.f32 %v2436, 0.5
    %v2554 = vmul.f32 %v2465, 0.5
    %v2555 = vmul.f32 %v2494, 0.5
    %v2556 = vmul.f32 %v2523, 0.5
    %v2557 = vmul.f32 %v2419, 0.70710677
    %v2558 = vmul.f32 %v2448, 0.70710677
    %v2559 = vmul.f32 %v2477, 0.70710677
    %v2560 = vmul.f32 %v2506, 0.70710677
    %v2561 = vmul.f32 %v2421, 0.70710677
    %v2562 = vmul.f32 %v2450, 0.70710677
    %v2563 = vmul.f32 %v2479, 0.70710677
    %v2564 = vmul.f32 %v2508, 0.70710677
    %v2565 = vmul.f32 %v2424, 0.70710677
    %v2566 = vmul.f32 %v2453, 0.70710677
    %v2567 = vmul.f32 %v2482, 0.70710677
    %v2568 = vmul.f32 %v2511, 0.70710677
    %v2569 = vmul.f32 %v2426, 0.70710677
    %v2570 = vmul.f32 %v2455, 0.70710677
    %v2571 = vmul.f32 %v2484, 0.70710677
    %v2572 = vmul.f32 %v2513, 0.70710677
    %v2573 = vmul.f32 %v2429, 0.70710677
    %v2574 = vmul.f32 %v2458, 0.70710677
    %v2575 = vmul.f32 %v2487, 0.70710677
    %v2576 = vmul.f32 %v2516, 0.70710677
    %v2577 = vmul.f32 %v2431, 0.70710677
    %v2578 = vmul.f32 %v2460, 0.70710677
    %v2579 = vmul.f32 %v2489, 0.70710677
    %v2580 = vmul.f32 %v2518, 0.70710677
    %v2581 = vmul.f32 %v2434, 0.70710677
    %v2582 = vmul.f32 %v2463, 0.70710677
    %v2583 = vmul.f32 %v2492, 0.70710677
    %v2584 = vmul.f32 %v2521, 0.70710677
    %v2585 = vmul.f32 %v2436, 0.70710677
    %v2586 = vmul.f32 %v2465, 0.70710677
    %v2587 = vmul.f32 %v2494, 0.70710677
    %v2588 = vmul.f32 %v2523, 0.70710677
    %v2589 = vmul.f32 %v2557, %v2557
    %v2590 = vmin.f32 16.0, %v2589
    %v2591 = vmul.f32 %v2590, 2.1237322e-06
    %v2592 = vadd.f32 %v2591, 0.00028619796
    %v2593 = vmul.f32 %v2590, %v2592
    %v2594 = vadd.f32 %v2593, 0.0036580483
    %v2595 = vmul.f32 %v2590, %v2594
    %v2596 = vadd.f32 %v2595, 0.05243302
    %v2597 = vmul.f32 %v2590, %v2596
    %v2598 = vadd.f32 %v2597, 0.18741608
    %v2599 = vmul.f32 %v2590, %v2598
    %v2600 = vadd.f32 %v2599, 1.1283791
    %v2601 = vmul.f32 %v2557, %v2600
    %v2602 = vmul.f32 %v2590, 3.8918573e-05
    %v2603 = vadd.f32 %v2602, 0.001143296
    %v2604 = vmul.f32 %v2590, %v2603
    %v2605 = vadd.f32 %v2604, 0.014752088
    %v2606 = vmul.f32 %v2590, %v2605
    %v2607 = vadd.f32 %v2606, 0.112945676
    %v2608 = vmul.f32 %v2590, %v2607
    %v2609 = vadd.f32 %v2608, 0.4994258
    %v2610 = vmul.f32 %v2590, %v2609
    %v2611 = vadd.f32 %v2610, 1.0
    %v2612 = vrcp.pop %v2611
    %v2613 = vmul.f32 %v2611, %v2612
    %v2614 = vsub.f32 1.0, %v2613
    %v2615 = vmul.f32 %v2612, %v2614
    %v2616 = vadd.f32 %v2612, %v2615
    %vm2617 = vweird.f32 %v2611
    %vm2618 = vweird.f32 %v2612
    %vm2619 = vmor %vm2617, %vm2618
    %v2620 = vsel %vm2619, %v2612, %v2616
    %v2621 = vand.u32 2147483647, %v2611
    %vm2622 = vcmp.eq.f32.partialorder %v2621, 8.507059e+37
    %v2623 = vand.u32 %v2611, 2147483648
    %v2624 = vor.u32 1.1754944e-38, %v2623
    %v2625 = vsel %vm2622, %v2624, %v2620
    %v2626 = vmul.f32 %v2601, %v2625
    %v2627 = vmin.f32 %v2626, 1.0
    %v2628 = vmax.f32 %v2627, -1.0
    %v2629 = vmul.f32 %v2558, %v2558
    %v2630 = vmin.f32 16.0, %v2629
    %v2631 = vmul.f32 %v2630, 2.1237322e-06
    %v2632 = vadd.f32 %v2631, 0.00028619796
    %v2633 = vmul.f32 %v2630, %v2632
    %v2634 = vadd.f32 %v2633, 0.0036580483
    %v2635 = vmul.f32 %v2630, %v2634
    %v2636 = vadd.f32 %v2635, 0.05243302
    %v2637 = vmul.f32 %v2630, %v2636
    %v2638 = vadd.f32 %v2637, 0.18741608
    %v2639 = vmul.f32 %v2630, %v2638
    %v2640 = vadd.f32 %v2639, 1.1283791
    %v2641 = vmul.f32 %v2558, %v2640
    %v2642 = vmul.f32 %v2630, 3.8918573e-05
    %v2643 = vadd.f32 %v2642, 0.001143296
    %v2644 = vmul.f32 %v2630, %v2643
    %v2645 = vadd.f32 %v2644, 0.014752088
    %v2646 = vmul.f32 %v2630, %v2645
    %v2647 = vadd.f32 %v2646, 0.112945676
    %v2648 = vmul.f32 %v2630, %v2647
    %v2649 = vadd.f32 %v2648, 0.4994258
    %v2650 = vmul.f32 %v2630, %v2649
    %v2651 = vadd.f32 %v2650, 1.0
    %v2652 = vrcp.pop %v2651
    %v2653 = vmul.f32 %v2651, %v2652
    %v2654 = vsub.f32 1.0, %v2653
    %v2655 = vmul.f32 %v2652, %v2654
    %v2656 = vadd.f32 %v2652, %v2655
    %vm2657 = vweird.f32 %v2651
    %vm2658 = vweird.f32 %v2652
    %vm2659 = vmor %vm2657, %vm2658
    %v2660 = vsel %vm2659, %v2652, %v2656
    %v2661 = vand.u32 2147483647, %v2651
    %vm2662 = vcmp.eq.f32.partialorder %v2661, 8.507059e+37
    %v2663 = vand.u32 %v2651, 2147483648
    %v2664 = vor.u32 1.1754944e-38, %v2663
    %v2665 = vsel %vm2662, %v2664, %v2660
    %v2666 = vmul.f32 %v2641, %v2665
    %v2667 = vmin.f32 %v2666, 1.0
    %v2668 = vmax.f32 %v2667, -1.0
    %v2669 = vmul.f32 %v2559, %v2559
    %v2670 = vmin.f32 16.0, %v2669
    %v2671 = vmul.f32 %v2670, 2.1237322e-06
    %v2672 = vadd.f32 %v2671, 0.00028619796
    %v2673 = vmul.f32 %v2670, %v2672
    %v2674 = vadd.f32 %v2673, 0.0036580483
    %v2675 = vmul.f32 %v2670, %v2674
    %v2676 = vadd.f32 %v2675, 0.05243302
    %v2677 = vmul.f32 %v2670, %v2676
    %v2678 = vadd.f32 %v2677, 0.18741608
    %v2679 = vmul.f32 %v2670, %v2678
    %v2680 = vadd.f32 %v2679, 1.1283791
    %v2681 = vmul.f32 %v2559, %v2680
    %v2682 = vmul.f32 %v2670, 3.8918573e-05
    %v2683 = vadd.f32 %v2682, 0.001143296
    %v2684 = vmul.f32 %v2670, %v2683
    %v2685 = vadd.f32 %v2684, 0.014752088
    %v2686 = vmul.f32 %v2670, %v2685
    %v2687 = vadd.f32 %v2686, 0.112945676
    %v2688 = vmul.f32 %v2670, %v2687
    %v2689 = vadd.f32 %v2688, 0.4994258
    %v2690 = vmul.f32 %v2670, %v2689
    %v2691 = vadd.f32 %v2690, 1.0
    %v2692 = vrcp.pop %v2691
    %v2693 = vmul.f32 %v2691, %v2692
    %v2694 = vsub.f32 1.0, %v2693
    %v2695 = vmul.f32 %v2692, %v2694
    %v2696 = vadd.f32 %v2692, %v2695
    %vm2697 = vweird.f32 %v2691
    %vm2698 = vweird.f32 %v2692
    %vm2699 = vmor %vm2697, %vm2698
    %v2700 = vsel %vm2699, %v2692, %v2696
    %v2701 = vand.u32 2147483647, %v2691
    %vm2702 = vcmp.eq.f32.partialorder %v2701, 8.507059e+37
    %v2703 = vand.u32 %v2691, 2147483648
    %v2704 = vor.u32 1.1754944e-38, %v2703
    %v2705 = vsel %vm2702, %v2704, %v2700
    %v2706 = vmul.f32 %v2681, %v2705
    %v2707 = vmin.f32 %v2706, 1.0
    %v2708 = vmax.f32 %v2707, -1.0
    %v2709 = vmul.f32 %v2560, %v2560
    %v2710 = vmin.f32 16.0, %v2709
    %v2711 = vmul.f32 %v2710, 2.1237322e-06
    %v2712 = vadd.f32 %v2711, 0.00028619796
    %v2713 = vmul.f32 %v2710, %v2712
    %v2714 = vadd.f32 %v2713, 0.0036580483
    %v2715 = vmul.f32 %v2710, %v2714
    %v2716 = vadd.f32 %v2715, 0.05243302
    %v2717 = vmul.f32 %v2710, %v2716
    %v2718 = vadd.f32 %v2717, 0.18741608
    %v2719 = vmul.f32 %v2710, %v2718
    %v2720 = vadd.f32 %v2719, 1.1283791
    %v2721 = vmul.f32 %v2560, %v2720
    %v2722 = vmul.f32 %v2710, 3.8918573e-05
    %v2723 = vadd.f32 %v2722, 0.001143296
    %v2724 = vmul.f32 %v2710, %v2723
    %v2725 = vadd.f32 %v2724, 0.014752088
    %v2726 = vmul.f32 %v2710, %v2725
    %v2727 = vadd.f32 %v2726, 0.112945676
    %v2728 = vmul.f32 %v2710, %v2727
    %v2729 = vadd.f32 %v2728, 0.4994258
    %v2730 = vmul.f32 %v2710, %v2729
    %v2731 = vadd.f32 %v2730, 1.0
    %v2732 = vrcp.pop %v2731
    %v2733 = vmul.f32 %v2731, %v2732
    %v2734 = vsub.f32 1.0, %v2733
    %v2735 = vmul.f32 %v2732, %v2734
    %v2736 = vadd.f32 %v2732, %v2735
    %vm2737 = vweird.f32 %v2731
    %vm2738 = vweird.f32 %v2732
    %vm2739 = vmor %vm2737, %vm2738
    %v2740 = vsel %vm2739, %v2732, %v2736
    %v2741 = vand.u32 2147483647, %v2731
    %vm2742 = vcmp.eq.f32.partialorder %v2741, 8.507059e+37
    %v2743 = vand.u32 %v2731, 2147483648
    %v2744 = vor.u32 1.1754944e-38, %v2743
    %v2745 = vsel %vm2742, %v2744, %v2740
    %v2746 = vmul.f32 %v2721, %v2745
    %v2747 = vmin.f32 %v2746, 1.0
    %v2748 = vmax.f32 %v2747, -1.0
    %v2749 = vmul.f32 %v2561, %v2561
    %v2750 = vmin.f32 16.0, %v2749
    %v2751 = vmul.f32 %v2750, 2.1237322e-06
    %v2752 = vadd.f32 %v2751, 0.00028619796
    %v2753 = vmul.f32 %v2750, %v2752
    %v2754 = vadd.f32 %v2753, 0.0036580483
    %v2755 = vmul.f32 %v2750, %v2754
    %v2756 = vadd.f32 %v2755, 0.05243302
    %v2757 = vmul.f32 %v2750, %v2756
    %v2758 = vadd.f32 %v2757, 0.18741608
    %v2759 = vmul.f32 %v2750, %v2758
    %v2760 = vadd.f32 %v2759, 1.1283791
    %v2761 = vmul.f32 %v2561, %v2760
    %v2762 = vmul.f32 %v2750, 3.8918573e-05
    %v2763 = vadd.f32 %v2762, 0.001143296
    %v2764 = vmul.f32 %v2750, %v2763
    %v2765 = vadd.f32 %v2764, 0.014752088
    %v2766 = vmul.f32 %v2750, %v2765
    %v2767 = vadd.f32 %v2766, 0.112945676
    %v2768 = vmul.f32 %v2750, %v2767
    %v2769 = vadd.f32 %v2768, 0.4994258
    %v2770 = vmul.f32 %v2750, %v2769
    %v2771 = vadd.f32 %v2770, 1.0
    %v2772 = vrcp.pop %v2771
    %v2773 = vmul.f32 %v2771, %v2772
    %v2774 = vsub.f32 1.0, %v2773
    %v2775 = vmul.f32 %v2772, %v2774
    %v2776 = vadd.f32 %v2772, %v2775
    %vm2777 = vweird.f32 %v2771
    %vm2778 = vweird.f32 %v2772
    %vm2779 = vmor %vm2777, %vm2778
    %v2780 = vsel %vm2779, %v2772, %v2776
    %v2781 = vand.u32 2147483647, %v2771
    %vm2782 = vcmp.eq.f32.partialorder %v2781, 8.507059e+37
    %v2783 = vand.u32 %v2771, 2147483648
    %v2784 = vor.u32 1.1754944e-38, %v2783
    %v2785 = vsel %vm2782, %v2784, %v2780
    %v2786 = vmul.f32 %v2761, %v2785
    %v2787 = vmin.f32 %v2786, 1.0
    %v2788 = vmax.f32 %v2787, -1.0
    %v2789 = vmul.f32 %v2562, %v2562
    %v2790 = vmin.f32 16.0, %v2789
    %v2791 = vmul.f32 %v2790, 2.1237322e-06
    %v2792 = vadd.f32 %v2791, 0.00028619796
    %v2793 = vmul.f32 %v2790, %v2792
    %v2794 = vadd.f32 %v2793, 0.0036580483
    %v2795 = vmul.f32 %v2790, %v2794
    %v2796 = vadd.f32 %v2795, 0.05243302
    %v2797 = vmul.f32 %v2790, %v2796
    %v2798 = vadd.f32 %v2797, 0.18741608
    %v2799 = vmul.f32 %v2790, %v2798
    %v2800 = vadd.f32 %v2799, 1.1283791
    %v2801 = vmul.f32 %v2562, %v2800
    %v2802 = vmul.f32 %v2790, 3.8918573e-05
    %v2803 = vadd.f32 %v2802, 0.001143296
    %v2804 = vmul.f32 %v2790, %v2803
    %v2805 = vadd.f32 %v2804, 0.014752088
    %v2806 = vmul.f32 %v2790, %v2805
    %v2807 = vadd.f32 %v2806, 0.112945676
    %v2808 = vmul.f32 %v2790, %v2807
    %v2809 = vadd.f32 %v2808, 0.4994258
    %v2810 = vmul.f32 %v2790, %v2809
    %v2811 = vadd.f32 %v2810, 1.0
    %v2812 = vrcp.pop %v2811
    %v2813 = vmul.f32 %v2811, %v2812
    %v2814 = vsub.f32 1.0, %v2813
    %v2815 = vmul.f32 %v2812, %v2814
    %v2816 = vadd.f32 %v2812, %v2815
    %vm2817 = vweird.f32 %v2811
    %vm2818 = vweird.f32 %v2812
    %vm2819 = vmor %vm2817, %vm2818
    %v2820 = vsel %vm2819, %v2812, %v2816
    %v2821 = vand.u32 2147483647, %v2811
    %vm2822 = vcmp.eq.f32.partialorder %v2821, 8.507059e+37
    %v2823 = vand.u32 %v2811, 2147483648
    %v2824 = vor.u32 1.1754944e-38, %v2823
    %v2825 = vsel %vm2822, %v2824, %v2820
    %v2826 = vmul.f32 %v2801, %v2825
    %v2827 = vmin.f32 %v2826, 1.0
    %v2828 = vmax.f32 %v2827, -1.0
    %v2829 = vmul.f32 %v2563, %v2563
    %v2830 = vmin.f32 16.0, %v2829
    %v2831 = vmul.f32 %v2830, 2.1237322e-06
    %v2832 = vadd.f32 %v2831, 0.00028619796
    %v2833 = vmul.f32 %v2830, %v2832
    %v2834 = vadd.f32 %v2833, 0.0036580483
    %v2835 = vmul.f32 %v2830, %v2834
    %v2836 = vadd.f32 %v2835, 0.05243302
    %v2837 = vmul.f32 %v2830, %v2836
    %v2838 = vadd.f32 %v2837, 0.18741608
    %v2839 = vmul.f32 %v2830, %v2838
    %v2840 = vadd.f32 %v2839, 1.1283791
    %v2841 = vmul.f32 %v2563, %v2840
    %v2842 = vmul.f32 %v2830, 3.8918573e-05
    %v2843 = vadd.f32 %v2842, 0.001143296
    %v2844 = vmul.f32 %v2830, %v2843
    %v2845 = vadd.f32 %v2844, 0.014752088
    %v2846 = vmul.f32 %v2830, %v2845
    %v2847 = vadd.f32 %v2846, 0.112945676
    %v2848 = vmul.f32 %v2830, %v2847
    %v2849 = vadd.f32 %v2848, 0.4994258
    %v2850 = vmul.f32 %v2830, %v2849
    %v2851 = vadd.f32 %v2850, 1.0
    %v2852 = vrcp.pop %v2851
    %v2853 = vmul.f32 %v2851, %v2852
    %v2854 = vsub.f32 1.0, %v2853
    %v2855 = vmul.f32 %v2852, %v2854
    %v2856 = vadd.f32 %v2852, %v2855
    %vm2857 = vweird.f32 %v2851
    %vm2858 = vweird.f32 %v2852
    %vm2859 = vmor %vm2857, %vm2858
    %v2860 = vsel %vm2859, %v2852, %v2856
    %v2861 = vand.u32 2147483647, %v2851
    %vm2862 = vcmp.eq.f32.partialorder %v2861, 8.507059e+37
    %v2863 = vand.u32 %v2851, 2147483648
    %v2864 = vor.u32 1.1754944e-38, %v2863
    %v2865 = vsel %vm2862, %v2864, %v2860
    %v2866 = vmul.f32 %v2841, %v2865
    %v2867 = vmin.f32 %v2866, 1.0
    %v2868 = vmax.f32 %v2867, -1.0
    %v2869 = vmul.f32 %v2564, %v2564
    %v2870 = vmin.f32 16.0, %v2869
    %v2871 = vmul.f32 %v2870, 2.1237322e-06
    %v2872 = vadd.f32 %v2871, 0.00028619796
    %v2873 = vmul.f32 %v2870, %v2872
    %v2874 = vadd.f32 %v2873, 0.0036580483
    %v2875 = vmul.f32 %v2870, %v2874
    %v2876 = vadd.f32 %v2875, 0.05243302
    %v2877 = vmul.f32 %v2870, %v2876
    %v2878 = vadd.f32 %v2877, 0.18741608
    %v2879 = vmul.f32 %v2870, %v2878
    %v2880 = vadd.f32 %v2879, 1.1283791
    %v2881 = vmul.f32 %v2564, %v2880
    %v2882 = vmul.f32 %v2870, 3.8918573e-05
    %v2883 = vadd.f32 %v2882, 0.001143296
    %v2884 = vmul.f32 %v2870, %v2883
    %v2885 = vadd.f32 %v2884, 0.014752088
    %v2886 = vmul.f32 %v2870, %v2885
    %v2887 = vadd.f32 %v2886, 0.112945676
    %v2888 = vmul.f32 %v2870, %v2887
    %v2889 = vadd.f32 %v2888, 0.4994258
    %v2890 = vmul.f32 %v2870, %v2889
    %v2891 = vadd.f32 %v2890, 1.0
    %v2892 = vrcp.pop %v2891
    %v2893 = vmul.f32 %v2891, %v2892
    %v2894 = vsub.f32 1.0, %v2893
    %v2895 = vmul.f32 %v2892, %v2894
    %v2896 = vadd.f32 %v2892, %v2895
    %vm2897 = vweird.f32 %v2891
    %vm2898 = vweird.f32 %v2892
    %vm2899 = vmor %vm2897, %vm2898
    %v2900 = vsel %vm2899, %v2892, %v2896
    %v2901 = vand.u32 2147483647, %v2891
    %vm2902 = vcmp.eq.f32.partialorder %v2901, 8.507059e+37
    %v2903 = vand.u32 %v2891, 2147483648
    %v2904 = vor.u32 1.1754944e-38, %v2903
    %v2905 = vsel %vm2902, %v2904, %v2900
    %v2906 = vmul.f32 %v2881, %v2905
    %v2907 = vmin.f32 %v2906, 1.0
    %v2908 = vmax.f32 %v2907, -1.0
    %v2909 = vmul.f32 %v2565, %v2565
    %v2910 = vmin.f32 16.0, %v2909
    %v2911 = vmul.f32 %v2910, 2.1237322e-06
    %v2912 = vadd.f32 %v2911, 0.00028619796
    %v2913 = vmul.f32 %v2910, %v2912
    %v2914 = vadd.f32 %v2913, 0.0036580483
    %v2915 = vmul.f32 %v2910, %v2914
    %v2916 = vadd.f32 %v2915, 0.05243302
    %v2917 = vmul.f32 %v2910, %v2916
    %v2918 = vadd.f32 %v2917, 0.18741608
    %v2919 = vmul.f32 %v2910, %v2918
    %v2920 = vadd.f32 %v2919, 1.1283791
    %v2921 = vmul.f32 %v2565, %v2920
    %v2922 = vmul.f32 %v2910, 3.8918573e-05
    %v2923 = vadd.f32 %v2922, 0.001143296
    %v2924 = vmul.f32 %v2910, %v2923
    %v2925 = vadd.f32 %v2924, 0.014752088
    %v2926 = vmul.f32 %v2910, %v2925
    %v2927 = vadd.f32 %v2926, 0.112945676
    %v2928 = vmul.f32 %v2910, %v2927
    %v2929 = vadd.f32 %v2928, 0.4994258
    %v2930 = vmul.f32 %v2910, %v2929
    %v2931 = vadd.f32 %v2930, 1.0
    %v2932 = vrcp.pop %v2931
    %v2933 = vmul.f32 %v2931, %v2932
    %v2934 = vsub.f32 1.0, %v2933
    %v2935 = vmul.f32 %v2932, %v2934
    %v2936 = vadd.f32 %v2932, %v2935
    %vm2937 = vweird.f32 %v2931
    %vm2938 = vweird.f32 %v2932
    %vm2939 = vmor %vm2937, %vm2938
    %v2940 = vsel %vm2939, %v2932, %v2936
    %v2941 = vand.u32 2147483647, %v2931
    %vm2942 = vcmp.eq.f32.partialorder %v2941, 8.507059e+37
    %v2943 = vand.u32 %v2931, 2147483648
    %v2944 = vor.u32 1.1754944e-38, %v2943
    %v2945 = vsel %vm2942, %v2944, %v2940
    %v2946 = vmul.f32 %v2921, %v2945
    %v2947 = vmin.f32 %v2946, 1.0
    %v2948 = vmax.f32 %v2947, -1.0
    %v2949 = vmul.f32 %v2566, %v2566
    %v2950 = vmin.f32 16.0, %v2949
    %v2951 = vmul.f32 %v2950, 2.1237322e-06
    %v2952 = vadd.f32 %v2951, 0.00028619796
    %v2953 = vmul.f32 %v2950, %v2952
    %v2954 = vadd.f32 %v2953, 0.0036580483
    %v2955 = vmul.f32 %v2950, %v2954
    %v2956 = vadd.f32 %v2955, 0.05243302
    %v2957 = vmul.f32 %v2950, %v2956
    %v2958 = vadd.f32 %v2957, 0.18741608
    %v2959 = vmul.f32 %v2950, %v2958
    %v2960 = vadd.f32 %v2959, 1.1283791
    %v2961 = vmul.f32 %v2566, %v2960
    %v2962 = vmul.f32 %v2950, 3.8918573e-05
    %v2963 = vadd.f32 %v2962, 0.001143296
    %v2964 = vmul.f32 %v2950, %v2963
    %v2965 = vadd.f32 %v2964, 0.014752088
    %v2966 = vmul.f32 %v2950, %v2965
    %v2967 = vadd.f32 %v2966, 0.112945676
    %v2968 = vmul.f32 %v2950, %v2967
    %v2969 = vadd.f32 %v2968, 0.4994258
    %v2970 = vmul.f32 %v2950, %v2969
    %v2971 = vadd.f32 %v2970, 1.0
    %v2972 = vrcp.pop %v2971
    %v2973 = vmul.f32 %v2971, %v2972
    %v2974 = vsub.f32 1.0, %v2973
    %v2975 = vmul.f32 %v2972, %v2974
    %v2976 = vadd.f32 %v2972, %v2975
    %vm2977 = vweird.f32 %v2971
    %vm2978 = vweird.f32 %v2972
    %vm2979 = vmor %vm2977, %vm2978
    %v2980 = vsel %vm2979, %v2972, %v2976
    %v2981 = vand.u32 2147483647, %v2971
    %vm2982 = vcmp.eq.f32.partialorder %v2981, 8.507059e+37
    %v2983 = vand.u32 %v2971, 2147483648
    %v2984 = vor.u32 1.1754944e-38, %v2983
    %v2985 = vsel %vm2982, %v2984, %v2980
    %v2986 = vmul.f32 %v2961, %v2985
    %v2987 = vmin.f32 %v2986, 1.0
    %v2988 = vmax.f32 %v2987, -1.0
    %v2989 = vmul.f32 %v2567, %v2567
    %v2990 = vmin.f32 16.0, %v2989
    %v2991 = vmul.f32 %v2990, 2.1237322e-06
    %v2992 = vadd.f32 %v2991, 0.00028619796
    %v2993 = vmul.f32 %v2990, %v2992
    %v2994 = vadd.f32 %v2993, 0.0036580483
    %v2995 = vmul.f32 %v2990, %v2994
    %v2996 = vadd.f32 %v2995, 0.05243302
    %v2997 = vmul.f32 %v2990, %v2996
    %v2998 = vadd.f32 %v2997, 0.18741608
    %v2999 = vmul.f32 %v2990, %v2998
    %v3000 = vadd.f32 %v2999, 1.1283791
    %v3001 = vmul.f32 %v2567, %v3000
    %v3002 = vmul.f32 %v2990, 3.8918573e-05
    %v3003 = vadd.f32 %v3002, 0.001143296
    %v3004 = vmul.f32 %v2990, %v3003
    %v3005 = vadd.f32 %v3004, 0.014752088
    %v3006 = vmul.f32 %v2990, %v3005
    %v3007 = vadd.f32 %v3006, 0.112945676
    %v3008 = vmul.f32 %v2990, %v3007
    %v3009 = vadd.f32 %v3008, 0.4994258
    %v3010 = vmul.f32 %v2990, %v3009
    %v3011 = vadd.f32 %v3010, 1.0
    %v3012 = vrcp.pop %v3011
    %v3013 = vmul.f32 %v3011, %v3012
    %v3014 = vsub.f32 1.0, %v3013
    %v3015 = vmul.f32 %v3012, %v3014
    %v3016 = vadd.f32 %v3012, %v3015
    %vm3017 = vweird.f32 %v3011
    %vm3018 = vweird.f32 %v3012
    %vm3019 = vmor %vm3017, %vm3018
    %v3020 = vsel %vm3019, %v3012, %v3016
    %v3021 = vand.u32 2147483647, %v3011
    %vm3022 = vcmp.eq.f32.partialorder %v3021, 8.507059e+37
    %v3023 = vand.u32 %v3011, 2147483648
    %v3024 = vor.u32 1.1754944e-38, %v3023
    %v3025 = vsel %vm3022, %v3024, %v3020
    %v3026 = vmul.f32 %v3001, %v3025
    %v3027 = vmin.f32 %v3026, 1.0
    %v3028 = vmax.f32 %v3027, -1.0
    %v3029 = vmul.f32 %v2568, %v2568
    %v3030 = vmin.f32 16.0, %v3029
    %v3031 = vmul.f32 %v3030, 2.1237322e-06
    %v3032 = vadd.f32 %v3031, 0.00028619796
    %v3033 = vmul.f32 %v3030, %v3032
    %v3034 = vadd.f32 %v3033, 0.0036580483
    %v3035 = vmul.f32 %v3030, %v3034
    %v3036 = vadd.f32 %v3035, 0.05243302
    %v3037 = vmul.f32 %v3030, %v3036
    %v3038 = vadd.f32 %v3037, 0.18741608
    %v3039 = vmul.f32 %v3030, %v3038
    %v3040 = vadd.f32 %v3039, 1.1283791
    %v3041 = vmul.f32 %v2568, %v3040
    %v3042 = vmul.f32 %v3030, 3.8918573e-05
    %v3043 = vadd.f32 %v3042, 0.001143296
    %v3044 = vmul.f32 %v3030, %v3043
    %v3045 = vadd.f32 %v3044, 0.014752088
    %v3046 = vmul.f32 %v3030, %v3045
    %v3047 = vadd.f32 %v3046, 0.112945676
    %v3048 = vmul.f32 %v3030, %v3047
    %v3049 = vadd.f32 %v3048, 0.4994258
    %v3050 = vmul.f32 %v3030, %v3049
    %v3051 = vadd.f32 %v3050, 1.0
    %v3052 = vrcp.pop %v3051
    %v3053 = vmul.f32 %v3051, %v3052
    %v3054 = vsub.f32 1.0, %v3053
    %v3055 = vmul.f32 %v3052, %v3054
    %v3056 = vadd.f32 %v3052, %v3055
    %vm3057 = vweird.f32 %v3051
    %vm3058 = vweird.f32 %v3052
    %vm3059 = vmor %vm3057, %vm3058
    %v3060 = vsel %vm3059, %v3052, %v3056
    %v3061 = vand.u32 2147483647, %v3051
    %vm3062 = vcmp.eq.f32.partialorder %v3061, 8.507059e+37
    %v3063 = vand.u32 %v3051, 2147483648
    %v3064 = vor.u32 1.1754944e-38, %v3063
    %v3065 = vsel %vm3062, %v3064, %v3060
    %v3066 = vmul.f32 %v3041, %v3065
    %v3067 = vmin.f32 %v3066, 1.0
    %v3068 = vmax.f32 %v3067, -1.0
    %v3069 = vmul.f32 %v2569, %v2569
    %v3070 = vmin.f32 16.0, %v3069
    %v3071 = vmul.f32 %v3070, 2.1237322e-06
    %v3072 = vadd.f32 %v3071, 0.00028619796
    %v3073 = vmul.f32 %v3070, %v3072
    %v3074 = vadd.f32 %v3073, 0.0036580483
    %v3075 = vmul.f32 %v3070, %v3074
    %v3076 = vadd.f32 %v3075, 0.05243302
    %v3077 = vmul.f32 %v3070, %v3076
    %v3078 = vadd.f32 %v3077, 0.18741608
    %v3079 = vmul.f32 %v3070, %v3078
    %v3080 = vadd.f32 %v3079, 1.1283791
    %v3081 = vmul.f32 %v2569, %v3080
    %v3082 = vmul.f32 %v3070, 3.8918573e-05
    %v3083 = vadd.f32 %v3082, 0.001143296
    %v3084 = vmul.f32 %v3070, %v3083
    %v3085 = vadd.f32 %v3084, 0.014752088
    %v3086 = vmul.f32 %v3070, %v3085
    %v3087 = vadd.f32 %v3086, 0.112945676
    %v3088 = vmul.f32 %v3070, %v3087
    %v3089 = vadd.f32 %v3088, 0.4994258
    %v3090 = vmul.f32 %v3070, %v3089
    %v3091 = vadd.f32 %v3090, 1.0
    %v3092 = vrcp.pop %v3091
    %v3093 = vmul.f32 %v3091, %v3092
    %v3094 = vsub.f32 1.0, %v3093
    %v3095 = vmul.f32 %v3092, %v3094
    %v3096 = vadd.f32 %v3092, %v3095
    %vm3097 = vweird.f32 %v3091
    %vm3098 = vweird.f32 %v3092
    %vm3099 = vmor %vm3097, %vm3098
    %v3100 = vsel %vm3099, %v3092, %v3096
    %v3101 = vand.u32 2147483647, %v3091
    %vm3102 = vcmp.eq.f32.partialorder %v3101, 8.507059e+37
    %v3103 = vand.u32 %v3091, 2147483648
    %v3104 = vor.u32 1.1754944e-38, %v3103
    %v3105 = vsel %vm3102, %v3104, %v3100
    %v3106 = vmul.f32 %v3081, %v3105
    %v3107 = vmin.f32 %v3106, 1.0
    %v3108 = vmax.f32 %v3107, -1.0
    %v3109 = vmul.f32 %v2570, %v2570
    %v3110 = vmin.f32 16.0, %v3109
    %v3111 = vmul.f32 %v3110, 2.1237322e-06
    %v3112 = vadd.f32 %v3111, 0.00028619796
    %v3113 = vmul.f32 %v3110, %v3112
    %v3114 = vadd.f32 %v3113, 0.0036580483
    %v3115 = vmul.f32 %v3110, %v3114
    %v3116 = vadd.f32 %v3115, 0.05243302
    %v3117 = vmul.f32 %v3110, %v3116
    %v3118 = vadd.f32 %v3117, 0.18741608
    %v3119 = vmul.f32 %v3110, %v3118
    %v3120 = vadd.f32 %v3119, 1.1283791
    %v3121 = vmul.f32 %v2570, %v3120
    %v3122 = vmul.f32 %v3110, 3.8918573e-05
    %v3123 = vadd.f32 %v3122, 0.001143296
    %v3124 = vmul.f32 %v3110, %v3123
    %v3125 = vadd.f32 %v3124, 0.014752088
    %v3126 = vmul.f32 %v3110, %v3125
    %v3127 = vadd.f32 %v3126, 0.112945676
    %v3128 = vmul.f32 %v3110, %v3127
    %v3129 = vadd.f32 %v3128, 0.4994258
    %v3130 = vmul.f32 %v3110, %v3129
    %v3131 = vadd.f32 %v3130, 1.0
    %v3132 = vrcp.pop %v3131
    %v3133 = vmul.f32 %v3131, %v3132
    %v3134 = vsub.f32 1.0, %v3133
    %v3135 = vmul.f32 %v3132, %v3134
    %v3136 = vadd.f32 %v3132, %v3135
    %vm3137 = vweird.f32 %v3131
    %vm3138 = vweird.f32 %v3132
    %vm3139 = vmor %vm3137, %vm3138
    %v3140 = vsel %vm3139, %v3132, %v3136
    %v3141 = vand.u32 2147483647, %v3131
    %vm3142 = vcmp.eq.f32.partialorder %v3141, 8.507059e+37
    %v3143 = vand.u32 %v3131, 2147483648
    %v3144 = vor.u32 1.1754944e-38, %v3143
    %v3145 = vsel %vm3142, %v3144, %v3140
    %v3146 = vmul.f32 %v3121, %v3145
    %v3147 = vmin.f32 %v3146, 1.0
    %v3148 = vmax.f32 %v3147, -1.0
    %v3149 = vmul.f32 %v2571, %v2571
    %v3150 = vmin.f32 16.0, %v3149
    %v3151 = vmul.f32 %v3150, 2.1237322e-06
    %v3152 = vadd.f32 %v3151, 0.00028619796
    %v3153 = vmul.f32 %v3150, %v3152
    %v3154 = vadd.f32 %v3153, 0.0036580483
    %v3155 = vmul.f32 %v3150, %v3154
    %v3156 = vadd.f32 %v3155, 0.05243302
    %v3157 = vmul.f32 %v3150, %v3156
    %v3158 = vadd.f32 %v3157, 0.18741608
    %v3159 = vmul.f32 %v3150, %v3158
    %v3160 = vadd.f32 %v3159, 1.1283791
    %v3161 = vmul.f32 %v2571, %v3160
    %v3162 = vmul.f32 %v3150, 3.8918573e-05
    %v3163 = vadd.f32 %v3162, 0.001143296
    %v3164 = vmul.f32 %v3150, %v3163
    %v3165 = vadd.f32 %v3164, 0.014752088
    %v3166 = vmul.f32 %v3150, %v3165
    %v3167 = vadd.f32 %v3166, 0.112945676
    %v3168 = vmul.f32 %v3150, %v3167
    %v3169 = vadd.f32 %v3168, 0.4994258
    %v3170 = vmul.f32 %v3150, %v3169
    %v3171 = vadd.f32 %v3170, 1.0
    %v3172 = vrcp.pop %v3171
    %v3173 = vmul.f32 %v3171, %v3172
    %v3174 = vsub.f32 1.0, %v3173
    %v3175 = vmul.f32 %v3172, %v3174
    %v3176 = vadd.f32 %v3172, %v3175
    %vm3177 = vweird.f32 %v3171
    %vm3178 = vweird.f32 %v3172
    %vm3179 = vmor %vm3177, %vm3178
    %v3180 = vsel %vm3179, %v3172, %v3176
    %v3181 = vand.u32 2147483647, %v3171
    %vm3182 = vcmp.eq.f32.partialorder %v3181, 8.507059e+37
    %v3183 = vand.u32 %v3171, 2147483648
    %v3184 = vor.u32 1.1754944e-38, %v3183
    %v3185 = vsel %vm3182, %v3184, %v3180
    %v3186 = vmul.f32 %v3161, %v3185
    %v3187 = vmin.f32 %v3186, 1.0
    %v3188 = vmax.f32 %v3187, -1.0
    %v3189 = vmul.f32 %v2572, %v2572
    %v3190 = vmin.f32 16.0, %v3189
    %v3191 = vmul.f32 %v3190, 2.1237322e-06
    %v3192 = vadd.f32 %v3191, 0.00028619796
    %v3193 = vmul.f32 %v3190, %v3192
    %v3194 = vadd.f32 %v3193, 0.0036580483
    %v3195 = vmul.f32 %v3190, %v3194
    %v3196 = vadd.f32 %v3195, 0.05243302
    %v3197 = vmul.f32 %v3190, %v3196
    %v3198 = vadd.f32 %v3197, 0.18741608
    %v3199 = vmul.f32 %v3190, %v3198
    %v3200 = vadd.f32 %v3199, 1.1283791
    %v3201 = vmul.f32 %v2572, %v3200
    %v3202 = vmul.f32 %v3190, 3.8918573e-05
    %v3203 = vadd.f32 %v3202, 0.001143296
    %v3204 = vmul.f32 %v3190, %v3203
    %v3205 = vadd.f32 %v3204, 0.014752088
    %v3206 = vmul.f32 %v3190, %v3205
    %v3207 = vadd.f32 %v3206, 0.112945676
    %v3208 = vmul.f32 %v3190, %v3207
    %v3209 = vadd.f32 %v3208, 0.4994258
    %v3210 = vmul.f32 %v3190, %v3209
    %v3211 = vadd.f32 %v3210, 1.0
    %v3212 = vrcp.pop %v3211
    %v3213 = vmul.f32 %v3211, %v3212
    %v3214 = vsub.f32 1.0, %v3213
    %v3215 = vmul.f32 %v3212, %v3214
    %v3216 = vadd.f32 %v3212, %v3215
    %vm3217 = vweird.f32 %v3211
    %vm3218 = vweird.f32 %v3212
    %vm3219 = vmor %vm3217, %vm3218
    %v3220 = vsel %vm3219, %v3212, %v3216
    %v3221 = vand.u32 2147483647, %v3211
    %vm3222 = vcmp.eq.f32.partialorder %v3221, 8.507059e+37
    %v3223 = vand.u32 %v3211, 2147483648
    %v3224 = vor.u32 1.1754944e-38, %v3223
    %v3225 = vsel %vm3222, %v3224, %v3220
    %v3226 = vmul.f32 %v3201, %v3225
    %v3227 = vmin.f32 %v3226, 1.0
    %v3228 = vmax.f32 %v3227, -1.0
    %v3229 = vmul.f32 %v2573, %v2573
    %v3230 = vmin.f32 16.0, %v3229
    %v3231 = vmul.f32 %v3230, 2.1237322e-06
    %v3232 = vadd.f32 %v3231, 0.00028619796
    %v3233 = vmul.f32 %v3230, %v3232
    %v3234 = vadd.f32 %v3233, 0.0036580483
    %v3235 = vmul.f32 %v3230, %v3234
    %v3236 = vadd.f32 %v3235, 0.05243302
    %v3237 = vmul.f32 %v3230, %v3236
    %v3238 = vadd.f32 %v3237, 0.18741608
    %v3239 = vmul.f32 %v3230, %v3238
    %v3240 = vadd.f32 %v3239, 1.1283791
    %v3241 = vmul.f32 %v2573, %v3240
    %v3242 = vmul.f32 %v3230, 3.8918573e-05
    %v3243 = vadd.f32 %v3242, 0.001143296
    %v3244 = vmul.f32 %v3230, %v3243
    %v3245 = vadd.f32 %v3244, 0.014752088
    %v3246 = vmul.f32 %v3230, %v3245
    %v3247 = vadd.f32 %v3246, 0.112945676
    %v3248 = vmul.f32 %v3230, %v3247
    %v3249 = vadd.f32 %v3248, 0.4994258
    %v3250 = vmul.f32 %v3230, %v3249
    %v3251 = vadd.f32 %v3250, 1.0
    %v3252 = vrcp.pop %v3251
    %v3253 = vmul.f32 %v3251, %v3252
    %v3254 = vsub.f32 1.0, %v3253
    %v3255 = vmul.f32 %v3252, %v3254
    %v3256 = vadd.f32 %v3252, %v3255
    %vm3257 = vweird.f32 %v3251
    %vm3258 = vweird.f32 %v3252
    %vm3259 = vmor %vm3257, %vm3258
    %v3260 = vsel %vm3259, %v3252, %v3256
    %v3261 = vand.u32 2147483647, %v3251
    %vm3262 = vcmp.eq.f32.partialorder %v3261, 8.507059e+37
    %v3263 = vand.u32 %v3251, 2147483648
    %v3264 = vor.u32 1.1754944e-38, %v3263
    %v3265 = vsel %vm3262, %v3264, %v3260
    %v3266 = vmul.f32 %v3241, %v3265
    %v3267 = vmin.f32 %v3266, 1.0
    %v3268 = vmax.f32 %v3267, -1.0
    %v3269 = vmul.f32 %v2574, %v2574
    %v3270 = vmin.f32 16.0, %v3269
    %v3271 = vmul.f32 %v3270, 2.1237322e-06
    %v3272 = vadd.f32 %v3271, 0.00028619796
    %v3273 = vmul.f32 %v3270, %v3272
    %v3274 = vadd.f32 %v3273, 0.0036580483
    %v3275 = vmul.f32 %v3270, %v3274
    %v3276 = vadd.f32 %v3275, 0.05243302
    %v3277 = vmul.f32 %v3270, %v3276
    %v3278 = vadd.f32 %v3277, 0.18741608
    %v3279 = vmul.f32 %v3270, %v3278
    %v3280 = vadd.f32 %v3279, 1.1283791
    %v3281 = vmul.f32 %v2574, %v3280
    %v3282 = vmul.f32 %v3270, 3.8918573e-05
    %v3283 = vadd.f32 %v3282, 0.001143296
    %v3284 = vmul.f32 %v3270, %v3283
    %v3285 = vadd.f32 %v3284, 0.014752088
    %v3286 = vmul.f32 %v3270, %v3285
    %v3287 = vadd.f32 %v3286, 0.112945676
    %v3288 = vmul.f32 %v3270, %v3287
    %v3289 = vadd.f32 %v3288, 0.4994258
    %v3290 = vmul.f32 %v3270, %v3289
    %v3291 = vadd.f32 %v3290, 1.0
    %v3292 = vrcp.pop %v3291
    %v3293 = vmul.f32 %v3291, %v3292
    %v3294 = vsub.f32 1.0, %v3293
    %v3295 = vmul.f32 %v3292, %v3294
    %v3296 = vadd.f32 %v3292, %v3295
    %vm3297 = vweird.f32 %v3291
    %vm3298 = vweird.f32 %v3292
    %vm3299 = vmor %vm3297, %vm3298
    %v3300 = vsel %vm3299, %v3292, %v3296
    %v3301 = vand.u32 2147483647, %v3291
    %vm3302 = vcmp.eq.f32.partialorder %v3301, 8.507059e+37
    %v3303 = vand.u32 %v3291, 2147483648
    %v3304 = vor.u32 1.1754944e-38, %v3303
    %v3305 = vsel %vm3302, %v3304, %v3300
    %v3306 = vmul.f32 %v3281, %v3305
    %v3307 = vmin.f32 %v3306, 1.0
    %v3308 = vmax.f32 %v3307, -1.0
    %v3309 = vmul.f32 %v2575, %v2575
    %v3310 = vmin.f32 16.0, %v3309
    %v3311 = vmul.f32 %v3310, 2.1237322e-06
    %v3312 = vadd.f32 %v3311, 0.00028619796
    %v3313 = vmul.f32 %v3310, %v3312
    %v3314 = vadd.f32 %v3313, 0.0036580483
    %v3315 = vmul.f32 %v3310, %v3314
    %v3316 = vadd.f32 %v3315, 0.05243302
    %v3317 = vmul.f32 %v3310, %v3316
    %v3318 = vadd.f32 %v3317, 0.18741608
    %v3319 = vmul.f32 %v3310, %v3318
    %v3320 = vadd.f32 %v3319, 1.1283791
    %v3321 = vmul.f32 %v2575, %v3320
    %v3322 = vmul.f32 %v3310, 3.8918573e-05
    %v3323 = vadd.f32 %v3322, 0.001143296
    %v3324 = vmul.f32 %v3310, %v3323
    %v3325 = vadd.f32 %v3324, 0.014752088
    %v3326 = vmul.f32 %v3310, %v3325
    %v3327 = vadd.f32 %v3326, 0.112945676
    %v3328 = vmul.f32 %v3310, %v3327
    %v3329 = vadd.f32 %v3328, 0.4994258
    %v3330 = vmul.f32 %v3310, %v3329
    %v3331 = vadd.f32 %v3330, 1.0
    %v3332 = vrcp.pop %v3331
    %v3333 = vmul.f32 %v3331, %v3332
    %v3334 = vsub.f32 1.0, %v3333
    %v3335 = vmul.f32 %v3332, %v3334
    %v3336 = vadd.f32 %v3332, %v3335
    %vm3337 = vweird.f32 %v3331
    %vm3338 = vweird.f32 %v3332
    %vm3339 = vmor %vm3337, %vm3338
    %v3340 = vsel %vm3339, %v3332, %v3336
    %v3341 = vand.u32 2147483647, %v3331
    %vm3342 = vcmp.eq.f32.partialorder %v3341, 8.507059e+37
    %v3343 = vand.u32 %v3331, 2147483648
    %v3344 = vor.u32 1.1754944e-38, %v3343
    %v3345 = vsel %vm3342, %v3344, %v3340
    %v3346 = vmul.f32 %v3321, %v3345
    %v3347 = vmin.f32 %v3346, 1.0
    %v3348 = vmax.f32 %v3347, -1.0
    %v3349 = vmul.f32 %v2576, %v2576
    %v3350 = vmin.f32 16.0, %v3349
    %v3351 = vmul.f32 %v3350, 2.1237322e-06
    %v3352 = vadd.f32 %v3351, 0.00028619796
    %v3353 = vmul.f32 %v3350, %v3352
    %v3354 = vadd.f32 %v3353, 0.0036580483
    %v3355 = vmul.f32 %v3350, %v3354
    %v3356 = vadd.f32 %v3355, 0.05243302
    %v3357 = vmul.f32 %v3350, %v3356
    %v3358 = vadd.f32 %v3357, 0.18741608
    %v3359 = vmul.f32 %v3350, %v3358
    %v3360 = vadd.f32 %v3359, 1.1283791
    %v3361 = vmul.f32 %v2576, %v3360
    %v3362 = vmul.f32 %v3350, 3.8918573e-05
    %v3363 = vadd.f32 %v3362, 0.001143296
    %v3364 = vmul.f32 %v3350, %v3363
    %v3365 = vadd.f32 %v3364, 0.014752088
    %v3366 = vmul.f32 %v3350, %v3365
    %v3367 = vadd.f32 %v3366, 0.112945676
    %v3368 = vmul.f32 %v3350, %v3367
    %v3369 = vadd.f32 %v3368, 0.4994258
    %v3370 = vmul.f32 %v3350, %v3369
    %v3371 = vadd.f32 %v3370, 1.0
    %v3372 = vrcp.pop %v3371
    %v3373 = vmul.f32 %v3371, %v3372
    %v3374 = vsub.f32 1.0, %v3373
    %v3375 = vmul.f32 %v3372, %v3374
    %v3376 = vadd.f32 %v3372, %v3375
    %vm3377 = vweird.f32 %v3371
    %vm3378 = vweird.f32 %v3372
    %vm3379 = vmor %vm3377, %vm3378
    %v3380 = vsel %vm3379, %v3372, %v3376
    %v3381 = vand.u32 2147483647, %v3371
    %vm3382 = vcmp.eq.f32.partialorder %v3381, 8.507059e+37
    %v3383 = vand.u32 %v3371, 2147483648
    %v3384 = vor.u32 1.1754944e-38, %v3383
    %v3385 = vsel %vm3382, %v3384, %v3380
    %v3386 = vmul.f32 %v3361, %v3385
    %v3387 = vmin.f32 %v3386, 1.0
    %v3388 = vmax.f32 %v3387, -1.0
    %v3389 = vmul.f32 %v2577, %v2577
    %v3390 = vmin.f32 16.0, %v3389
    %v3391 = vmul.f32 %v3390, 2.1237322e-06
    %v3392 = vadd.f32 %v3391, 0.00028619796
    %v3393 = vmul.f32 %v3390, %v3392
    %v3394 = vadd.f32 %v3393, 0.0036580483
    %v3395 = vmul.f32 %v3390, %v3394
    %v3396 = vadd.f32 %v3395, 0.05243302
    %v3397 = vmul.f32 %v3390, %v3396
    %v3398 = vadd.f32 %v3397, 0.18741608
    %v3399 = vmul.f32 %v3390, %v3398
    %v3400 = vadd.f32 %v3399, 1.1283791
    %v3401 = vmul.f32 %v2577, %v3400
    %v3402 = vmul.f32 %v3390, 3.8918573e-05
    %v3403 = vadd.f32 %v3402, 0.001143296
    %v3404 = vmul.f32 %v3390, %v3403
    %v3405 = vadd.f32 %v3404, 0.014752088
    %v3406 = vmul.f32 %v3390, %v3405
    %v3407 = vadd.f32 %v3406, 0.112945676
    %v3408 = vmul.f32 %v3390, %v3407
    %v3409 = vadd.f32 %v3408, 0.4994258
    %v3410 = vmul.f32 %v3390, %v3409
    %v3411 = vadd.f32 %v3410, 1.0
    %v3412 = vrcp.pop %v3411
    %v3413 = vmul.f32 %v3411, %v3412
    %v3414 = vsub.f32 1.0, %v3413
    %v3415 = vmul.f32 %v3412, %v3414
    %v3416 = vadd.f32 %v3412, %v3415
    %vm3417 = vweird.f32 %v3411
    %vm3418 = vweird.f32 %v3412
    %vm3419 = vmor %vm3417, %vm3418
    %v3420 = vsel %vm3419, %v3412, %v3416
    %v3421 = vand.u32 2147483647, %v3411
    %vm3422 = vcmp.eq.f32.partialorder %v3421, 8.507059e+37
    %v3423 = vand.u32 %v3411, 2147483648
    %v3424 = vor.u32 1.1754944e-38, %v3423
    %v3425 = vsel %vm3422, %v3424, %v3420
    %v3426 = vmul.f32 %v3401, %v3425
    %v3427 = vmin.f32 %v3426, 1.0
    %v3428 = vmax.f32 %v3427, -1.0
    %v3429 = vmul.f32 %v2578, %v2578
    %v3430 = vmin.f32 16.0, %v3429
    %v3431 = vmul.f32 %v3430, 2.1237322e-06
    %v3432 = vadd.f32 %v3431, 0.00028619796
    %v3433 = vmul.f32 %v3430, %v3432
    %v3434 = vadd.f32 %v3433, 0.0036580483
    %v3435 = vmul.f32 %v3430, %v3434
    %v3436 = vadd.f32 %v3435, 0.05243302
    %v3437 = vmul.f32 %v3430, %v3436
    %v3438 = vadd.f32 %v3437, 0.18741608
    %v3439 = vmul.f32 %v3430, %v3438
    %v3440 = vadd.f32 %v3439, 1.1283791
    %v3441 = vmul.f32 %v2578, %v3440
    %v3442 = vmul.f32 %v3430, 3.8918573e-05
    %v3443 = vadd.f32 %v3442, 0.001143296
    %v3444 = vmul.f32 %v3430, %v3443
    %v3445 = vadd.f32 %v3444, 0.014752088
    %v3446 = vmul.f32 %v3430, %v3445
    %v3447 = vadd.f32 %v3446, 0.112945676
    %v3448 = vmul.f32 %v3430, %v3447
    %v3449 = vadd.f32 %v3448, 0.4994258
    %v3450 = vmul.f32 %v3430, %v3449
    %v3451 = vadd.f32 %v3450, 1.0
    %v3452 = vrcp.pop %v3451
    %v3453 = vmul.f32 %v3451, %v3452
    %v3454 = vsub.f32 1.0, %v3453
    %v3455 = vmul.f32 %v3452, %v3454
    %v3456 = vadd.f32 %v3452, %v3455
    %vm3457 = vweird.f32 %v3451
    %vm3458 = vweird.f32 %v3452
    %vm3459 = vmor %vm3457, %vm3458
    %v3460 = vsel %vm3459, %v3452, %v3456
    %v3461 = vand.u32 2147483647, %v3451
    %vm3462 = vcmp.eq.f32.partialorder %v3461, 8.507059e+37
    %v3463 = vand.u32 %v3451, 2147483648
    %v3464 = vor.u32 1.1754944e-38, %v3463
    %v3465 = vsel %vm3462, %v3464, %v3460
    %v3466 = vmul.f32 %v3441, %v3465
    %v3467 = vmin.f32 %v3466, 1.0
    %v3468 = vmax.f32 %v3467, -1.0
    %v3469 = vmul.f32 %v2579, %v2579
    %v3470 = vmin.f32 16.0, %v3469
    %v3471 = vmul.f32 %v3470, 2.1237322e-06
    %v3472 = vadd.f32 %v3471, 0.00028619796
    %v3473 = vmul.f32 %v3470, %v3472
    %v3474 = vadd.f32 %v3473, 0.0036580483
    %v3475 = vmul.f32 %v3470, %v3474
    %v3476 = vadd.f32 %v3475, 0.05243302
    %v3477 = vmul.f32 %v3470, %v3476
    %v3478 = vadd.f32 %v3477, 0.18741608
    %v3479 = vmul.f32 %v3470, %v3478
    %v3480 = vadd.f32 %v3479, 1.1283791
    %v3481 = vmul.f32 %v2579, %v3480
    %v3482 = vmul.f32 %v3470, 3.8918573e-05
    %v3483 = vadd.f32 %v3482, 0.001143296
    %v3484 = vmul.f32 %v3470, %v3483
    %v3485 = vadd.f32 %v3484, 0.014752088
    %v3486 = vmul.f32 %v3470, %v3485
    %v3487 = vadd.f32 %v3486, 0.112945676
    %v3488 = vmul.f32 %v3470, %v3487
    %v3489 = vadd.f32 %v3488, 0.4994258
    %v3490 = vmul.f32 %v3470, %v3489
    %v3491 = vadd.f32 %v3490, 1.0
    %v3492 = vrcp.pop %v3491
    %v3493 = vmul.f32 %v3491, %v3492
    %v3494 = vsub.f32 1.0, %v3493
    %v3495 = vmul.f32 %v3492, %v3494
    %v3496 = vadd.f32 %v3492, %v3495
    %vm3497 = vweird.f32 %v3491
    %vm3498 = vweird.f32 %v3492
    %vm3499 = vmor %vm3497, %vm3498
    %v3500 = vsel %vm3499, %v3492, %v3496
    %v3501 = vand.u32 2147483647, %v3491
    %vm3502 = vcmp.eq.f32.partialorder %v3501, 8.507059e+37
    %v3503 = vand.u32 %v3491, 2147483648
    %v3504 = vor.u32 1.1754944e-38, %v3503
    %v3505 = vsel %vm3502, %v3504, %v3500
    %v3506 = vmul.f32 %v3481, %v3505
    %v3507 = vmin.f32 %v3506, 1.0
    %v3508 = vmax.f32 %v3507, -1.0
    %v3509 = vmul.f32 %v2580, %v2580
    %v3510 = vmin.f32 16.0, %v3509
    %v3511 = vmul.f32 %v3510, 2.1237322e-06
    %v3512 = vadd.f32 %v3511, 0.00028619796
    %v3513 = vmul.f32 %v3510, %v3512
    %v3514 = vadd.f32 %v3513, 0.0036580483
    %v3515 = vmul.f32 %v3510, %v3514
    %v3516 = vadd.f32 %v3515, 0.05243302
    %v3517 = vmul.f32 %v3510, %v3516
    %v3518 = vadd.f32 %v3517, 0.18741608
    %v3519 = vmul.f32 %v3510, %v3518
    %v3520 = vadd.f32 %v3519, 1.1283791
    %v3521 = vmul.f32 %v2580, %v3520
    %v3522 = vmul.f32 %v3510, 3.8918573e-05
    %v3523 = vadd.f32 %v3522, 0.001143296
    %v3524 = vmul.f32 %v3510, %v3523
    %v3525 = vadd.f32 %v3524, 0.014752088
    %v3526 = vmul.f32 %v3510, %v3525
    %v3527 = vadd.f32 %v3526, 0.112945676
    %v3528 = vmul.f32 %v3510, %v3527
    %v3529 = vadd.f32 %v3528, 0.4994258
    %v3530 = vmul.f32 %v3510, %v3529
    %v3531 = vadd.f32 %v3530, 1.0
    %v3532 = vrcp.pop %v3531
    %v3533 = vmul.f32 %v3531, %v3532
    %v3534 = vsub.f32 1.0, %v3533
    %v3535 = vmul.f32 %v3532, %v3534
    %v3536 = vadd.f32 %v3532, %v3535
    %vm3537 = vweird.f32 %v3531
    %vm3538 = vweird.f32 %v3532
    %vm3539 = vmor %vm3537, %vm3538
    %v3540 = vsel %vm3539, %v3532, %v3536
    %v3541 = vand.u32 2147483647, %v3531
    %vm3542 = vcmp.eq.f32.partialorder %v3541, 8.507059e+37
    %v3543 = vand.u32 %v3531, 2147483648
    %v3544 = vor.u32 1.1754944e-38, %v3543
    %v3545 = vsel %vm3542, %v3544, %v3540
    %v3546 = vmul.f32 %v3521, %v3545
    %v3547 = vmin.f32 %v3546, 1.0
    %v3548 = vmax.f32 %v3547, -1.0
    %v3549 = vmul.f32 %v2581, %v2581
    %v3550 = vmin.f32 16.0, %v3549
    %v3551 = vmul.f32 %v3550, 2.1237322e-06
    %v3552 = vadd.f32 %v3551, 0.00028619796
    %v3553 = vmul.f32 %v3550, %v3552
    %v3554 = vadd.f32 %v3553, 0.0036580483
    %v3555 = vmul.f32 %v3550, %v3554
    %v3556 = vadd.f32 %v3555, 0.05243302
    %v3557 = vmul.f32 %v3550, %v3556
    %v3558 = vadd.f32 %v3557, 0.18741608
    %v3559 = vmul.f32 %v3550, %v3558
    %v3560 = vadd.f32 %v3559, 1.1283791
    %v3561 = vmul.f32 %v2581, %v3560
    %v3562 = vmul.f32 %v3550, 3.8918573e-05
    %v3563 = vadd.f32 %v3562, 0.001143296
    %v3564 = vmul.f32 %v3550, %v3563
    %v3565 = vadd.f32 %v3564, 0.014752088
    %v3566 = vmul.f32 %v3550, %v3565
    %v3567 = vadd.f32 %v3566, 0.112945676
    %v3568 = vmul.f32 %v3550, %v3567
    %v3569 = vadd.f32 %v3568, 0.4994258
    %v3570 = vmul.f32 %v3550, %v3569
    %v3571 = vadd.f32 %v3570, 1.0
    %v3572 = vrcp.pop %v3571
    %v3573 = vmul.f32 %v3571, %v3572
    %v3574 = vsub.f32 1.0, %v3573
    %v3575 = vmul.f32 %v3572, %v3574
    %v3576 = vadd.f32 %v3572, %v3575
    %vm3577 = vweird.f32 %v3571
    %vm3578 = vweird.f32 %v3572
    %vm3579 = vmor %vm3577, %vm3578
    %v3580 = vsel %vm3579, %v3572, %v3576
    %v3581 = vand.u32 2147483647, %v3571
    %vm3582 = vcmp.eq.f32.partialorder %v3581, 8.507059e+37
    %v3583 = vand.u32 %v3571, 2147483648
    %v3584 = vor.u32 1.1754944e-38, %v3583
    %v3585 = vsel %vm3582, %v3584, %v3580
    %v3586 = vmul.f32 %v3561, %v3585
    %v3587 = vmin.f32 %v3586, 1.0
    %v3588 = vmax.f32 %v3587, -1.0
    %v3589 = vmul.f32 %v2582, %v2582
    %v3590 = vmin.f32 16.0, %v3589
    %v3591 = vmul.f32 %v3590, 2.1237322e-06
    %v3592 = vadd.f32 %v3591, 0.00028619796
    %v3593 = vmul.f32 %v3590, %v3592
    %v3594 = vadd.f32 %v3593, 0.0036580483
    %v3595 = vmul.f32 %v3590, %v3594
    %v3596 = vadd.f32 %v3595, 0.05243302
    %v3597 = vmul.f32 %v3590, %v3596
    %v3598 = vadd.f32 %v3597, 0.18741608
    %v3599 = vmul.f32 %v3590, %v3598
    %v3600 = vadd.f32 %v3599, 1.1283791
    %v3601 = vmul.f32 %v2582, %v3600
    %v3602 = vmul.f32 %v3590, 3.8918573e-05
    %v3603 = vadd.f32 %v3602, 0.001143296
    %v3604 = vmul.f32 %v3590, %v3603
    %v3605 = vadd.f32 %v3604, 0.014752088
    %v3606 = vmul.f32 %v3590, %v3605
    %v3607 = vadd.f32 %v3606, 0.112945676
    %v3608 = vmul.f32 %v3590, %v3607
    %v3609 = vadd.f32 %v3608, 0.4994258
    %v3610 = vmul.f32 %v3590, %v3609
    %v3611 = vadd.f32 %v3610, 1.0
    %v3612 = vrcp.pop %v3611
    %v3613 = vmul.f32 %v3611, %v3612
    %v3614 = vsub.f32 1.0, %v3613
    %v3615 = vmul.f32 %v3612, %v3614
    %v3616 = vadd.f32 %v3612, %v3615
    %vm3617 = vweird.f32 %v3611
    %vm3618 = vweird.f32 %v3612
    %vm3619 = vmor %vm3617, %vm3618
    %v3620 = vsel %vm3619, %v3612, %v3616
    %v3621 = vand.u32 2147483647, %v3611
    %vm3622 = vcmp.eq.f32.partialorder %v3621, 8.507059e+37
    %v3623 = vand.u32 %v3611, 2147483648
    %v3624 = vor.u32 1.1754944e-38, %v3623
    %v3625 = vsel %vm3622, %v3624, %v3620
    %v3626 = vmul.f32 %v3601, %v3625
    %v3627 = vmin.f32 %v3626, 1.0
    %v3628 = vmax.f32 %v3627, -1.0
    %v3629 = vmul.f32 %v2583, %v2583
    %v3630 = vmin.f32 16.0, %v3629
    %v3631 = vmul.f32 %v3630, 2.1237322e-06
    %v3632 = vadd.f32 %v3631, 0.00028619796
    %v3633 = vmul.f32 %v3630, %v3632
    %v3634 = vadd.f32 %v3633, 0.0036580483
    %v3635 = vmul.f32 %v3630, %v3634
    %v3636 = vadd.f32 %v3635, 0.05243302
    %v3637 = vmul.f32 %v3630, %v3636
    %v3638 = vadd.f32 %v3637, 0.18741608
    %v3639 = vmul.f32 %v3630, %v3638
    %v3640 = vadd.f32 %v3639, 1.1283791
    %v3641 = vmul.f32 %v2583, %v3640
    %v3642 = vmul.f32 %v3630, 3.8918573e-05
    %v3643 = vadd.f32 %v3642, 0.001143296
    %v3644 = vmul.f32 %v3630, %v3643
    %v3645 = vadd.f32 %v3644, 0.014752088
    %v3646 = vmul.f32 %v3630, %v3645
    %v3647 = vadd.f32 %v3646, 0.112945676
    %v3648 = vmul.f32 %v3630, %v3647
    %v3649 = vadd.f32 %v3648, 0.4994258
    %v3650 = vmul.f32 %v3630, %v3649
    %v3651 = vadd.f32 %v3650, 1.0
    %v3652 = vrcp.pop %v3651
    %v3653 = vmul.f32 %v3651, %v3652
    %v3654 = vsub.f32 1.0, %v3653
    %v3655 = vmul.f32 %v3652, %v3654
    %v3656 = vadd.f32 %v3652, %v3655
    %vm3657 = vweird.f32 %v3651
    %vm3658 = vweird.f32 %v3652
    %vm3659 = vmor %vm3657, %vm3658
    %v3660 = vsel %vm3659, %v3652, %v3656
    %v3661 = vand.u32 2147483647, %v3651
    %vm3662 = vcmp.eq.f32.partialorder %v3661, 8.507059e+37
    %v3663 = vand.u32 %v3651, 2147483648
    %v3664 = vor.u32 1.1754944e-38, %v3663
    %v3665 = vsel %vm3662, %v3664, %v3660
    %v3666 = vmul.f32 %v3641, %v3665
    %v3667 = vmin.f32 %v3666, 1.0
    %v3668 = vmax.f32 %v3667, -1.0
    %v3669 = vmul.f32 %v2584, %v2584
    %v3670 = vmin.f32 16.0, %v3669
    %v3671 = vmul.f32 %v3670, 2.1237322e-06
    %v3672 = vadd.f32 %v3671, 0.00028619796
    %v3673 = vmul.f32 %v3670, %v3672
    %v3674 = vadd.f32 %v3673, 0.0036580483
    %v3675 = vmul.f32 %v3670, %v3674
    %v3676 = vadd.f32 %v3675, 0.05243302
    %v3677 = vmul.f32 %v3670, %v3676
    %v3678 = vadd.f32 %v3677, 0.18741608
    %v3679 = vmul.f32 %v3670, %v3678
    %v3680 = vadd.f32 %v3679, 1.1283791
    %v3681 = vmul.f32 %v2584, %v3680
    %v3682 = vmul.f32 %v3670, 3.8918573e-05
    %v3683 = vadd.f32 %v3682, 0.001143296
    %v3684 = vmul.f32 %v3670, %v3683
    %v3685 = vadd.f32 %v3684, 0.014752088
    %v3686 = vmul.f32 %v3670, %v3685
    %v3687 = vadd.f32 %v3686, 0.112945676
    %v3688 = vmul.f32 %v3670, %v3687
    %v3689 = vadd.f32 %v3688, 0.4994258
    %v3690 = vmul.f32 %v3670, %v3689
    %v3691 = vadd.f32 %v3690, 1.0
    %v3692 = vrcp.pop %v3691
    %v3693 = vmul.f32 %v3691, %v3692
    %v3694 = vsub.f32 1.0, %v3693
    %v3695 = vmul.f32 %v3692, %v3694
    %v3696 = vadd.f32 %v3692, %v3695
    %vm3697 = vweird.f32 %v3691
    %vm3698 = vweird.f32 %v3692
    %vm3699 = vmor %vm3697, %vm3698
    %v3700 = vsel %vm3699, %v3692, %v3696
    %v3701 = vand.u32 2147483647, %v3691
    %vm3702 = vcmp.eq.f32.partialorder %v3701, 8.507059e+37
    %v3703 = vand.u32 %v3691, 2147483648
    %v3704 = vor.u32 1.1754944e-38, %v3703
    %v3705 = vsel %vm3702, %v3704, %v3700
    %v3706 = vmul.f32 %v3681, %v3705
    %v3707 = vmin.f32 %v3706, 1.0
    %v3708 = vmax.f32 %v3707, -1.0
    %v3709 = vmul.f32 %v2585, %v2585
    %v3710 = vmin.f32 16.0, %v3709
    %v3711 = vmul.f32 %v3710, 2.1237322e-06
    %v3712 = vadd.f32 %v3711, 0.00028619796
    %v3713 = vmul.f32 %v3710, %v3712
    %v3714 = vadd.f32 %v3713, 0.0036580483
    %v3715 = vmul.f32 %v3710, %v3714
    %v3716 = vadd.f32 %v3715, 0.05243302
    %v3717 = vmul.f32 %v3710, %v3716
    %v3718 = vadd.f32 %v3717, 0.18741608
    %v3719 = vmul.f32 %v3710, %v3718
    %v3720 = vadd.f32 %v3719, 1.1283791
    %v3721 = vmul.f32 %v2585, %v3720
    %v3722 = vmul.f32 %v3710, 3.8918573e-05
    %v3723 = vadd.f32 %v3722, 0.001143296
    %v3724 = vmul.f32 %v3710, %v3723
    %v3725 = vadd.f32 %v3724, 0.014752088
    %v3726 = vmul.f32 %v3710, %v3725
    %v3727 = vadd.f32 %v3726, 0.112945676
    %v3728 = vmul.f32 %v3710, %v3727
    %v3729 = vadd.f32 %v3728, 0.4994258
    %v3730 = vmul.f32 %v3710, %v3729
    %v3731 = vadd.f32 %v3730, 1.0
    %v3732 = vrcp.pop %v3731
    %v3733 = vmul.f32 %v3731, %v3732
    %v3734 = vsub.f32 1.0, %v3733
    %v3735 = vmul.f32 %v3732, %v3734
    %v3736 = vadd.f32 %v3732, %v3735
    %vm3737 = vweird.f32 %v3731
    %vm3738 = vweird.f32 %v3732
    %vm3739 = vmor %vm3737, %vm3738
    %v3740 = vsel %vm3739, %v3732, %v3736
    %v3741 = vand.u32 2147483647, %v3731
    %vm3742 = vcmp.eq.f32.partialorder %v3741, 8.507059e+37
    %v3743 = vand.u32 %v3731, 2147483648
    %v3744 = vor.u32 1.1754944e-38, %v3743
    %v3745 = vsel %vm3742, %v3744, %v3740
    %v3746 = vmul.f32 %v3721, %v3745
    %v3747 = vmin.f32 %v3746, 1.0
    %v3748 = vmax.f32 %v3747, -1.0
    %v3749 = vmul.f32 %v2586, %v2586
    %v3750 = vmin.f32 16.0, %v3749
    %v3751 = vmul.f32 %v3750, 2.1237322e-06
    %v3752 = vadd.f32 %v3751, 0.00028619796
    %v3753 = vmul.f32 %v3750, %v3752
    %v3754 = vadd.f32 %v3753, 0.0036580483
    %v3755 = vmul.f32 %v3750, %v3754
    %v3756 = vadd.f32 %v3755, 0.05243302
    %v3757 = vmul.f32 %v3750, %v3756
    %v3758 = vadd.f32 %v3757, 0.18741608
    %v3759 = vmul.f32 %v3750, %v3758
    %v3760 = vadd.f32 %v3759, 1.1283791
    %v3761 = vmul.f32 %v2586, %v3760
    %v3762 = vmul.f32 %v3750, 3.8918573e-05
    %v3763 = vadd.f32 %v3762, 0.001143296
    %v3764 = vmul.f32 %v3750, %v3763
    %v3765 = vadd.f32 %v3764, 0.014752088
    %v3766 = vmul.f32 %v3750, %v3765
    %v3767 = vadd.f32 %v3766, 0.112945676
    %v3768 = vmul.f32 %v3750, %v3767
    %v3769 = vadd.f32 %v3768, 0.4994258
    %v3770 = vmul.f32 %v3750, %v3769
    %v3771 = vadd.f32 %v3770, 1.0
    %v3772 = vrcp.pop %v3771
    %v3773 = vmul.f32 %v3771, %v3772
    %v3774 = vsub.f32 1.0, %v3773
    %v3775 = vmul.f32 %v3772, %v3774
    %v3776 = vadd.f32 %v3772, %v3775
    %vm3777 = vweird.f32 %v3771
    %vm3778 = vweird.f32 %v3772
    %vm3779 = vmor %vm3777, %vm3778
    %v3780 = vsel %vm3779, %v3772, %v3776
    %v3781 = vand.u32 2147483647, %v3771
    %vm3782 = vcmp.eq.f32.partialorder %v3781, 8.507059e+37
    %v3783 = vand.u32 %v3771, 2147483648
    %v3784 = vor.u32 1.1754944e-38, %v3783
    %v3785 = vsel %vm3782, %v3784, %v3780
    %v3786 = vmul.f32 %v3761, %v3785
    %v3787 = vmin.f32 %v3786, 1.0
    %v3788 = vmax.f32 %v3787, -1.0
    %v3789 = vmul.f32 %v2587, %v2587
    %v3790 = vmin.f32 16.0, %v3789
    %v3791 = vmul.f32 %v3790, 2.1237322e-06
    %v3792 = vadd.f32 %v3791, 0.00028619796
    %v3793 = vmul.f32 %v3790, %v3792
    %v3794 = vadd.f32 %v3793, 0.0036580483
    %v3795 = vmul.f32 %v3790, %v3794
    %v3796 = vadd.f32 %v3795, 0.05243302
    %v3797 = vmul.f32 %v3790, %v3796
    %v3798 = vadd.f32 %v3797, 0.18741608
    %v3799 = vmul.f32 %v3790, %v3798
    %v3800 = vadd.f32 %v3799, 1.1283791
    %v3801 = vmul.f32 %v2587, %v3800
    %v3802 = vmul.f32 %v3790, 3.8918573e-05
    %v3803 = vadd.f32 %v3802, 0.001143296
    %v3804 = vmul.f32 %v3790, %v3803
    %v3805 = vadd.f32 %v3804, 0.014752088
    %v3806 = vmul.f32 %v3790, %v3805
    %v3807 = vadd.f32 %v3806, 0.112945676
    %v3808 = vmul.f32 %v3790, %v3807
    %v3809 = vadd.f32 %v3808, 0.4994258
    %v3810 = vmul.f32 %v3790, %v3809
    %v3811 = vadd.f32 %v3810, 1.0
    %v3812 = vrcp.pop %v3811
    %v3813 = vmul.f32 %v3811, %v3812
    %v3814 = vsub.f32 1.0, %v3813
    %v3815 = vmul.f32 %v3812, %v3814
    %v3816 = vadd.f32 %v3812, %v3815
    %vm3817 = vweird.f32 %v3811
    %vm3818 = vweird.f32 %v3812
    %vm3819 = vmor %vm3817, %vm3818
    %v3820 = vsel %vm3819, %v3812, %v3816
    %v3821 = vand.u32 2147483647, %v3811
    %vm3822 = vcmp.eq.f32.partialorder %v3821, 8.507059e+37
    %v3823 = vand.u32 %v3811, 2147483648
    %v3824 = vor.u32 1.1754944e-38, %v3823
    %v3825 = vsel %vm3822, %v3824, %v3820
    %v3826 = vmul.f32 %v3801, %v3825
    %v3827 = vmin.f32 %v3826, 1.0
    %v3828 = vmax.f32 %v3827, -1.0
    %v3829 = vmul.f32 %v2588, %v2588
    %v3830 = vmin.f32 16.0, %v3829
    %v3831 = vmul.f32 %v3830, 2.1237322e-06
    %v3832 = vadd.f32 %v3831, 0.00028619796
    %v3833 = vmul.f32 %v3830, %v3832
    %v3834 = vadd.f32 %v3833, 0.0036580483
    %v3835 = vmul.f32 %v3830, %v3834
    %v3836 = vadd.f32 %v3835, 0.05243302
    %v3837 = vmul.f32 %v3830, %v3836
    %v3838 = vadd.f32 %v3837, 0.18741608
    %v3839 = vmul.f32 %v3830, %v3838
    %v3840 = vadd.f32 %v3839, 1.1283791
    %v3841 = vmul.f32 %v2588, %v3840
    %v3842 = vmul.f32 %v3830, 3.8918573e-05
    %v3843 = vadd.f32 %v3842, 0.001143296
    %v3844 = vmul.f32 %v3830, %v3843
    %v3845 = vadd.f32 %v3844, 0.014752088
    %v3846 = vmul.f32 %v3830, %v3845
    %v3847 = vadd.f32 %v3846, 0.112945676
    %v3848 = vmul.f32 %v3830, %v3847
    %v3849 = vadd.f32 %v3848, 0.4994258
    %v3850 = vmul.f32 %v3830, %v3849
    %v3851 = vadd.f32 %v3850, 1.0
    %v3852 = vrcp.pop %v3851
    %v3853 = vmul.f32 %v3851, %v3852
    %v3854 = vsub.f32 1.0, %v3853
    %v3855 = vmul.f32 %v3852, %v3854
    %v3856 = vadd.f32 %v3852, %v3855
    %vm3857 = vweird.f32 %v3851
    %vm3858 = vweird.f32 %v3852
    %vm3859 = vmor %vm3857, %vm3858
    %v3860 = vsel %vm3859, %v3852, %v3856
    %v3861 = vand.u32 2147483647, %v3851
    %vm3862 = vcmp.eq.f32.partialorder %v3861, 8.507059e+37
    %v3863 = vand.u32 %v3851, 2147483648
    %v3864 = vor.u32 1.1754944e-38, %v3863
    %v3865 = vsel %vm3862, %v3864, %v3860
    %v3866 = vmul.f32 %v3841, %v3865
    %v3867 = vmin.f32 %v3866, 1.0
    %v3868 = vmax.f32 %v3867, -1.0
    %v3869 = vadd.f32 %v2628, 1.0
    %v3870 = vadd.f32 %v2668, 1.0
    %v3871 = vadd.f32 %v2708, 1.0
    %v3872 = vadd.f32 %v2748, 1.0
    %v3873 = vadd.f32 %v2788, 1.0
    %v3874 = vadd.f32 %v2828, 1.0
    %v3875 = vadd.f32 %v2868, 1.0
    %v3876 = vadd.f32 %v2908, 1.0
    %v3877 = vadd.f32 %v2948, 1.0
    %v3878 = vadd.f32 %v2988, 1.0
    %v3879 = vadd.f32 %v3028, 1.0
    %v3880 = vadd.f32 %v3068, 1.0
    %v3881 = vadd.f32 %v3108, 1.0
    %v3882 = vadd.f32 %v3148, 1.0
    %v3883 = vadd.f32 %v3188, 1.0
    %v3884 = vadd.f32 %v3228, 1.0
    %v3885 = vadd.f32 %v3268, 1.0
    %v3886 = vadd.f32 %v3308, 1.0
    %v3887 = vadd.f32 %v3348, 1.0
    %v3888 = vadd.f32 %v3388, 1.0
    %v3889 = vadd.f32 %v3428, 1.0
    %v3890 = vadd.f32 %v3468, 1.0
    %v3891 = vadd.f32 %v3508, 1.0
    %v3892 = vadd.f32 %v3548, 1.0
    %v3893 = vadd.f32 %v3588, 1.0
    %v3894 = vadd.f32 %v3628, 1.0
    %v3895 = vadd.f32 %v3668, 1.0
    %v3896 = vadd.f32 %v3708, 1.0
    %v3897 = vadd.f32 %v3748, 1.0
    %v3898 = vadd.f32 %v3788, 1.0
    %v3899 = vadd.f32 %v3828, 1.0
    %v3900 = vadd.f32 %v3868, 1.0
    %v3901 = vmul.f32 %v2525, %v3869
    %v3902 = vmul.f32 %v2526, %v3870
    %v3903 = vmul.f32 %v2527, %v3871
    %v3904 = vmul.f32 %v2528, %v3872
    %v3905 = vmul.f32 %v2529, %v3873
    %v3906 = vmul.f32 %v2530, %v3874
    %v3907 = vmul.f32 %v2531, %v3875
    %v3908 = vmul.f32 %v2532, %v3876
    %v3909 = vmul.f32 %v2533, %v3877
    %v3910 = vmul.f32 %v2534, %v3878
    %v3911 = vmul.f32 %v2535, %v3879
    %v3912 = vmul.f32 %v2536, %v3880
    %v3913 = vmul.f32 %v2537, %v3881
    %v3914 = vmul.f32 %v2538, %v3882
    %v3915 = vmul.f32 %v2539, %v3883
    %v3916 = vmul.f32 %v2540, %v3884
    %v3917 = vmul.f32 %v2541, %v3885
    %v3918 = vmul.f32 %v2542, %v3886
    %v3919 = vmul.f32 %v2543, %v3887
    %v3920 = vmul.f32 %v2544, %v3888
    %v3921 = vmul.f32 %v2545, %v3889
    %v3922 = vmul.f32 %v2546, %v3890
    %v3923 = vmul.f32 %v2547, %v3891
    %v3924 = vmul.f32 %v2548, %v3892
    %v3925 = vmul.f32 %v2549, %v3893
    %v3926 = vmul.f32 %v2550, %v3894
    %v3927 = vmul.f32 %v2551, %v3895
    %v3928 = vmul.f32 %v2552, %v3896
    %v3929 = vmul.f32 %v2553, %v3897
    %v3930 = vmul.f32 %v2554, %v3898
    %v3931 = vmul.f32 %v2555, %v3899
    %v3932 = vmul.f32 %v2556, %v3900
    %v3933 = vpack.c.bf16 %v3905, %v3901
    %v3934 = vpack.c.bf16 %v3906, %v3902
    %v3935 = vpack.c.bf16 %v3907, %v3903
    %v3936 = vpack.c.bf16 %v3908, %v3904
    %v3937 = vpack.c.bf16 %v3913, %v3909
    %v3938 = vpack.c.bf16 %v3914, %v3910
    %v3939 = vpack.c.bf16 %v3915, %v3911
    %v3940 = vpack.c.bf16 %v3916, %v3912
    %v3941 = vpack.c.bf16 %v3921, %v3917
    %v3942 = vpack.c.bf16 %v3922, %v3918
    %v3943 = vpack.c.bf16 %v3923, %v3919
    %v3944 = vpack.c.bf16 %v3924, %v3920
    %v3945 = vpack.c.bf16 %v3929, %v3925
    %v3946 = vpack.c.bf16 %v3930, %v3926
    %v3947 = vpack.c.bf16 %v3931, %v3927
    %v3948 = vpack.c.bf16 %v3932, %v3928
    %v3949 = vld [vmem:[#allocation14] sm:$0xf]
    %v3950 = vld [vmem:[#allocation14 + $0x4] sm:$0xf]
    %v3951 = vld [vmem:[#allocation14 + $0x8] sm:$0xf]
    %v3952 = vld [vmem:[#allocation14 + $0xc] sm:$0xf]
    %v3953 = vld [vmem:[#allocation14 + $0x10] sm:$0xf]
    %v3954 = vld [vmem:[#allocation14 + $0x14] sm:$0xf]
    %v3955 = vld [vmem:[#allocation14 + $0x18] sm:$0xf]
    %v3956 = vld [vmem:[#allocation14 + $0x1c] sm:$0xf]
    %v3957 = vld [vmem:[#allocation14 + $0x20] sm:$0xf]
    %v3958 = vld [vmem:[#allocation14 + $0x24] sm:$0xf]
    %v3959 = vld [vmem:[#allocation14 + $0x28] sm:$0xf]
    %v3960 = vld [vmem:[#allocation14 + $0x2c] sm:$0xf]
    %v3961 = vld [vmem:[#allocation14 + $0x30] sm:$0xf]
    %v3962 = vld [vmem:[#allocation14 + $0x34] sm:$0xf]
    %v3963 = vld [vmem:[#allocation14 + $0x38] sm:$0xf]
    %v3964 = vld [vmem:[#allocation14 + $0x3c] sm:$0xf]
    %v3965 = vld [vmem:[#allocation14 + $0x40] sm:$0xf]
    %v3966 = vld [vmem:[#allocation14 + $0x44] sm:$0xf]
    %v3967 = vld [vmem:[#allocation14 + $0x48] sm:$0xf]
    %v3968 = vld [vmem:[#allocation14 + $0x4c] sm:$0xf]
    %v3969 = vld [vmem:[#allocation14 + $0x50] sm:$0xf]
    %v3970 = vld [vmem:[#allocation14 + $0x54] sm:$0xf]
    %v3971 = vld [vmem:[#allocation14 + $0x58] sm:$0xf]
    %v3972 = vld [vmem:[#allocation14 + $0x5c] sm:$0xf]
    %v3973 = vld [vmem:[#allocation14 + $0x60] sm:$0xf]
    %v3974 = vld [vmem:[#allocation14 + $0x64] sm:$0xf]
    %v3975 = vld [vmem:[#allocation14 + $0x68] sm:$0xf]
    %v3976 = vld [vmem:[#allocation14 + $0x6c] sm:$0xf]
    %v3977 = vld [vmem:[#allocation14 + $0x70] sm:$0xf]
    %v3978 = vld [vmem:[#allocation14 + $0x74] sm:$0xf]
    %v3979 = vld [vmem:[#allocation14 + $0x78] sm:$0xf]
    %v3980 = vld [vmem:[#allocation14 + $0x7c] sm:$0xf]
    %v3981 = vld [vmem:[#allocation14 + $0x80] sm:$0xf]
    %v3982 = vld [vmem:[#allocation14 + $0x84] sm:$0xf]
    %v3983 = vld [vmem:[#allocation14 + $0x88] sm:$0xf]
    %v3984 = vld [vmem:[#allocation14 + $0x8c] sm:$0xf]
    %v3985 = vld [vmem:[#allocation14 + $0x90] sm:$0xf]
    %v3986 = vld [vmem:[#allocation14 + $0x94] sm:$0xf]
    %v3987 = vld [vmem:[#allocation14 + $0x98] sm:$0xf]
    %v3988 = vld [vmem:[#allocation14 + $0x9c] sm:$0xf]
    %v3989 = vld [vmem:[#allocation14 + $0xa0] sm:$0xf]
    %v3990 = vld [vmem:[#allocation14 + $0xa4] sm:$0xf]
    %v3991 = vld [vmem:[#allocation14 + $0xa8] sm:$0xf]
    %v3992 = vld [vmem:[#allocation14 + $0xac] sm:$0xf]
    %v3993 = vld [vmem:[#allocation14 + $0xb0] sm:$0xf]
    %v3994 = vld [vmem:[#allocation14 + $0xb4] sm:$0xf]
    %v3995 = vld [vmem:[#allocation14 + $0xb8] sm:$0xf]
    %v3996 = vld [vmem:[#allocation14 + $0xbc] sm:$0xf]
    %v3997 = vld [vmem:[#allocation14 + $0xc0] sm:$0xf]
    %v3998 = vld [vmem:[#allocation14 + $0xc4] sm:$0xf]
    %v3999 = vld [vmem:[#allocation14 + $0xc8] sm:$0xf]
    %v4000 = vld [vmem:[#allocation14 + $0xcc] sm:$0xf]
    %v4001 = vld [vmem:[#allocation14 + $0xd0] sm:$0xf]
    %v4002 = vld [vmem:[#allocation14 + $0xd4] sm:$0xf]
    %v4003 = vld [vmem:[#allocation14 + $0xd8] sm:$0xf]
    %v4004 = vld [vmem:[#allocation14 + $0xdc] sm:$0xf]
    %v4005 = vld [vmem:[#allocation14 + $0xe0] sm:$0xf]
    %v4006 = vld [vmem:[#allocation14 + $0xe4] sm:$0xf]
    %v4007 = vld [vmem:[#allocation14 + $0xe8] sm:$0xf]
    %v4008 = vld [vmem:[#allocation14 + $0xec] sm:$0xf]
    %v4009 = vld [vmem:[#allocation14 + $0xf0] sm:$0xf]
    %v4010 = vld [vmem:[#allocation14 + $0xf4] sm:$0xf]
    %v4011 = vld [vmem:[#allocation14 + $0xf8] sm:$0xf]
    %v4012 = vld [vmem:[#allocation14 + $0xfc] sm:$0xf]
    %v4013 = vld [vmem:[%s15] sm:$0x1]
    %v4015 = vperm.slane %v4013, 0
    %v4081 = vunpack.c.l.b16 %v3949
    %v4082 = vunpack.c.l.b16 %v3950
    %v4083 = vunpack.c.l.b16 %v3951
    %v4084 = vunpack.c.l.b16 %v3952
    %v4085 = vunpack.c.l.b16 %v3953
    %v4086 = vunpack.c.l.b16 %v3954
    %v4087 = vunpack.c.l.b16 %v3955
    %v4088 = vunpack.c.l.b16 %v3956
    %v4089 = vunpack.c.l.b16 %v3957
    %v4090 = vunpack.c.l.b16 %v3958
    %v4091 = vunpack.c.l.b16 %v3959
    %v4092 = vunpack.c.l.b16 %v3960
    %v4093 = vunpack.c.l.b16 %v3961
    %v4094 = vunpack.c.l.b16 %v3962
    %v4095 = vunpack.c.l.b16 %v3963
    %v4096 = vunpack.c.l.b16 %v3964
    %v4097 = vunpack.c.l.b16 %v3965
    %v4098 = vunpack.c.l.b16 %v3966
    %v4099 = vunpack.c.l.b16 %v3967
    %v4100 = vunpack.c.l.b16 %v3968
    %v4101 = vunpack.c.l.b16 %v3969
    %v4102 = vunpack.c.l.b16 %v3970
    %v4103 = vunpack.c.l.b16 %v3971
    %v4104 = vunpack.c.l.b16 %v3972
    %v4105 = vunpack.c.l.b16 %v3973
    %v4106 = vunpack.c.l.b16 %v3974
    %v4107 = vunpack.c.l.b16 %v3975
    %v4108 = vunpack.c.l.b16 %v3976
    %v4109 = vunpack.c.l.b16 %v3977
    %v4110 = vunpack.c.l.b16 %v3978
    %v4111 = vunpack.c.l.b16 %v3979
    %v4112 = vunpack.c.l.b16 %v3980
    %v4113 = vunpack.c.l.b16 %v3981
    %v4114 = vunpack.c.l.b16 %v3982
    %v4115 = vunpack.c.l.b16 %v3983
    %v4116 = vunpack.c.l.b16 %v3984
    %v4117 = vunpack.c.l.b16 %v3985
    %v4118 = vunpack.c.l.b16 %v3986
    %v4119 = vunpack.c.l.b16 %v3987
    %v4120 = vunpack.c.l.b16 %v3988
    %v4121 = vunpack.c.l.b16 %v3989
    %v4122 = vunpack.c.l.b16 %v3990
    %v4123 = vunpack.c.l.b16 %v3991
    %v4124 = vunpack.c.l.b16 %v3992
    %v4125 = vunpack.c.l.b16 %v3993
    %v4126 = vunpack.c.l.b16 %v3994
    %v4127 = vunpack.c.l.b16 %v3995
    %v4128 = vunpack.c.l.b16 %v3996
    %v4129 = vunpack.c.l.b16 %v3997
    %v4130 = vunpack.c.l.b16 %v3998
    %v4131 = vunpack.c.l.b16 %v3999
    %v4132 = vunpack.c.l.b16 %v4000
    %v4133 = vunpack.c.l.b16 %v4001
    %v4134 = vunpack.c.l.b16 %v4002
    %v4135 = vunpack.c.l.b16 %v4003
    %v4136 = vunpack.c.l.b16 %v4004
    %v4137 = vunpack.c.l.b16 %v4005
    %v4138 = vunpack.c.l.b16 %v4006
    %v4139 = vunpack.c.l.b16 %v4007
    %v4140 = vunpack.c.l.b16 %v4008
    %v4141 = vunpack.c.l.b16 %v4009
    %v4142 = vunpack.c.l.b16 %v4010
    %v4143 = vunpack.c.l.b16 %v4011
    %v4144 = vunpack.c.l.b16 %v4012
    %v4145 = vpack.c.b16 %v4082, %v4081
    %v4146 = vpack.c.b16 %v4084, %v4083
    %v4147 = vpack.c.b16 %v4086, %v4085
    %v4148 = vpack.c.b16 %v4088, %v4087
    %v4149 = vpack.c.b16 %v4090, %v4089
    %v4150 = vpack.c.b16 %v4092, %v4091
    %v4151 = vpack.c.b16 %v4094, %v4093
    %v4152 = vpack.c.b16 %v4096, %v4095
    %v4153 = vpack.c.b16 %v4098, %v4097
    %v4154 = vpack.c.b16 %v4100, %v4099
    %v4155 = vpack.c.b16 %v4102, %v4101
    %v4156 = vpack.c.b16 %v4104, %v4103
    %v4157 = vpack.c.b16 %v4106, %v4105
    %v4158 = vpack.c.b16 %v4108, %v4107
    %v4159 = vpack.c.b16 %v4110, %v4109
    %v4160 = vpack.c.b16 %v4112, %v4111
    %v4161 = vpack.c.b16 %v4114, %v4113
    %v4162 = vpack.c.b16 %v4116, %v4115
    %v4163 = vpack.c.b16 %v4118, %v4117
    %v4164 = vpack.c.b16 %v4120, %v4119
    %v4165 = vpack.c.b16 %v4122, %v4121
    %v4166 = vpack.c.b16 %v4124, %v4123
    %v4167 = vpack.c.b16 %v4126, %v4125
    %v4168 = vpack.c.b16 %v4128, %v4127
    %v4169 = vpack.c.b16 %v4130, %v4129
    %v4170 = vpack.c.b16 %v4132, %v4131
    %v4171 = vpack.c.b16 %v4134, %v4133
    %v4172 = vpack.c.b16 %v4136, %v4135
    %v4173 = vpack.c.b16 %v4138, %v4137
    %v4174 = vpack.c.b16 %v4140, %v4139
    %v4175 = vpack.c.b16 %v4142, %v4141
    %v4176 = vpack.c.b16 %v4144, %v4143
    %4209 = vmatpush.bf16.msra.mxu0 %v4152
    %4210 = vmatpush.bf16.msra.mxu0 %v4151
    %4211 = vmatpush.bf16.msra.mxu0 %v4150
    %4212 = vmatpush.bf16.msra.mxu0 %v4149
    %4213 = vmatpush.bf16.msra.mxu0 %v4148
    %4214 = vmatpush.bf16.msra.mxu0 %v4147
    %4215 = vmatpush.bf16.msra.mxu0 %v4146
    %4216 = vmatpush.bf16.msra.mxu0 %v4145
    %4217 = vmatmul.bf16.gmra.mxu0 %v3933
    %v4218 = vpop.f32.mrf.mxu0
    %v4219 = vadd.f32 %v4015, %v4218
    %v4220 = vpop.f32.mrf.mxu0
    %v4221 = vadd.f32 %v4015, %v4220
    %4222 = vmatmul.bf16.gmra.mxu0 %v3937
    %v4223 = vpop.f32.mrf.mxu0
    %v4224 = vadd.f32 %v4015, %v4223
    %v4225 = vpop.f32.mrf.mxu0
    %v4226 = vadd.f32 %v4015, %v4225
    %4227 = vmatmul.bf16.gmra.mxu0 %v3941
    %v4228 = vpop.f32.mrf.mxu0
    %v4229 = vadd.f32 %v4015, %v4228
    %v4230 = vpop.f32.mrf.mxu0
    %v4231 = vadd.f32 %v4015, %v4230
    %4232 = vmatmul.bf16.gmra.mxu0 %v3945
    %v4233 = vpop.f32.mrf.mxu0
    %v4234 = vadd.f32 %v4015, %v4233
    %v4235 = vpop.f32.mrf.mxu0
    %v4236 = vadd.f32 %v4015, %v4235
    %4237 = vdwg.mxu0
    %4238 = vmatpush.bf16.msra.mxu0 %v4160
    %4239 = vmatpush.bf16.msra.mxu0 %v4159
    %4240 = vmatpush.bf16.msra.mxu0 %v4158
    %4241 = vmatpush.bf16.msra.mxu0 %v4157
    %4242 = vmatpush.bf16.msra.mxu0 %v4156
    %4243 = vmatpush.bf16.msra.mxu0 %v4155
    %4244 = vmatpush.bf16.msra.mxu0 %v4154
    %4245 = vmatpush.bf16.msra.mxu0 %v4153
    %4246 = vmatmul.bf16.gmra.mxu0 %v3934
    %v4247 = vpop.f32.mrf.mxu0
    %v4248 = vadd.f32 %v4219, %v4247
    %v4249 = vpop.f32.mrf.mxu0
    %v4250 = vadd.f32 %v4221, %v4249
    %4251 = vmatmul.bf16.gmra.mxu0 %v3938
    %v4252 = vpop.f32.mrf.mxu0
    %v4253 = vadd.f32 %v4224, %v4252
    %v4254 = vpop.f32.mrf.mxu0
    %v4255 = vadd.f32 %v4226, %v4254
    %4256 = vmatmul.bf16.gmra.mxu0 %v3942
    %v4257 = vpop.f32.mrf.mxu0
    %v4258 = vadd.f32 %v4229, %v4257
    %v4259 = vpop.f32.mrf.mxu0
    %v4260 = vadd.f32 %v4231, %v4259
    %4261 = vmatmul.bf16.gmra.mxu0 %v3946
    %v4262 = vpop.f32.mrf.mxu0
    %v4263 = vadd.f32 %v4234, %v4262
    %v4264 = vpop.f32.mrf.mxu0
    %v4265 = vadd.f32 %v4236, %v4264
    %4266 = vdwg.mxu0
    %4267 = vmatpush.bf16.msra.mxu0 %v4168
    %4268 = vmatpush.bf16.msra.mxu0 %v4167
    %4269 = vmatpush.bf16.msra.mxu0 %v4166
    %4270 = vmatpush.bf16.msra.mxu0 %v4165
    %4271 = vmatpush.bf16.msra.mxu0 %v4164
    %4272 = vmatpush.bf16.msra.mxu0 %v4163
    %4273 = vmatpush.bf16.msra.mxu0 %v4162
    %4274 = vmatpush.bf16.msra.mxu0 %v4161
    %4275 = vmatmul.bf16.gmra.mxu0 %v3935
    %v4276 = vpop.f32.mrf.mxu0
    %v4277 = vadd.f32 %v4248, %v4276
    %v4278 = vpop.f32.mrf.mxu0
    %v4279 = vadd.f32 %v4250, %v4278
    %4280 = vmatmul.bf16.gmra.mxu0 %v3939
    %v4281 = vpop.f32.mrf.mxu0
    %v4282 = vadd.f32 %v4253, %v4281
    %v4283 = vpop.f32.mrf.mxu0
    %v4284 = vadd.f32 %v4255, %v4283
    %4285 = vmatmul.bf16.gmra.mxu0 %v3943
    %v4286 = vpop.f32.mrf.mxu0
    %v4287 = vadd.f32 %v4258, %v4286
    %v4288 = vpop.f32.mrf.mxu0
    %v4289 = vadd.f32 %v4260, %v4288
    %4290 = vmatmul.bf16.gmra.mxu0 %v3947
    %v4291 = vpop.f32.mrf.mxu0
    %v4292 = vadd.f32 %v4263, %v4291
    %v4293 = vpop.f32.mrf.mxu0
    %v4294 = vadd.f32 %v4265, %v4293
    %4295 = vdwg.mxu0
    %4296 = vmatpush.bf16.msra.mxu0 %v4176
    %4297 = vmatpush.bf16.msra.mxu0 %v4175
    %4298 = vmatpush.bf16.msra.mxu0 %v4174
    %4299 = vmatpush.bf16.msra.mxu0 %v4173
    %4300 = vmatpush.bf16.msra.mxu0 %v4172
    %4301 = vmatpush.bf16.msra.mxu0 %v4171
    %4302 = vmatpush.bf16.msra.mxu0 %v4170
    %4303 = vmatpush.bf16.msra.mxu0 %v4169
    %4304 = vmatmul.bf16.gmra.mxu0 %v3936
    %v4305 = vpop.f32.mrf.mxu0
    %v4306 = vadd.f32 %v4277, %v4305
    %v4307 = vpop.f32.mrf.mxu0
    %v4308 = vadd.f32 %v4279, %v4307
    %4309 = vmatmul.bf16.gmra.mxu0 %v3940
    %v4310 = vpop.f32.mrf.mxu0
    %v4311 = vadd.f32 %v4282, %v4310
    %v4312 = vpop.f32.mrf.mxu0
    %v4313 = vadd.f32 %v4284, %v4312
    %4314 = vmatmul.bf16.gmra.mxu0 %v3944
    %v4315 = vpop.f32.mrf.mxu0
    %v4316 = vadd.f32 %v4287, %v4315
    %v4317 = vpop.f32.mrf.mxu0
    %v4318 = vadd.f32 %v4289, %v4317
    %4319 = vmatmul.bf16.gmra.mxu0 %v3948
    %v4320 = vpop.f32.mrf.mxu0
    %v4321 = vadd.f32 %v4292, %v4320
    %v4322 = vpop.f32.mrf.mxu0
    %v4323 = vadd.f32 %v4294, %v4322
    %4324 = vdwg.mxu0
    %v4325 = vadd.f32 %v2195, %v4306
    %v4326 = vadd.f32 %v2196, %v4308
    %v4327 = vadd.f32 %v2197, %v4311
    %v4328 = vadd.f32 %v2198, %v4313
    %v4329 = vadd.f32 %v2199, %v4316
    %v4330 = vadd.f32 %v2200, %v4318
    %v4331 = vadd.f32 %v2201, %v4321
    %v4332 = vadd.f32 %v2202, %v4323
    %v4333 = vld [vmem:[%s16] sm:$0x1]
    %v4334 = vld [vmem:[%s17] sm:$0x1]
    %4335 = vadd.xlane.f32.xlu0 %v4325
    %v4336 = vpop.xlane.xlu0 %4335
    %4337 = vadd.xlane.f32.xlu0 %v4326
    %v4338 = vpop.xlane.xlu0 %4337
    %4339 = vadd.xlane.f32.xlu0 %v4327
    %v4340 = vpop.xlane.xlu0 %4339
    %4341 = vadd.xlane.f32.xlu0 %v4328
    %v4342 = vpop.xlane.xlu0 %4341
    %4343 = vadd.xlane.f32.xlu0 %v4329
    %v4344 = vpop.xlane.xlu0 %4343
    %4345 = vadd.xlane.f32.xlu0 %v4330
    %v4346 = vpop.xlane.xlu0 %4345
    %4347 = vadd.xlane.f32.xlu0 %v4331
    %v4348 = vpop.xlane.xlu0 %4347
    %4349 = vadd.xlane.f32.xlu0 %v4332
    %v4350 = vpop.xlane.xlu0 %4349
    %v4351 = vmul.f32 %v4336, %v2036
    %v4352 = vmul.f32 %v4338, %v2036
    %v4353 = vmul.f32 %v4340, %v2036
    %v4354 = vmul.f32 %v4342, %v2036
    %v4355 = vmul.f32 %v4344, %v2036
    %v4356 = vmul.f32 %v4346, %v2036
    %v4357 = vmul.f32 %v4348, %v2036
    %v4358 = vmul.f32 %v4350, %v2036
    %v4359 = vsub.f32 %v4325, %v4351
    %v4360 = vsub.f32 %v4326, %v4352
    %v4361 = vsub.f32 %v4327, %v4353
    %v4362 = vsub.f32 %v4328, %v4354
    %v4363 = vsub.f32 %v4329, %v4355
    %v4364 = vsub.f32 %v4330, %v4356
    %v4365 = vsub.f32 %v4331, %v4357
    %v4366 = vsub.f32 %v4332, %v4358
    %v4367 = vmul.f32 %v4359, %v4359
    %v4368 = vmul.f32 %v4360, %v4360
    %v4369 = vmul.f32 %v4361, %v4361
    %v4370 = vmul.f32 %v4362, %v4362
    %v4371 = vmul.f32 %v4363, %v4363
    %v4372 = vmul.f32 %v4364, %v4364
    %v4373 = vmul.f32 %v4365, %v4365
    %v4374 = vmul.f32 %v4366, %v4366
    %4375 = vadd.xlane.f32.xlu0 %v4367
    %v4376 = vpop.xlane.xlu0 %4375
    %4377 = vadd.xlane.f32.xlu0 %v4368
    %v4378 = vpop.xlane.xlu0 %4377
    %4379 = vadd.xlane.f32.xlu0 %v4369
    %v4380 = vpop.xlane.xlu0 %4379
    %4381 = vadd.xlane.f32.xlu0 %v4370
    %v4382 = vpop.xlane.xlu0 %4381
    %4383 = vadd.xlane.f32.xlu0 %v4371
    %v4384 = vpop.xlane.xlu0 %4383
    %4385 = vadd.xlane.f32.xlu0 %v4372
    %v4386 = vpop.xlane.xlu0 %4385
    %4387 = vadd.xlane.f32.xlu0 %v4373
    %v4388 = vpop.xlane.xlu0 %4387
    %4389 = vadd.xlane.f32.xlu0 %v4374
    %v4390 = vpop.xlane.xlu0 %4389
    %v4391 = vmul.f32 %v4376, %v2036
    %v4392 = vmul.f32 %v4378, %v2036
    %v4393 = vmul.f32 %v4380, %v2036
    %v4394 = vmul.f32 %v4382, %v2036
    %v4395 = vmul.f32 %v4384, %v2036
    %v4396 = vmul.f32 %v4386, %v2036
    %v4397 = vmul.f32 %v4388, %v2036
    %v4398 = vmul.f32 %v4390, %v2036
    %v4399 = vadd.f32 %v4391, 1e-05
    %v4400 = vadd.f32 %v4392, 1e-05
    %v4401 = vadd.f32 %v4393, 1e-05
    %v4402 = vadd.f32 %v4394, 1e-05
    %v4403 = vadd.f32 %v4395, 1e-05
    %v4404 = vadd.f32 %v4396, 1e-05
    %v4405 = vadd.f32 %v4397, 1e-05
    %v4406 = vadd.f32 %v4398, 1e-05
    %v4407 = vrsqrt.pop %v4399
    %v4408 = vmul.f32 %v4407, %v4399
    %v4409 = vmul.f32 %v4408, %v4407
    %v4410 = vmul.f32 0.5, %v4409
    %v4411 = vsub.f32 1.5, %v4410
    %v4412 = vmul.f32 %v4407, %v4411
    %vm4413 = vweird.f32 %v4399
    %vm4414 = vweird.f32 %v4407
    %vm4415 = vmor %vm4413, %vm4414
    %v4416 = vsel %vm4415, %v4407, %v4412
    %v4417 = vrsqrt.pop %v4400
    %v4418 = vmul.f32 %v4417, %v4400
    %v4419 = vmul.f32 %v4418, %v4417
    %v4420 = vmul.f32 0.5, %v4419
    %v4421 = vsub.f32 1.5, %v4420
    %v4422 = vmul.f32 %v4417, %v4421
    %vm4423 = vweird.f32 %v4400
    %vm4424 = vweird.f32 %v4417
    %vm4425 = vmor %vm4423, %vm4424
    %v4426 = vsel %vm4425, %v4417, %v4422
    %v4427 = vrsqrt.pop %v4401
    %v4428 = vmul.f32 %v4427, %v4401
    %v4429 = vmul.f32 %v4428, %v4427
    %v4430 = vmul.f32 0.5, %v4429
    %v4431 = vsub.f32 1.5, %v4430
    %v4432 = vmul.f32 %v4427, %v4431
    %vm4433 = vweird.f32 %v4401
    %vm4434 = vweird.f32 %v4427
    %vm4435 = vmor %vm4433, %vm4434
    %v4436 = vsel %vm4435, %v4427, %v4432
    %v4437 = vrsqrt.pop %v4402
    %v4438 = vmul.f32 %v4437, %v4402
    %v4439 = vmul.f32 %v4438, %v4437
    %v4440 = vmul.f32 0.5, %v4439
    %v4441 = vsub.f32 1.5, %v4440
    %v4442 = vmul.f32 %v4437, %v4441
    %vm4443 = vweird.f32 %v4402
    %vm4444 = vweird.f32 %v4437
    %vm4445 = vmor %vm4443, %vm4444
    %v4446 = vsel %vm4445, %v4437, %v4442
    %v4447 = vrsqrt.pop %v4403
    %v4448 = vmul.f32 %v4447, %v4403
    %v4449 = vmul.f32 %v4448, %v4447
    %v4450 = vmul.f32 0.5, %v4449
    %v4451 = vsub.f32 1.5, %v4450
    %v4452 = vmul.f32 %v4447, %v4451
    %vm4453 = vweird.f32 %v4403
    %vm4454 = vweird.f32 %v4447
    %vm4455 = vmor %vm4453, %vm4454
    %v4456 = vsel %vm4455, %v4447, %v4452
    %v4457 = vrsqrt.pop %v4404
    %v4458 = vmul.f32 %v4457, %v4404
    %v4459 = vmul.f32 %v4458, %v4457
    %v4460 = vmul.f32 0.5, %v4459
    %v4461 = vsub.f32 1.5, %v4460
    %v4462 = vmul.f32 %v4457, %v4461
    %vm4463 = vweird.f32 %v4404
    %vm4464 = vweird.f32 %v4457
    %vm4465 = vmor %vm4463, %vm4464
    %v4466 = vsel %vm4465, %v4457, %v4462
    %v4467 = vrsqrt.pop %v4405
    %v4468 = vmul.f32 %v4467, %v4405
    %v4469 = vmul.f32 %v4468, %v4467
    %v4470 = vmul.f32 0.5, %v4469
    %v4471 = vsub.f32 1.5, %v4470
    %v4472 = vmul.f32 %v4467, %v4471
    %vm4473 = vweird.f32 %v4405
    %vm4474 = vweird.f32 %v4467
    %vm4475 = vmor %vm4473, %vm4474
    %v4476 = vsel %vm4475, %v4467, %v4472
    %v4477 = vrsqrt.pop %v4406
    %v4478 = vmul.f32 %v4477, %v4406
    %v4479 = vmul.f32 %v4478, %v4477
    %v4480 = vmul.f32 0.5, %v4479
    %v4481 = vsub.f32 1.5, %v4480
    %v4482 = vmul.f32 %v4477, %v4481
    %vm4483 = vweird.f32 %v4406
    %vm4484 = vweird.f32 %v4477
    %vm4485 = vmor %vm4483, %vm4484
    %v4486 = vsel %vm4485, %v4477, %v4482
    %v4487 = vmul.f32 %v4359, %v4416
    %v4488 = vmul.f32 %v4360, %v4426
    %v4489 = vmul.f32 %v4361, %v4436
    %v4490 = vmul.f32 %v4362, %v4446
    %v4491 = vmul.f32 %v4363, %v4456
    %v4492 = vmul.f32 %v4364, %v4466
    %v4493 = vmul.f32 %v4365, %v4476
    %v4494 = vmul.f32 %v4366, %v4486
    %v4496 = vperm.slane %v4333, 0
    %v4498 = vmul.f32 %v4487, %v4496
    %v4499 = vmul.f32 %v4488, %v4496
    %v4500 = vmul.f32 %v4489, %v4496
    %v4501 = vmul.f32 %v4490, %v4496
    %v4502 = vmul.f32 %v4491, %v4496
    %v4503 = vmul.f32 %v4492, %v4496
    %v4504 = vmul.f32 %v4493, %v4496
    %v4505 = vmul.f32 %v4494, %v4496
    %v4507 = vperm.slane %v4334, 0
    %v4509 = vadd.f32 %v4498, %v4507
    %v4510 = vadd.f32 %v4499, %v4507
    %v4511 = vadd.f32 %v4500, %v4507
    %v4512 = vadd.f32 %v4501, %v4507
    %v4513 = vadd.f32 %v4502, %v4507
    %v4514 = vadd.f32 %v4503, %v4507
    %v4515 = vadd.f32 %v4504, %v4507
    %v4516 = vadd.f32 %v4505, %v4507
    %4517 = vst [vmem:[#allocation16] sm:$0xff] %v4509
    %4518 = vst [vmem:[#allocation16 + $0x8] sm:$0xff] %v4510
    %4519 = vst [vmem:[#allocation16 + $0x10] sm:$0xff] %v4511
    %4520 = vst [vmem:[#allocation16 + $0x18] sm:$0xff] %v4512
    %4521 = vst [vmem:[#allocation16 + $0x20] sm:$0xff] %v4513
    %4522 = vst [vmem:[#allocation16 + $0x28] sm:$0xff] %v4514
    %4523 = vst [vmem:[#allocation16 + $0x30] sm:$0xff] %v4515
    %4524 = vst [vmem:[#allocation16 + $0x38] sm:$0xff] %v4516
    // Predicated region
    $region106: #{tpu_custom_call.1} parent=1 // pred_check
      _
    $region107: #{tpu_custom_call.1} parent=1 // pred_check_branch
      %4526 = sbr.rel (0) target = $region109
    $region108: #{tpu_custom_call.1} parent=1 // pred_region
      %4528 = vsyncadd [#allocation4], 0
      %s4529 = sshll.u32 [#allocation16], 4
      %s4530 = int_to_ptr.vmem [resolvable:$true] %s4529
      %s4531 = sshll.u32 %s18, 4
      %s4532 = int_to_ptr.hbm [resolvable:$true] %s4531
      %4537 = dma.vmem_to_hbm [thread:$0]  %s4530, 1024, %s4532, [#allocation4], 128, 128, 8
    $region109: #{tpu_custom_call.1} parent=1 // pred_fallthru
      _
    // Predicated region
    $region110: #{tpu_custom_call.1} parent=1 // pred_check
      _
    $region111: #{tpu_custom_call.1} parent=1 // pred_check_branch
      %4539 = sbr.rel (0) target = $region113
    $region112: #{tpu_custom_call.1} parent=1 // pred_region
      %4541 = dma.done [#allocation4], 1024
    $region113: #{tpu_custom_call.1} parent=1 // pred_fallthru
      _
    %4542 = vsyncpa [#allocation3], 1
    %4543 = vsyncpa [#allocation6], 1
    %4544 = vsyncpa [#allocation9], 1
    %4545 = vsyncpa [#allocation12], 1
    %4546 = vsyncpa [#allocation15], 1
    %4547 = vsyncpa [#allocation4], 1

</llo_original>
